<compile_context>
chip_gen: v7x
topology: tpu7x:2x2x1
jax: 0.10.0
libtpu: 0.0.40
codegen_flags: <defaults>
</compile_context>

<pallas_src>
import jax
import jax.numpy as jnp
from jax import lax
from jax.experimental import pallas as pl
from jax.experimental.pallas import tpu as pltpu


# --------------------------------------------------------------------------
# Fused loss kernel
# --------------------------------------------------------------------------
def _make_fused_kernel(H, W, tile_h, n_tiles, c_in, c_out, percep_is_l1):
    TH2, TW2 = tile_h + 2, W + 2          # conv1 output tile incl. 1-px halo
    k1 = 9 * c_in                         # 27
    m2 = tile_h * W                       # conv2 output rows per tile

    def kernel(x_ref, y_ref, w1_ref, b1_ref, w2_ref, b2_ref,
               l1_ref, per_ref, p2_ref):
        # x_ref/y_ref: (1, tile_h+2, W+2, 27) bf16  pre-packed 3x3 patches
        # w1_ref: (27, 64) bf16   b1_ref: (1, 64) f32
        # w2_ref: (576, 64) bf16  b2_ref: (1, 64) f32
        # l1_ref/per_ref: (1, 8, 128) f32 partial-sum splat blocks
        # p2_ref: VMEM scratch (tile_h*W, 576) bf16  (conv2 im2col patch)
        r = pl.program_id(0) % n_tiles
        row0 = r * tile_h - 1             # image row of halo-row 0 of this tile

        # Validity mask for the conv1 halo ring: positions outside the image
        # must be zero so conv2 sees VGG's zero padding of the feature map.
        rows = lax.broadcasted_iota(jnp.int32, (TH2, TW2, c_out), 0) + row0
        cols = lax.broadcasted_iota(jnp.int32, (TH2, TW2, c_out), 1) - 1
        halo_ok = (rows >= 0) & (rows < H) & (cols >= 0) & (cols < W)

        w1 = w1_ref[...]
        b1 = b1_ref[...]
        w2 = w2_ref[...]
        b2 = b2_ref[...]

        def vgg_features(ref):
            # conv1 (+ folded ImageNet normalization) as one K=27 matmul.
            p1 = ref[0].reshape(TH2 * TW2, k1)
            h1 = jnp.dot(p1, w1, preferred_element_type=jnp.float32) + b1
            h1 = jnp.maximum(h1, 0.0).reshape(TH2, TW2, c_out)
            h1 = jnp.where(halo_ok, h1, 0.0).astype(jnp.bfloat16)
            # conv2 as one K=576 im2col matmul; patch built in VMEM scratch.
            for dy in range(3):
                for dx in range(3):
                    j = dy * 3 + dx
                    p2_ref[:, j * c_out:(j + 1) * c_out] = (
                        h1[dy:dy + tile_h, dx:dx + W, :].reshape(m2, c_out))
            h2 = jnp.dot(p2_ref[...], w2, preferred_element_type=jnp.float32) + b2
            return jnp.maximum(h2, 0.0)                     # (m2, 64) f32

        fx = vgg_features(x_ref)
        fy = vgg_features(y_ref)
        d = fx - fy
        if percep_is_l1:
            per = jnp.sum(jnp.abs(d))
        else:
            per = jnp.sum(d * d)

        # Raw-pixel L1 partial sum, read from the centre tap (dy=dx=1) of the
        # interior im2col patches (these are exactly the original pixels).
        ctr = 4 * c_in
        xi = x_ref[0, 1:1 + tile_h, 1:1 + W, ctr:ctr + c_in].astype(jnp.float32)
        yi = y_ref[0, 1:1 + tile_h, 1:1 + W, ctr:ctr + c_in].astype(jnp.float32)
        l1 = jnp.sum(jnp.abs(xi - yi))

        # Lane-dense (8,128) splat stores; the wrapper reads element [0,0].
        l1_ref[...] = jnp.full((1, 8, 128), l1, jnp.float32)
        per_ref[...] = jnp.full((1, 8, 128), per, jnp.float32)

    return kernel


def _pick_tile_h(H, W, max_tile_elems=4096):
    """Largest divisor of H keeping tile_h*W small enough that the per-step
    working set (im2col patch + f32 features, double-buffered inputs) stays
    well inside the 32 MiB scoped-VMEM budget on every TPU generation."""
    cap = max(1, max_tile_elems // max(W, 1))
    best = 1
    for d in range(1, H + 1):
        if H % d == 0 and d <= cap:
            best = d
    return best


def fused_loss_sums(x_nhwc, y_nhwc, w1m, b1, w2m, b2, pad_val, *,
                    tile_h=None, percep_is_l1=1):
    """Returns (sum |x-y| over raw pixels, sum |fx-fy| (or (fx-fy)^2) over
    VGG[:4] features), computed by one fused Pallas kernel."""
    N, H, W, c_in = x_nhwc.shape
    assert c_in == 3
    c_out = w2m.shape[-1]
    if tile_h is None:
        tile_h = _pick_tile_h(H, W)
    assert H % tile_h == 0, (H, tile_h)
    n_tiles = H // tile_h
    n_steps = N * n_tiles

    # Raw pixel value whose ImageNet normalization is exactly zero; padding
    # with it lets the normalization be folded into w1/b1 exactly.
    pad = pad_val.reshape(1, 1, 1, c_in).astype(jnp.bfloat16)

    def pack_tiles(a):
        a = a.astype(jnp.bfloat16)
        ap = jnp.broadcast_to(pad, (N, H + 4, W + 4, c_in))
        ap = ap.at[:, 2:2 + H, 2:2 + W, :].set(a)
        # Pre-pack the 3x3xCin neighbourhoods into 27 lanes (conv1 im2col).
        patches = jnp.concatenate(
            [ap[:, dy:dy + H + 2, dx:dx + W + 2, :]
             for dy in range(3) for dx in range(3)], axis=-1)
        # Overlapping row tiles (+1 halo row each side for conv2).
        tiles = jnp.stack(
            [patches[:, r * tile_h:r * tile_h + tile_h + 2]
             for r in range(n_tiles)], axis=1)
        return tiles.reshape(n_steps, tile_h + 2, W + 2, 9 * c_in)

    xt = pack_tiles(x_nhwc)
    yt = pack_tiles(y_nhwc)

    kernel = _make_fused_kernel(H, W, tile_h, n_tiles, c_in, c_out,
                                percep_is_l1)

    l1_parts, per_parts = pl.pallas_call(
        kernel,
        out_shape=(jax.ShapeDtypeStruct((n_steps, 8, 128), jnp.float32),
                   jax.ShapeDtypeStruct((n_steps, 8, 128), jnp.float32)),
        grid=(n_steps,),
        in_specs=[
            pl.BlockSpec((1, tile_h + 2, W + 2, 9 * c_in),
                         lambda i: (i, 0, 0, 0)),
            pl.BlockSpec((1, tile_h + 2, W + 2, 9 * c_in),
                         lambda i: (i, 0, 0, 0)),
            pl.BlockSpec((9 * c_in, c_out), lambda i: (0, 0)),
            pl.BlockSpec((1, c_out), lambda i: (0, 0)),
            pl.BlockSpec((9 * c_out, c_out), lambda i: (0, 0)),
            pl.BlockSpec((1, c_out), lambda i: (0, 0)),
        ],
        out_specs=(
            pl.BlockSpec((1, 8, 128), lambda i: (i, 0, 0)),
            pl.BlockSpec((1, 8, 128), lambda i: (i, 0, 0)),
        ),
        scratch_shapes=[pltpu.VMEM((tile_h * W, 9 * c_out), jnp.bfloat16)],
        compiler_params=pltpu.CompilerParams(
            dimension_semantics=("parallel",),
            vmem_limit_bytes=32 * 1024 * 1024),
    )(xt, yt, w1m, b1, w2m, b2)

    return jnp.sum(l1_parts[:, 0, 0]), jnp.sum(per_parts[:, 0, 0])


# --------------------------------------------------------------------------
# Module
# --------------------------------------------------------------------------
class L1PlusPerceptualLoss:
    def __init__(self, lambda_L1=10.0, lambda_perceptual=20.0,
                 perceptual_layers=3, percep_is_l1=1, tile_h=None):
        assert perceptual_layers == 3  # Conv-ReLU-Conv-ReLU prefix of VGG19
        self.lambda_L1 = lambda_L1
        self.lambda_perceptual = lambda_perceptual
        self.percep_is_l1 = percep_is_l1
        self.tile_h = tile_h

        # Deterministic synthetic "VGG" weights (HWIO), real shapes of
        # vgg19.features[0] and [2].
        # TODO(synk): pretrained torchvision VGG19 weights cannot be loaded
        # in a self-contained script; synthesized deterministically instead.
        key = jax.random.PRNGKey(42)
        k1, k2, k3, k4 = jax.random.split(key, 4)
        self.w1 = 0.05 * jax.random.normal(k1, (3, 3, 3, 64), jnp.float32)
        self.b1 = 0.01 * jax.random.normal(k2, (64,), jnp.float32)
        self.w2 = 0.02 * jax.random.normal(k3, (3, 3, 64, 64), jnp.float32)
        self.b2 = 0.01 * jax.random.normal(k4, (64,), jnp.float32)

        self.mean = jnp.array([0.485, 0.456, 0.406], jnp.float32)
        self.std = jnp.array([0.229, 0.224, 0.225], jnp.float32)

        # Fold ((x+1)/2 - mean)/std into conv1:  x_norm = x*s + t.
        s = 1.0 / (2.0 * self.std)                       # (3,)
        t = (0.5 - self.mean) / self.std                 # (3,)
        w1_fold = self.w1 * s.reshape(1, 1, 3, 1)
        b1_fold = self.b1 + jnp.einsum("hwio,i->o", self.w1, t)

        # Packed / bf16 parameters for the fused kernel.
        self.w1m = w1_fold.reshape(9 * 3, 64).astype(jnp.bfloat16)
        self.b1v = b1_fold.reshape(1, 64).astype(jnp.float32)
        self.w2m = self.w2.reshape(9 * 64, 64).astype(jnp.bfloat16)
        self.b2v = self.b2.reshape(1, 64).astype(jnp.float32)
        # Raw value whose ImageNet-normalized value is zero (used for padding).
        self.pad_val = 2.0 * self.mean - 1.0

    def __call__(self, inputs_nchw, targets_nchw):
        if self.lambda_L1 == 0 and self.lambda_perceptual == 0:
            z = jnp.zeros((1,), jnp.float32)
            return z, z, z

        # NCHW -> NHWC (channels-last so channels sit on the lane axis).
        x = jnp.transpose(inputs_nchw, (0, 2, 3, 1)).astype(jnp.float32)
        y = jnp.transpose(targets_nchw, (0, 2, 3, 1)).astype(jnp.float32)
        N, H, W, C = x.shape

        l1_sum, per_sum = fused_loss_sums(
            x, y, self.w1m, self.b1v, self.w2m, self.b2v, self.pad_val,
            tile_h=self.tile_h, percep_is_l1=self.percep_is_l1)

        loss_l1 = l1_sum / jnp.float32(N * H * W * C) * self.lambda_L1
        loss_p = per_sum / jnp.float32(N * H * W * 64) * self.lambda_perceptual
        loss = loss_l1 + loss_p
        return loss, loss_l1, loss_p


# --------------------------------------------------------------------------
# Pure-JAX reference (unfolded f32 weights, explicit normalization)
# --------------------------------------------------------------------------
def _ref_forward(model, inputs_nchw, targets_nchw):
    def conv(x, w, b):
        y = jax.lax.conv_general_dilated(
            x, w, window_strides=(1, 1), padding="SAME",
            dimension_numbers=("NHWC", "HWIO", "NHWC"))
        return jnp.maximum(y + b, 0.0)

    loss_l1 = jnp.mean(jnp.abs(inputs_nchw - targets_nchw)) * model.lambda_L1
    x = jnp.transpose(inputs_nchw, (0, 2, 3, 1))
    y = jnp.transpose(targets_nchw, (0, 2, 3, 1))
    mean = model.mean.reshape(1, 1, 1, 3)
    std = model.std.reshape(1, 1, 1, 3)
    x = ((x + 1.0) / 2.0 - mean) / std
    y = ((y + 1.0) / 2.0 - mean) / std
    fx = conv(conv(x, model.w1, model.b1), model.w2, model.b2)
    fy = conv(conv(y, model.w1, model.b1), model.w2, model.b2)
    if model.percep_is_l1 == 1:
        loss_p = jnp.mean(jnp.abs(fx - fy)) * model.lambda_perceptual
    else:
        loss_p = jnp.mean((fx - fy) ** 2) * model.lambda_perceptual
    return loss_l1 + loss_p, loss_l1, loss_p


if __name__ == "__main__":
    N, C, H, W = 2, 3, 16, 16
    key = jax.random.PRNGKey(0)
    k1, k2 = jax.random.split(key)
    inputs = jax.random.uniform(k1, (N, C, H, W), jnp.float32, -1.0, 1.0)
    targets = jax.random.uniform(k2, (N, C, H, W), jnp.float32, -1.0, 1.0)

    # tile_h=8 -> 2 row tiles per image, grid of 4 'parallel' steps.
    model = L1PlusPerceptualLoss(lambda_L1=10.0, lambda_perceptual=20.0,
                                 perceptual_layers=3, percep_is_l1=1,
                                 tile_h=8)

    loss, loss_l1, loss_p = jax.jit(model.__call__)(inputs, targets)
    jax.block_until_ready((loss, loss_l1, loss_p))

    ref_loss, ref_l1, ref_p = _ref_forward(model, inputs, targets)
    assert jnp.allclose(loss_l1, ref_l1, rtol=2e-2, atol=2e-2)
    assert jnp.allclose(loss_p, ref_p, rtol=2e-2, atol=2e-2)
    assert jnp.allclose(loss, ref_loss, rtol=2e-2, atol=2e-2)

    print("KERNEL_OK")
</pallas_src>

<mosaic_0001>
module attributes {stable_mosaic.version = 11 : i64} {
  func.func @kernel(%arg0: i32, %arg1: memref<1x10x18x27xbf16, #tpu.memory_space<vmem>>, %arg2: memref<1x10x18x27xbf16, #tpu.memory_space<vmem>>, %arg3: memref<27x64xbf16, #tpu.memory_space<vmem>>, %arg4: memref<1x64xf32, #tpu.memory_space<vmem>>, %arg5: memref<576x64xbf16, #tpu.memory_space<vmem>>, %arg6: memref<1x64xf32, #tpu.memory_space<vmem>>, %arg7: memref<1x8x128xf32, #tpu.memory_space<vmem>>, %arg8: memref<1x8x128xf32, #tpu.memory_space<vmem>>, %arg9: memref<128x576xbf16, #tpu.memory_space<vmem>>) attributes {dimension_semantics = [#tpu.dimension_semantics<parallel>], iteration_bounds = array<i64: 4>, scalar_prefetch = 0 : i64, scratch_operands = 1 : i64, tpu.core_type = #tpu.core_type<tc>, window_params = [{transform_indices = @transform_0, window_bounds = array<i64: 1, 10, 18, 27>}, {transform_indices = @transform_1, window_bounds = array<i64: 1, 10, 18, 27>}, {pipeline_mode = #tpu.pipeline_mode<synchronous>, transform_indices = @transform_2, window_bounds = array<i64: 27, 64>}, {pipeline_mode = #tpu.pipeline_mode<synchronous>, transform_indices = @transform_3, window_bounds = array<i64: 1, 64>}, {pipeline_mode = #tpu.pipeline_mode<synchronous>, transform_indices = @transform_4, window_bounds = array<i64: 576, 64>}, {pipeline_mode = #tpu.pipeline_mode<synchronous>, transform_indices = @transform_5, window_bounds = array<i64: 1, 64>}, {transform_indices = @transform_6, window_bounds = array<i64: 1, 8, 128>}, {transform_indices = @transform_7, window_bounds = array<i64: 1, 8, 128>}]} {
    %c2_i32 = arith.constant 2 : i32
    %c0_i32 = arith.constant 0 : i32
    %0 = arith.cmpi eq, %c2_i32, %c0_i32 : i32
    %c1_i32 = arith.constant 1 : i32
    %1 = arith.select %0, %c1_i32, %c2_i32 : i32
    %2 = arith.remsi %arg0, %1 : i32
    %c0_i32_0 = arith.constant 0 : i32
    %3 = arith.cmpi ne, %2, %c0_i32_0 : i32
    %c0_i32_1 = arith.constant 0 : i32
    %4 = arith.cmpi slt, %2, %c0_i32_1 : i32
    %c0_i32_2 = arith.constant 0 : i32
    %5 = arith.cmpi slt, %1, %c0_i32_2 : i32
    %6 = arith.xori %4, %5 : i1
    %7 = arith.andi %6, %3 : i1
    %8 = arith.addi %2, %1 : i32
    %9 = arith.select %7, %8, %2 : i32
    %c8_i32 = arith.constant 8 : i32
    %10 = arith.muli %9, %c8_i32 : i32
    %c1_i32_3 = arith.constant 1 : i32
    %11 = arith.subi %10, %c1_i32_3 : i32
    %12 = tpu.iota {dimensions = array<i32: 0>} : vector<10x18x64xi32>
    %13 = vector.broadcast %11 : i32 to vector<10x18x64xi32>
    %14 = arith.addi %12, %13 : vector<10x18x64xi32>
    %15 = tpu.iota {dimensions = array<i32: 1>} : vector<10x18x64xi32>
    %c1_i32_4 = arith.constant 1 : i32
    %16 = vector.broadcast %c1_i32_4 : i32 to vector<10x18x64xi32>
    %17 = arith.subi %15, %16 : vector<10x18x64xi32>
    %c0_i32_5 = arith.constant 0 : i32
    %18 = vector.broadcast %c0_i32_5 : i32 to vector<10x18x64xi32>
    %19 = arith.cmpi sge, %14, %18 : vector<10x18x64xi32>
    %c16_i32 = arith.constant 16 : i32
    %20 = vector.broadcast %c16_i32 : i32 to vector<10x18x64xi32>
    %21 = arith.cmpi slt, %14, %20 : vector<10x18x64xi32>
    %22 = arith.andi %19, %21 : vector<10x18x64xi1>
    %c0_i32_6 = arith.constant 0 : i32
    %23 = vector.broadcast %c0_i32_6 : i32 to vector<10x18x64xi32>
    %24 = arith.cmpi sge, %17, %23 : vector<10x18x64xi32>
    %25 = arith.andi %22, %24 : vector<10x18x64xi1>
    %c16_i32_7 = arith.constant 16 : i32
    %26 = vector.broadcast %c16_i32_7 : i32 to vector<10x18x64xi32>
    %27 = arith.cmpi slt, %17, %26 : vector<10x18x64xi32>
    %28 = arith.andi %25, %27 : vector<10x18x64xi1>
    %c0 = arith.constant 0 : index
    %c0_8 = arith.constant 0 : index
    %29 = vector.load %arg3[%c0, %c0_8] : memref<27x64xbf16, #tpu.memory_space<vmem>>, vector<27x64xbf16>
    %c0_9 = arith.constant 0 : index
    %c0_10 = arith.constant 0 : index
    %30 = vector.load %arg4[%c0_9, %c0_10] : memref<1x64xf32, #tpu.memory_space<vmem>>, vector<1x64xf32>
    %c0_11 = arith.constant 0 : index
    %c0_12 = arith.constant 0 : index
    %31 = vector.load %arg5[%c0_11, %c0_12] : memref<576x64xbf16, #tpu.memory_space<vmem>>, vector<576x64xbf16>
    %c0_13 = arith.constant 0 : index
    %c0_14 = arith.constant 0 : index
    %32 = vector.load %arg6[%c0_13, %c0_14] : memref<1x64xf32, #tpu.memory_space<vmem>>, vector<1x64xf32>
    %c0_15 = arith.constant 0 : index
    %c0_16 = arith.constant 0 : index
    %c0_17 = arith.constant 0 : index
    %c0_18 = arith.constant 0 : index
    %33 = vector.load %arg1[%c0_15, %c0_16, %c0_17, %c0_18] : memref<1x10x18x27xbf16, #tpu.memory_space<vmem>>, vector<1x10x18x27xbf16>
    %34 = vector.shape_cast %33 : vector<1x10x18x27xbf16> to vector<10x18x27xbf16>
    %35 = vector.shape_cast %34 : vector<10x18x27xbf16> to vector<180x27xbf16>
    %cst = arith.constant dense<0.000000e+00> : vector<180x64xf32>
    %36 = tpu.matmul %35, %29, %cst {dimension_numbers = #tpu.dot_dimension_numbers<[1], [0], [0], [1], [0, 0, 1, 1], [], []>} : vector<180x27xbf16>, vector<27x64xbf16>, vector<180x64xf32> -> vector<180x64xf32>
    %37 = vector.broadcast %30 : vector<1x64xf32> to vector<180x64xf32>
    %38 = arith.addf %36, %37 : vector<180x64xf32>
    %cst_19 = arith.constant 0.000000e+00 : f32
    %39 = vector.broadcast %cst_19 : f32 to vector<180x64xf32>
    %40 = arith.maximumf %38, %39 : vector<180x64xf32>
    %41 = vector.shape_cast %40 : vector<180x64xf32> to vector<10x18x64xf32>
    %cst_20 = arith.constant 0.000000e+00 : f32
    %42 = vector.broadcast %cst_20 : f32 to vector<10x18x64xf32>
    %43 = arith.select %28, %41, %42 : vector<10x18x64xi1>, vector<10x18x64xf32>
    %44 = arith.truncf %43 : vector<10x18x64xf32> to vector<10x18x64xbf16>
    %45 = vector.extract_strided_slice %44 {offsets = [0, 0, 0], sizes = [8, 16, 64], strides = [1, 1, 1]} : vector<10x18x64xbf16> to vector<8x16x64xbf16>
    %46 = vector.shape_cast %45 : vector<8x16x64xbf16> to vector<128x64xbf16>
    %c0_21 = arith.constant 0 : index
    %c0_22 = arith.constant 0 : index
    %47 = vector.load %arg9[%c0_21, %c0_22] : memref<128x576xbf16, #tpu.memory_space<vmem>>, vector<128x64xbf16>
    tpu.vector_store %arg9[%c0_21, %c0_22], %46 {strides = array<i32>} : memref<128x576xbf16, #tpu.memory_space<vmem>>, vector<128x64xbf16>,
    %48 = vector.extract_strided_slice %44 {offsets = [0, 1, 0], sizes = [8, 16, 64], strides = [1, 1, 1]} : vector<10x18x64xbf16> to vector<8x16x64xbf16>
    %49 = vector.shape_cast %48 : vector<8x16x64xbf16> to vector<128x64xbf16>
    %c0_23 = arith.constant 0 : index
    %c64 = arith.constant 64 : index
    %50 = vector.load %arg9[%c0_23, %c64] : memref<128x576xbf16, #tpu.memory_space<vmem>>, vector<128x64xbf16>
    tpu.vector_store %arg9[%c0_23, %c64], %49 {strides = array<i32>} : memref<128x576xbf16, #tpu.memory_space<vmem>>, vector<128x64xbf16>,
    %51 = vector.extract_strided_slice %44 {offsets = [0, 2, 0], sizes = [8, 16, 64], strides = [1, 1, 1]} : vector<10x18x64xbf16> to vector<8x16x64xbf16>
    %52 = vector.shape_cast %51 : vector<8x16x64xbf16> to vector<128x64xbf16>
    %c0_24 = arith.constant 0 : index
    %c128 = arith.constant 128 : index
    %53 = vector.load %arg9[%c0_24, %c128] : memref<128x576xbf16, #tpu.memory_space<vmem>>, vector<128x64xbf16>
    tpu.vector_store %arg9[%c0_24, %c128], %52 {strides = array<i32>} : memref<128x576xbf16, #tpu.memory_space<vmem>>, vector<128x64xbf16>,
    %54 = vector.extract_strided_slice %44 {offsets = [1, 0, 0], sizes = [8, 16, 64], strides = [1, 1, 1]} : vector<10x18x64xbf16> to vector<8x16x64xbf16>
    %55 = vector.shape_cast %54 : vector<8x16x64xbf16> to vector<128x64xbf16>
    %c0_25 = arith.constant 0 : index
    %c192 = arith.constant 192 : index
    %56 = vector.load %arg9[%c0_25, %c192] : memref<128x576xbf16, #tpu.memory_space<vmem>>, vector<128x64xbf16>
    tpu.vector_store %arg9[%c0_25, %c192], %55 {strides = array<i32>} : memref<128x576xbf16, #tpu.memory_space<vmem>>, vector<128x64xbf16>,
    %57 = vector.extract_strided_slice %44 {offsets = [1, 1, 0], sizes = [8, 16, 64], strides = [1, 1, 1]} : vector<10x18x64xbf16> to vector<8x16x64xbf16>
    %58 = vector.shape_cast %57 : vector<8x16x64xbf16> to vector<128x64xbf16>
    %c0_26 = arith.constant 0 : index
    %c256 = arith.constant 256 : index
    %59 = vector.load %arg9[%c0_26, %c256] : memref<128x576xbf16, #tpu.memory_space<vmem>>, vector<128x64xbf16>
    tpu.vector_store %arg9[%c0_26, %c256], %58 {strides = array<i32>} : memref<128x576xbf16, #tpu.memory_space<vmem>>, vector<128x64xbf16>,
    %60 = vector.extract_strided_slice %44 {offsets = [1, 2, 0], sizes = [8, 16, 64], strides = [1, 1, 1]} : vector<10x18x64xbf16> to vector<8x16x64xbf16>
    %61 = vector.shape_cast %60 : vector<8x16x64xbf16> to vector<128x64xbf16>
    %c0_27 = arith.constant 0 : index
    %c320 = arith.constant 320 : index
    %62 = vector.load %arg9[%c0_27, %c320] : memref<128x576xbf16, #tpu.memory_space<vmem>>, vector<128x64xbf16>
    tpu.vector_store %arg9[%c0_27, %c320], %61 {strides = array<i32>} : memref<128x576xbf16, #tpu.memory_space<vmem>>, vector<128x64xbf16>,
    %63 = vector.extract_strided_slice %44 {offsets = [2, 0, 0], sizes = [8, 16, 64], strides = [1, 1, 1]} : vector<10x18x64xbf16> to vector<8x16x64xbf16>
    %64 = vector.shape_cast %63 : vector<8x16x64xbf16> to vector<128x64xbf16>
    %c0_28 = arith.constant 0 : index
    %c384 = arith.constant 384 : index
    %65 = vector.load %arg9[%c0_28, %c384] : memref<128x576xbf16, #tpu.memory_space<vmem>>, vector<128x64xbf16>
    tpu.vector_store %arg9[%c0_28, %c384], %64 {strides = array<i32>} : memref<128x576xbf16, #tpu.memory_space<vmem>>, vector<128x64xbf16>,
    %66 = vector.extract_strided_slice %44 {offsets = [2, 1, 0], sizes = [8, 16, 64], strides = [1, 1, 1]} : vector<10x18x64xbf16> to vector<8x16x64xbf16>
    %67 = vector.shape_cast %66 : vector<8x16x64xbf16> to vector<128x64xbf16>
    %c0_29 = arith.constant 0 : index
    %c448 = arith.constant 448 : index
    %68 = vector.load %arg9[%c0_29, %c448] : memref<128x576xbf16, #tpu.memory_space<vmem>>, vector<128x64xbf16>
    tpu.vector_store %arg9[%c0_29, %c448], %67 {strides = array<i32>} : memref<128x576xbf16, #tpu.memory_space<vmem>>, vector<128x64xbf16>,
    %69 = vector.extract_strided_slice %44 {offsets = [2, 2, 0], sizes = [8, 16, 64], strides = [1, 1, 1]} : vector<10x18x64xbf16> to vector<8x16x64xbf16>
    %70 = vector.shape_cast %69 : vector<8x16x64xbf16> to vector<128x64xbf16>
    %c0_30 = arith.constant 0 : index
    %c512 = arith.constant 512 : index
    %71 = vector.load %arg9[%c0_30, %c512] : memref<128x576xbf16, #tpu.memory_space<vmem>>, vector<128x64xbf16>
    tpu.vector_store %arg9[%c0_30, %c512], %70 {strides = array<i32>} : memref<128x576xbf16, #tpu.memory_space<vmem>>, vector<128x64xbf16>,
    %c0_31 = arith.constant 0 : index
    %c0_32 = arith.constant 0 : index
    %72 = vector.load %arg9[%c0_31, %c0_32] : memref<128x576xbf16, #tpu.memory_space<vmem>>, vector<128x576xbf16>
    %cst_33 = arith.constant dense<0.000000e+00> : vector<128x64xf32>
    %73 = tpu.matmul %72, %31, %cst_33 {dimension_numbers = #tpu.dot_dimension_numbers<[1], [0], [0], [1], [0, 0, 1, 1], [], []>} : vector<128x576xbf16>, vector<576x64xbf16>, vector<128x64xf32> -> vector<128x64xf32>
    %74 = vector.broadcast %32 : vector<1x64xf32> to vector<128x64xf32>
    %75 = arith.addf %73, %74 : vector<128x64xf32>
    %cst_34 = arith.constant 0.000000e+00 : f32
    %76 = vector.broadcast %cst_34 : f32 to vector<128x64xf32>
    %77 = arith.maximumf %75, %76 : vector<128x64xf32>
    %c0_35 = arith.constant 0 : index
    %c0_36 = arith.constant 0 : index
    %c0_37 = arith.constant 0 : index
    %c0_38 = arith.constant 0 : index
    %78 = vector.load %arg2[%c0_35, %c0_36, %c0_37, %c0_38] : memref<1x10x18x27xbf16, #tpu.memory_space<vmem>>, vector<1x10x18x27xbf16>
    %79 = vector.shape_cast %78 : vector<1x10x18x27xbf16> to vector<10x18x27xbf16>
    %80 = vector.shape_cast %79 : vector<10x18x27xbf16> to vector<180x27xbf16>
    %cst_39 = arith.constant dense<0.000000e+00> : vector<180x64xf32>
    %81 = tpu.matmul %80, %29, %cst_39 {dimension_numbers = #tpu.dot_dimension_numbers<[1], [0], [0], [1], [0, 0, 1, 1], [], []>} : vector<180x27xbf16>, vector<27x64xbf16>, vector<180x64xf32> -> vector<180x64xf32>
    %82 = vector.broadcast %30 : vector<1x64xf32> to vector<180x64xf32>
    %83 = arith.addf %81, %82 : vector<180x64xf32>
    %cst_40 = arith.constant 0.000000e+00 : f32
    %84 = vector.broadcast %cst_40 : f32 to vector<180x64xf32>
    %85 = arith.maximumf %83, %84 : vector<180x64xf32>
    %86 = vector.shape_cast %85 : vector<180x64xf32> to vector<10x18x64xf32>
    %cst_41 = arith.constant 0.000000e+00 : f32
    %87 = vector.broadcast %cst_41 : f32 to vector<10x18x64xf32>
    %88 = arith.select %28, %86, %87 : vector<10x18x64xi1>, vector<10x18x64xf32>
    %89 = arith.truncf %88 : vector<10x18x64xf32> to vector<10x18x64xbf16>
    %90 = vector.extract_strided_slice %89 {offsets = [0, 0, 0], sizes = [8, 16, 64], strides = [1, 1, 1]} : vector<10x18x64xbf16> to vector<8x16x64xbf16>
    %91 = vector.shape_cast %90 : vector<8x16x64xbf16> to vector<128x64xbf16>
    %c0_42 = arith.constant 0 : index
    %c0_43 = arith.constant 0 : index
    %92 = vector.load %arg9[%c0_42, %c0_43] : memref<128x576xbf16, #tpu.memory_space<vmem>>, vector<128x64xbf16>
    tpu.vector_store %arg9[%c0_42, %c0_43], %91 {strides = array<i32>} : memref<128x576xbf16, #tpu.memory_space<vmem>>, vector<128x64xbf16>,
    %93 = vector.extract_strided_slice %89 {offsets = [0, 1, 0], sizes = [8, 16, 64], strides = [1, 1, 1]} : vector<10x18x64xbf16> to vector<8x16x64xbf16>
    %94 = vector.shape_cast %93 : vector<8x16x64xbf16> to vector<128x64xbf16>
    %c0_44 = arith.constant 0 : index
    %c64_45 = arith.constant 64 : index
    %95 = vector.load %arg9[%c0_44, %c64_45] : memref<128x576xbf16, #tpu.memory_space<vmem>>, vector<128x64xbf16>
    tpu.vector_store %arg9[%c0_44, %c64_45], %94 {strides = array<i32>} : memref<128x576xbf16, #tpu.memory_space<vmem>>, vector<128x64xbf16>,
    %96 = vector.extract_strided_slice %89 {offsets = [0, 2, 0], sizes = [8, 16, 64], strides = [1, 1, 1]} : vector<10x18x64xbf16> to vector<8x16x64xbf16>
    %97 = vector.shape_cast %96 : vector<8x16x64xbf16> to vector<128x64xbf16>
    %c0_46 = arith.constant 0 : index
    %c128_47 = arith.constant 128 : index
    %98 = vector.load %arg9[%c0_46, %c128_47] : memref<128x576xbf16, #tpu.memory_space<vmem>>, vector<128x64xbf16>
    tpu.vector_store %arg9[%c0_46, %c128_47], %97 {strides = array<i32>} : memref<128x576xbf16, #tpu.memory_space<vmem>>, vector<128x64xbf16>,
    %99 = vector.extract_strided_slice %89 {offsets = [1, 0, 0], sizes = [8, 16, 64], strides = [1, 1, 1]} : vector<10x18x64xbf16> to vector<8x16x64xbf16>
    %100 = vector.shape_cast %99 : vector<8x16x64xbf16> to vector<128x64xbf16>
    %c0_48 = arith.constant 0 : index
    %c192_49 = arith.constant 192 : index
    %101 = vector.load %arg9[%c0_48, %c192_49] : memref<128x576xbf16, #tpu.memory_space<vmem>>, vector<128x64xbf16>
    tpu.vector_store %arg9[%c0_48, %c192_49], %100 {strides = array<i32>} : memref<128x576xbf16, #tpu.memory_space<vmem>>, vector<128x64xbf16>,
    %102 = vector.extract_strided_slice %89 {offsets = [1, 1, 0], sizes = [8, 16, 64], strides = [1, 1, 1]} : vector<10x18x64xbf16> to vector<8x16x64xbf16>
    %103 = vector.shape_cast %102 : vector<8x16x64xbf16> to vector<128x64xbf16>
    %c0_50 = arith.constant 0 : index
    %c256_51 = arith.constant 256 : index
    %104 = vector.load %arg9[%c0_50, %c256_51] : memref<128x576xbf16, #tpu.memory_space<vmem>>, vector<128x64xbf16>
    tpu.vector_store %arg9[%c0_50, %c256_51], %103 {strides = array<i32>} : memref<128x576xbf16, #tpu.memory_space<vmem>>, vector<128x64xbf16>,
    %105 = vector.extract_strided_slice %89 {offsets = [1, 2, 0], sizes = [8, 16, 64], strides = [1, 1, 1]} : vector<10x18x64xbf16> to vector<8x16x64xbf16>
    %106 = vector.shape_cast %105 : vector<8x16x64xbf16> to vector<128x64xbf16>
    %c0_52 = arith.constant 0 : index
    %c320_53 = arith.constant 320 : index
    %107 = vector.load %arg9[%c0_52, %c320_53] : memref<128x576xbf16, #tpu.memory_space<vmem>>, vector<128x64xbf16>
    tpu.vector_store %arg9[%c0_52, %c320_53], %106 {strides = array<i32>} : memref<128x576xbf16, #tpu.memory_space<vmem>>, vector<128x64xbf16>,
    %108 = vector.extract_strided_slice %89 {offsets = [2, 0, 0], sizes = [8, 16, 64], strides = [1, 1, 1]} : vector<10x18x64xbf16> to vector<8x16x64xbf16>
    %109 = vector.shape_cast %108 : vector<8x16x64xbf16> to vector<128x64xbf16>
    %c0_54 = arith.constant 0 : index
    %c384_55 = arith.constant 384 : index
    %110 = vector.load %arg9[%c0_54, %c384_55] : memref<128x576xbf16, #tpu.memory_space<vmem>>, vector<128x64xbf16>
    tpu.vector_store %arg9[%c0_54, %c384_55], %109 {strides = array<i32>} : memref<128x576xbf16, #tpu.memory_space<vmem>>, vector<128x64xbf16>,
    %111 = vector.extract_strided_slice %89 {offsets = [2, 1, 0], sizes = [8, 16, 64], strides = [1, 1, 1]} : vector<10x18x64xbf16> to vector<8x16x64xbf16>
    %112 = vector.shape_cast %111 : vector<8x16x64xbf16> to vector<128x64xbf16>
    %c0_56 = arith.constant 0 : index
    %c448_57 = arith.constant 448 : index
    %113 = vector.load %arg9[%c0_56, %c448_57] : memref<128x576xbf16, #tpu.memory_space<vmem>>, vector<128x64xbf16>
    tpu.vector_store %arg9[%c0_56, %c448_57], %112 {strides = array<i32>} : memref<128x576xbf16, #tpu.memory_space<vmem>>, vector<128x64xbf16>,
    %114 = vector.extract_strided_slice %89 {offsets = [2, 2, 0], sizes = [8, 16, 64], strides = [1, 1, 1]} : vector<10x18x64xbf16> to vector<8x16x64xbf16>
    %115 = vector.shape_cast %114 : vector<8x16x64xbf16> to vector<128x64xbf16>
    %c0_58 = arith.constant 0 : index
    %c512_59 = arith.constant 512 : index
    %116 = vector.load %arg9[%c0_58, %c512_59] : memref<128x576xbf16, #tpu.memory_space<vmem>>, vector<128x64xbf16>
    tpu.vector_store %arg9[%c0_58, %c512_59], %115 {strides = array<i32>} : memref<128x576xbf16, #tpu.memory_space<vmem>>, vector<128x64xbf16>,
    %c0_60 = arith.constant 0 : index
    %c0_61 = arith.constant 0 : index
    %117 = vector.load %arg9[%c0_60, %c0_61] : memref<128x576xbf16, #tpu.memory_space<vmem>>, vector<128x576xbf16>
    %cst_62 = arith.constant dense<0.000000e+00> : vector<128x64xf32>
    %118 = tpu.matmul %117, %31, %cst_62 {dimension_numbers = #tpu.dot_dimension_numbers<[1], [0], [0], [1], [0, 0, 1, 1], [], []>} : vector<128x576xbf16>, vector<576x64xbf16>, vector<128x64xf32> -> vector<128x64xf32>
    %119 = vector.broadcast %32 : vector<1x64xf32> to vector<128x64xf32>
    %120 = arith.addf %118, %119 : vector<128x64xf32>
    %cst_63 = arith.constant 0.000000e+00 : f32
    %121 = vector.broadcast %cst_63 : f32 to vector<128x64xf32>
    %122 = arith.maximumf %120, %121 : vector<128x64xf32>
    %123 = arith.subf %77, %122 : vector<128x64xf32>
    %124 = math.absf %123 : vector<128x64xf32>
    %125 = vector.shape_cast %124 : vector<128x64xf32> to vector<1x128x64xf32>
    %cst_64 = arith.constant dense<0.000000e+00> : vector<1xf32>
    %126 = vector.multi_reduction <add>, %125, %cst_64 [1, 2] : vector<1x128x64xf32> to vector<1xf32>
    %127 = vector.shape_cast %126 : vector<1xf32> to vector<1x1x1xf32>
    %128 = vector.extract %127[0, 0, 0] : f32 from vector<1x1x1xf32>
    %c0_65 = arith.constant 0 : index
    %c1 = arith.constant 1 : index
    %c1_66 = arith.constant 1 : index
    %c12 = arith.constant 12 : index
    %129 = vector.load %arg1[%c0_65, %c1, %c1_66, %c12] : memref<1x10x18x27xbf16, #tpu.memory_space<vmem>>, vector<1x8x16x3xbf16>
    %130 = vector.shape_cast %129 : vector<1x8x16x3xbf16> to vector<8x16x3xbf16>
    %131 = arith.extf %130 : vector<8x16x3xbf16> to vector<8x16x3xf32>
    %c0_67 = arith.constant 0 : index
    %c1_68 = arith.constant 1 : index
    %c1_69 = arith.constant 1 : index
    %c12_70 = arith.constant 12 : index
    %132 = vector.load %arg2[%c0_67, %c1_68, %c1_69, %c12_70] : memref<1x10x18x27xbf16, #tpu.memory_space<vmem>>, vector<1x8x16x3xbf16>
    %133 = vector.shape_cast %132 : vector<1x8x16x3xbf16> to vector<8x16x3xbf16>
    %134 = arith.extf %133 : vector<8x16x3xbf16> to vector<8x16x3xf32>
    %135 = arith.subf %131, %134 : vector<8x16x3xf32>
    %136 = math.absf %135 : vector<8x16x3xf32>
    %137 = vector.shape_cast %136 : vector<8x16x3xf32> to vector<1x8x16x3xf32>
    %cst_71 = arith.constant dense<0.000000e+00> : vector<1xf32>
    %138 = vector.multi_reduction <add>, %137, %cst_71 [1, 2, 3] : vector<1x8x16x3xf32> to vector<1xf32>
    %139 = vector.shape_cast %138 : vector<1xf32> to vector<1x1x1x1xf32>
    %140 = vector.extract %139[0, 0, 0, 0] : f32 from vector<1x1x1x1xf32>
    %141 = vector.broadcast %140 : f32 to vector<1x8x128xf32>
    %c0_72 = arith.constant 0 : index
    %c0_73 = arith.constant 0 : index
    %c0_74 = arith.constant 0 : index
    %142 = vector.load %arg7[%c0_72, %c0_73, %c0_74] : memref<1x8x128xf32, #tpu.memory_space<vmem>>, vector<1x8x128xf32>
    tpu.vector_store %arg7[%c0_72, %c0_73, %c0_74], %141 {strides = array<i32>} : memref<1x8x128xf32, #tpu.memory_space<vmem>>, vector<1x8x128xf32>,
    %143 = vector.broadcast %128 : f32 to vector<1x8x128xf32>
    %c0_75 = arith.constant 0 : index
    %c0_76 = arith.constant 0 : index
    %c0_77 = arith.constant 0 : index
    %144 = vector.load %arg8[%c0_75, %c0_76, %c0_77] : memref<1x8x128xf32, #tpu.memory_space<vmem>>, vector<1x8x128xf32>
    tpu.vector_store %arg8[%c0_75, %c0_76, %c0_77], %143 {strides = array<i32>} : memref<1x8x128xf32, #tpu.memory_space<vmem>>, vector<1x8x128xf32>,
    return
  }
  func.func @transform_0(%arg0: i32) -> (i32, i32, i32, i32) {
    %c0_i32 = arith.constant 0 : i32
    %c0_i32_0 = arith.constant 0 : i32
    %c0_i32_1 = arith.constant 0 : i32
    %c0_i32_2 = arith.constant 0 : i32
    return %arg0, %c0_i32, %c0_i32_0, %c0_i32_1 : i32, i32, i32, i32
  }
  func.func @transform_1(%arg0: i32) -> (i32, i32, i32, i32) {
    %c0_i32 = arith.constant 0 : i32
    %c0_i32_0 = arith.constant 0 : i32
    %c0_i32_1 = arith.constant 0 : i32
    %c0_i32_2 = arith.constant 0 : i32
    return %arg0, %c0_i32, %c0_i32_0, %c0_i32_1 : i32, i32, i32, i32
  }
  func.func @transform_2(%arg0: i32) -> (i32, i32) {
    %c0_i32 = arith.constant 0 : i32
    %c0_i32_0 = arith.constant 0 : i32
    %c0_i32_1 = arith.constant 0 : i32
    return %c0_i32, %c0_i32_0 : i32, i32
  }
  func.func @transform_3(%arg0: i32) -> (i32, i32) {
    %c0_i32 = arith.constant 0 : i32
    %c0_i32_0 = arith.constant 0 : i32
    %c0_i32_1 = arith.constant 0 : i32
    return %c0_i32, %c0_i32_0 : i32, i32
  }
  func.func @transform_4(%arg0: i32) -> (i32, i32) {
    %c0_i32 = arith.constant 0 : i32
    %c0_i32_0 = arith.constant 0 : i32
    %c0_i32_1 = arith.constant 0 : i32
    return %c0_i32, %c0_i32_0 : i32, i32
  }
  func.func @transform_5(%arg0: i32) -> (i32, i32) {
    %c0_i32 = arith.constant 0 : i32
    %c0_i32_0 = arith.constant 0 : i32
    %c0_i32_1 = arith.constant 0 : i32
    return %c0_i32, %c0_i32_0 : i32, i32
  }
  func.func @transform_6(%arg0: i32) -> (i32, i32, i32) {
    %c0_i32 = arith.constant 0 : i32
    %c0_i32_0 = arith.constant 0 : i32
    %c0_i32_1 = arith.constant 0 : i32
    return %arg0, %c0_i32, %c0_i32_0 : i32, i32, i32
  }
  func.func @transform_7(%arg0: i32) -> (i32, i32, i32) {
    %c0_i32 = arith.constant 0 : i32
    %c0_i32_0 = arith.constant 0 : i32
    %c0_i32_1 = arith.constant 0 : i32
    return %arg0, %c0_i32, %c0_i32_0 : i32, i32, i32
  }
}

</mosaic_0001>

<llo_original>
// kernel: a_call__.1
$region0: #{a_call__.1}
  #allocation0 [shape = 'u32[]', space=smem, size = 0x4, offset = 0x4, fixed_abs, tag = 'smem constant byte address 0x4 - core index']
  #allocation1 [shape = 'u32[144,128]{1,0:T(1,128)}', space=vmem, size = 0x12000, scoped, tag = 'internal scratch']
  #allocation2 [shape = 'bf16[128,576]{1,0:T(16,128)(2,1)}', space=vmem, size = 0x28000, scoped, tag = 'scratch operand']
  %s0 = inlined_call_operand.vmem [shape: bf16[4,10,18,27], index: 0, kind: input, shape index: {}]
  %s1 = inlined_call_operand.vmem [shape: bf16[4,10,18,27], index: 1, kind: input, shape index: {}]
  %s2 = inlined_call_operand.vmem [shape: bf16[27,64], index: 2, kind: input, shape index: {}]
  %s3 = inlined_call_operand.vmem [shape: f32[1,64], index: 3, kind: input, shape index: {}]
  %s4 = inlined_call_operand.vmem [shape: bf16[576,64], index: 4, kind: input, shape index: {}]
  %s5 = inlined_call_operand.vmem [shape: f32[1,64], index: 5, kind: input, shape index: {}]
  %s6 = inlined_call_operand.vmem [shape: f32[4,8,128], index: 6, kind: output, shape index: {0}]
  %s7 = inlined_call_operand.vmem [shape: f32[4,8,128], index: 7, kind: output, shape index: {1}]
  %8 = xla_tuple %s6, %s7
  %s9 = sld [smem:[#allocation0]]
  $region65: #{a_call__.1} parent=0
    _
  %s11 = ssub.s32 1, %s9
  %s12 = scalar_select 0, %s11, %s9
  loop: start=0, step=1, limit=6
  $region2: #{a_call__.1} parent=0 // loop_pre_header
    _
  $region3: #{a_call__.1} parent=0 // loop_header
    %s14 = sphi 0, %s18
    %p15 = scmp.ge.s32.totalorder %s14, 6
    %s24 = sphi 0, %s26
    %s27 = sphi 0, %s24
    %s28 = sphi 0, %s27
    %s44 = sphi 0, %s28
    %s50 = sphi 0, %s52
    %s53 = sphi 0, %s50
    %s54 = sphi 0, %s53
    %s70 = sphi 0, %s54
    %s74 = sphi 0, %s74
    %s76 = sphi 0, %s74
    %s77 = sphi 0, %s76
    %s91 = sphi 0, %s77
    %s95 = sphi 0, %s95
    %s97 = sphi 0, %s95
    %s98 = sphi 0, %s97
    %s112 = sphi 0, %s98
    %s116 = sphi 0, %s116
    %s118 = sphi 0, %s116
    %s119 = sphi 0, %s118
    %s133 = sphi 0, %s119
    %s137 = sphi 0, %s137
    %s139 = sphi 0, %s137
    %s140 = sphi 0, %s139
    %s154 = sphi 0, %s140
    %s160 = sphi 0, %s162
    %s163 = sphi 0, %s160
    %s164 = sphi 0, %s163
    %s180 = sphi 0, %s164
    %s186 = sphi 0, %s188
    %s189 = sphi 0, %s186
    %s190 = sphi 0, %s189
    %s206 = sphi 0, %s190
  $region4: #{a_call__.1} parent=0 // loop_header_branch
    %17 = sbr.rel (%p15) target = $region8
  $region5: #{a_call__.1} parent=0 // loop_body
    %s19 = ssub.s32 %s14, 1
    %s20 = ssub.s32 %s14, 2
    %s21 = sadd.s32 %s14, 1
    %s22 = ssub.s32 %s14, %s21
    %p23 = scmp.eq.s32.totalorder %s22, 0
    %s25 = sadd.s32 %s24, 1
    %s26 = scalar_select %p23, %s24, %s25
    %p29 = pneg %p23
    %p30 = scmp.eq.s32.totalorder %s14, 3
    %p31 = por %p29, %p30
    %p32 = scmp.ne.s32.totalorder %s24, %s27
    %p33 = scmp.eq.s32.totalorder %s14, 0
    %p34 = por %p32, %p33
    %p35 = scmp.ne.s32.totalorder %s24, %s27
    %p36 = scmp.eq.s32.totalorder %s19, 3
    %p37 = por %p35, %p36
    %p38 = scmp.ne.s32.totalorder %s27, %s28
    %p39 = scmp.eq.s32.totalorder %s19, 0
    %p40 = por %p38, %p39
    %p41 = scmp.ne.s32.totalorder %s27, %s28
    %p42 = scmp.eq.s32.totalorder %s20, 3
    %p43 = por %p41, %p42
    %p45 = scmp.ne.s32.totalorder %s28, %s44
    %p46 = scmp.eq.s32.totalorder %s20, 0
    %p47 = por %p45, %p46
    %s48 = ssub.s32 %s14, %s21
    %p49 = scmp.eq.s32.totalorder %s48, 0
    %s51 = sadd.s32 %s50, 1
    %s52 = scalar_select %p49, %s50, %s51
    %p55 = pneg %p49
    %p56 = scmp.eq.s32.totalorder %s14, 3
    %p57 = por %p55, %p56
    %p58 = scmp.ne.s32.totalorder %s50, %s53
    %p59 = scmp.eq.s32.totalorder %s14, 0
    %p60 = por %p58, %p59
    %p61 = scmp.ne.s32.totalorder %s50, %s53
    %p62 = scmp.eq.s32.totalorder %s19, 3
    %p63 = por %p61, %p62
    %p64 = scmp.ne.s32.totalorder %s53, %s54
    %p65 = scmp.eq.s32.totalorder %s19, 0
    %p66 = por %p64, %p65
    %p67 = scmp.ne.s32.totalorder %s53, %s54
    %p68 = scmp.eq.s32.totalorder %s20, 3
    %p69 = por %p67, %p68
    %p71 = scmp.ne.s32.totalorder %s54, %s70
    %p72 = scmp.eq.s32.totalorder %s20, 0
    %p73 = por %p71, %p72
    %s75 = sadd.s32 %s74, 1
    %p78 = scmp.eq.s32.totalorder %s14, 3
    %p79 = scmp.ne.s32.totalorder %s74, %s76
    %p80 = scmp.eq.s32.totalorder %s14, 0
    %p81 = por %p79, %p80
    %p82 = scmp.ne.s32.totalorder %s74, %s76
    %p83 = scmp.eq.s32.totalorder %s19, 3
    %p84 = por %p82, %p83
    %p85 = scmp.ne.s32.totalorder %s76, %s77
    %p86 = scmp.eq.s32.totalorder %s19, 0
    %p87 = por %p85, %p86
    %p88 = scmp.ne.s32.totalorder %s76, %s77
    %p89 = scmp.eq.s32.totalorder %s20, 3
    %p90 = por %p88, %p89
    %p92 = scmp.ne.s32.totalorder %s77, %s91
    %p93 = scmp.eq.s32.totalorder %s20, 0
    %p94 = por %p92, %p93
    %s96 = sadd.s32 %s95, 1
    %p99 = scmp.eq.s32.totalorder %s14, 3
    %p100 = scmp.ne.s32.totalorder %s95, %s97
    %p101 = scmp.eq.s32.totalorder %s14, 0
    %p102 = por %p100, %p101
    %p103 = scmp.ne.s32.totalorder %s95, %s97
    %p104 = scmp.eq.s32.totalorder %s19, 3
    %p105 = por %p103, %p104
    %p106 = scmp.ne.s32.totalorder %s97, %s98
    %p107 = scmp.eq.s32.totalorder %s19, 0
    %p108 = por %p106, %p107
    %p109 = scmp.ne.s32.totalorder %s97, %s98
    %p110 = scmp.eq.s32.totalorder %s20, 3
    %p111 = por %p109, %p110
    %p113 = scmp.ne.s32.totalorder %s98, %s112
    %p114 = scmp.eq.s32.totalorder %s20, 0
    %p115 = por %p113, %p114
    %s117 = sadd.s32 %s116, 1
    %p120 = scmp.eq.s32.totalorder %s14, 3
    %p121 = scmp.ne.s32.totalorder %s116, %s118
    %p122 = scmp.eq.s32.totalorder %s14, 0
    %p123 = por %p121, %p122
    %p124 = scmp.ne.s32.totalorder %s116, %s118
    %p125 = scmp.eq.s32.totalorder %s19, 3
    %p126 = por %p124, %p125
    %p127 = scmp.ne.s32.totalorder %s118, %s119
    %p128 = scmp.eq.s32.totalorder %s19, 0
    %p129 = por %p127, %p128
    %p130 = scmp.ne.s32.totalorder %s118, %s119
    %p131 = scmp.eq.s32.totalorder %s20, 3
    %p132 = por %p130, %p131
    %p134 = scmp.ne.s32.totalorder %s119, %s133
    %p135 = scmp.eq.s32.totalorder %s20, 0
    %p136 = por %p134, %p135
    %s138 = sadd.s32 %s137, 1
    %p141 = scmp.eq.s32.totalorder %s14, 3
    %p142 = scmp.ne.s32.totalorder %s137, %s139
    %p143 = scmp.eq.s32.totalorder %s14, 0
    %p144 = por %p142, %p143
    %p145 = scmp.ne.s32.totalorder %s137, %s139
    %p146 = scmp.eq.s32.totalorder %s19, 3
    %p147 = por %p145, %p146
    %p148 = scmp.ne.s32.totalorder %s139, %s140
    %p149 = scmp.eq.s32.totalorder %s19, 0
    %p150 = por %p148, %p149
    %p151 = scmp.ne.s32.totalorder %s139, %s140
    %p152 = scmp.eq.s32.totalorder %s20, 3
    %p153 = por %p151, %p152
    %p155 = scmp.ne.s32.totalorder %s140, %s154
    %p156 = scmp.eq.s32.totalorder %s20, 0
    %p157 = por %p155, %p156
    %s158 = ssub.s32 %s14, %s21
    %p159 = scmp.eq.s32.totalorder %s158, 0
    %s161 = sadd.s32 %s160, 1
    %s162 = scalar_select %p159, %s160, %s161
    %p165 = pneg %p159
    %p166 = scmp.eq.s32.totalorder %s14, 3
    %p167 = por %p165, %p166
    %p168 = scmp.ne.s32.totalorder %s160, %s163
    %p169 = scmp.eq.s32.totalorder %s14, 0
    %p170 = por %p168, %p169
    %p171 = scmp.ne.s32.totalorder %s160, %s163
    %p172 = scmp.eq.s32.totalorder %s19, 3
    %p173 = por %p171, %p172
    %p174 = scmp.ne.s32.totalorder %s163, %s164
    %p175 = scmp.eq.s32.totalorder %s19, 0
    %p176 = por %p174, %p175
    %p177 = scmp.ne.s32.totalorder %s163, %s164
    %p178 = scmp.eq.s32.totalorder %s20, 3
    %p179 = por %p177, %p178
    %p181 = scmp.ne.s32.totalorder %s164, %s180
    %p182 = scmp.eq.s32.totalorder %s20, 0
    %p183 = por %p181, %p182
    %s184 = ssub.s32 %s14, %s21
    %p185 = scmp.eq.s32.totalorder %s184, 0
    %s187 = sadd.s32 %s186, 1
    %s188 = scalar_select %p185, %s186, %s187
    %p191 = pneg %p185
    %p192 = scmp.eq.s32.totalorder %s14, 3
    %p193 = por %p191, %p192
    %p194 = scmp.ne.s32.totalorder %s186, %s189
    %p195 = scmp.eq.s32.totalorder %s14, 0
    %p196 = por %p194, %p195
    %p197 = scmp.ne.s32.totalorder %s186, %s189
    %p198 = scmp.eq.s32.totalorder %s19, 3
    %p199 = por %p197, %p198
    %p200 = scmp.ne.s32.totalorder %s189, %s190
    %p201 = scmp.eq.s32.totalorder %s19, 0
    %p202 = por %p200, %p201
    %p203 = scmp.ne.s32.totalorder %s189, %s190
    %p204 = scmp.eq.s32.totalorder %s20, 3
    %p205 = por %p203, %p204
    %p207 = scmp.ne.s32.totalorder %s190, %s206
    %p208 = scmp.eq.s32.totalorder %s20, 0
    %p209 = por %p207, %p208
    %p210 = scmp.le.s32.totalorder 1, %s14
    %p211 = scmp.lt.s32.totalorder %s14, 5
    %p212 = pnand %p210, %p211
    %p213 = pneg %p212
    // Predicated region
    $region9: #{a_call__.1} parent=5 // pred_check
      _
    $region10: #{a_call__.1} parent=5 // pred_check_branch
      %215 = sbr.rel (%p212) target = $region12
    $region11: #{a_call__.1} parent=5 // pred_region
      %s216 = ssub.s32 %s14, 1
      // Predicated region
      $region13: #{a_call__.1} parent=11 // pred_check
        %p217 = pneg %p87
      $region14: #{a_call__.1} parent=11 // pred_check_branch
        %219 = sbr.rel (%p217) target = $region16
      $region15: #{a_call__.1} parent=11 // pred_region
        _
      $region16: #{a_call__.1} parent=11 // pred_fallthru
        _
      // Predicated region
      $region17: #{a_call__.1} parent=11 // pred_check
        %p220 = pneg %p108
      $region18: #{a_call__.1} parent=11 // pred_check_branch
        %222 = sbr.rel (%p220) target = $region20
      $region19: #{a_call__.1} parent=11 // pred_region
        _
      $region20: #{a_call__.1} parent=11 // pred_fallthru
        _
      // Predicated region
      $region21: #{a_call__.1} parent=11 // pred_check
        %p223 = pneg %p129
      $region22: #{a_call__.1} parent=11 // pred_check_branch
        %225 = sbr.rel (%p223) target = $region24
      $region23: #{a_call__.1} parent=11 // pred_region
        _
      $region24: #{a_call__.1} parent=11 // pred_fallthru
        _
      // Predicated region
      $region25: #{a_call__.1} parent=11 // pred_check
        %p226 = pneg %p150
      $region26: #{a_call__.1} parent=11 // pred_check_branch
        %228 = sbr.rel (%p226) target = $region28
      $region27: #{a_call__.1} parent=11 // pred_region
        _
      $region28: #{a_call__.1} parent=11 // pred_fallthru
        _
    $region12: #{a_call__.1} parent=5 // pred_fallthru
      _
    %p229 = scmp.lt.s32.totalorder %s14, 4
    // Predicated region
    $region29: #{a_call__.1} parent=5 // pred_check
      %p230 = pneg %p229
    $region30: #{a_call__.1} parent=5 // pred_check_branch
      %232 = sbr.rel (%p230) target = $region32
    $region31: #{a_call__.1} parent=5 // pred_region
      // Predicated region
      $region33: #{a_call__.1} parent=31 // pred_check
        %p233 = pneg %p34
      $region34: #{a_call__.1} parent=31 // pred_check_branch
        %235 = sbr.rel (%p233) target = $region36
      $region35: #{a_call__.1} parent=31 // pred_region
        %p236 = scmp.lt.s32.totalorder %s14, 3
        %s237 = scalar_select %p236, %s14, 3
        %s238 = smul.addr %s237, 30
        %s239 = smul.addr %s238, 4
        %s240 = scalar_lea.vmem %s0, %s239
      $region36: #{a_call__.1} parent=31 // pred_fallthru
        _
      // Predicated region
      $region37: #{a_call__.1} parent=31 // pred_check
        %p241 = pneg %p60
      $region38: #{a_call__.1} parent=31 // pred_check_branch
        %243 = sbr.rel (%p241) target = $region40
      $region39: #{a_call__.1} parent=31 // pred_region
        %p244 = scmp.lt.s32.totalorder %s14, 3
        %s245 = scalar_select %p244, %s14, 3
        %s246 = smul.addr %s245, 30
        %s247 = smul.addr %s246, 4
        %s248 = scalar_lea.vmem %s1, %s247
      $region40: #{a_call__.1} parent=31 // pred_fallthru
        _
    $region32: #{a_call__.1} parent=5 // pred_fallthru
      _
    %p249 = scmp.le.s32.totalorder 1, %s14
    %p250 = scmp.lt.s32.totalorder %s14, 5
    %p251 = pnand %p249, %p250
    %p252 = pneg %p251
    // Predicated region
    $region41: #{a_call__.1} parent=5 // pred_check
      _
    $region42: #{a_call__.1} parent=5 // pred_check_branch
      %254 = sbr.rel (%p251) target = $region44
    $region43: #{a_call__.1} parent=5 // pred_region
      %s255 = ssub.s32 %s14, 1
      %p256 = scmp.lt.s32.totalorder %s19, 3
      %s257 = scalar_select %p256, %s19, 3
      %s258 = smul.addr %s257, 30
      %s259 = smul.addr %s258, 4
      %s260 = scalar_lea.vmem %s0, %s259
      %p261 = pneg %p40
      %p262 = pneg %p37
      %p263 = scmp.lt.s32.totalorder %s19, 3
      %s264 = scalar_select %p263, %s19, 3
      %s265 = smul.addr %s264, 30
      %s266 = smul.addr %s265, 4
      %s267 = scalar_lea.vmem %s1, %s266
      %p268 = pneg %p66
      %p269 = pneg %p63
      %p270 = pneg %p87
      %p271 = pneg %p84
      %p272 = pneg %p108
      %p273 = pneg %p105
      %p274 = pneg %p129
      %p275 = pneg %p126
      %p276 = pneg %p150
      %p277 = pneg %p147
      %p278 = pneg %p176
      %p279 = pneg %p173
      %p280 = scmp.lt.s32.totalorder %s19, 3
      %s281 = scalar_select %p280, %s19, 3
      %s282 = smul.addr %s281, 8
      %s283 = scalar_lea.vmem %s6, %s282
      %p284 = pneg %p202
      %p285 = pneg %p199
      %p286 = scmp.lt.s32.totalorder %s19, 3
      %s287 = scalar_select %p286, %s19, 3
      %s288 = smul.addr %s287, 8
      %s289 = scalar_lea.vmem %s7, %s288
      %p290 = scmp.lt.s32.totalorder %s19, 3
      %s291 = scalar_select %p290, %s19, 3
      %s292 = smul.addr %s291, 30
      %s293 = smul.addr %s292, 4
      %s294 = scalar_lea.vmem %s0, %s293
      %p295 = scmp.lt.s32.totalorder %s19, 3
      %s296 = scalar_select %p295, %s19, 3
      %s297 = smul.addr %s296, 30
      %s298 = smul.addr %s297, 4
      %s299 = scalar_lea.vmem %s1, %s298
      %p300 = scmp.lt.s32.totalorder %s19, 3
      %s301 = scalar_select %p300, %s19, 3
      %s302 = smul.addr %s301, 8
      %s303 = scalar_lea.vmem %s6, %s302
      %p304 = scmp.lt.s32.totalorder %s19, 3
      %s305 = scalar_select %p304, %s19, 3
      %s306 = smul.addr %s305, 8
      %s307 = scalar_lea.vmem %s7, %s306
      %p309 = scmp.lt.s32.totalorder %s19, 0
      %s310 = ssub.s32 0, %s19
      %s311 = scalar_select %p309, %s310, %s19
      %s312 = sand.u32 %s311, 1
      %s313 = ssub.s32 0, %s312
      %s314 = scalar_select %p309, %s313, %s312
      %p315 = scmp.ne.s32.totalorder %s314, 0
      %p316 = scmp.lt.s32.totalorder %s314, 0
      %p317 = pnand %p316, %p315
      %p318 = pneg %p317
      %s319 = sadd.s32 %s314, 2
      %s320 = scalar_select %p318, %s319, %s314
      %s321 = smul.u32 %s320, 8
      %s322 = ssub.s32 %s321, 1
      %v323 = vstv %s322
      %v324 = vadd.s32 %v323, 1
      %v325 = vadd.s32 %v323, 2
      %v326 = vadd.s32 %v323, 3
      %v327 = vadd.s32 %v323, 4
      %v328 = vadd.s32 %v323, 5
      %v329 = vadd.s32 %v323, 6
      %v330 = vadd.s32 %v323, 7
      %v331 = vadd.s32 %v323, 8
      %v332 = vadd.s32 %v323, 9
      %v333 = vlaneseq
      %v334 = vshrl.u32 %v333, 7
      %v335 = vadd.s32 %v334, 8
      %v336 = vadd.s32 %v334, 16
      %v337 = vsub.s32 %v334, 1
      %v338 = vsub.s32 %v335, 1
      %v339 = vsub.s32 %v336, 1
      %vm340 = vcmp.ge.s32.totalorder %v323, 0
      %vm341 = vcmp.ge.s32.totalorder %v324, 0
      %vm342 = vcmp.ge.s32.totalorder %v325, 0
      %vm343 = vcmp.ge.s32.totalorder %v326, 0
      %vm344 = vcmp.ge.s32.totalorder %v327, 0
      %vm345 = vcmp.ge.s32.totalorder %v328, 0
      %vm346 = vcmp.ge.s32.totalorder %v329, 0
      %vm347 = vcmp.ge.s32.totalorder %v330, 0
      %vm348 = vcmp.ge.s32.totalorder %v331, 0
      %vm349 = vcmp.ge.s32.totalorder %v332, 0
      %vm350 = vcmp.lt.s32.totalorder %v323, 16
      %vm351 = vcmp.lt.s32.totalorder %v324, 16
      %vm352 = vcmp.lt.s32.totalorder %v325, 16
      %vm353 = vcmp.lt.s32.totalorder %v326, 16
      %vm354 = vcmp.lt.s32.totalorder %v327, 16
      %vm355 = vcmp.lt.s32.totalorder %v328, 16
      %vm356 = vcmp.lt.s32.totalorder %v329, 16
      %vm357 = vcmp.lt.s32.totalorder %v330, 16
      %vm358 = vcmp.lt.s32.totalorder %v331, 16
      %vm359 = vcmp.lt.s32.totalorder %v332, 16
      %vm360 = vmand %vm340, %vm350
      %vm361 = vmand %vm341, %vm351
      %vm362 = vmand %vm342, %vm352
      %vm363 = vmand %vm343, %vm353
      %vm364 = vmand %vm344, %vm354
      %vm365 = vmand %vm345, %vm355
      %vm366 = vmand %vm346, %vm356
      %vm367 = vmand %vm347, %vm357
      %vm368 = vmand %vm348, %vm358
      %vm369 = vmand %vm349, %vm359
      %vm370 = vcmp.ge.s32.totalorder %v337, 0
      %vm371 = vcmp.ge.s32.totalorder %v338, 0
      %vm372 = vcmp.ge.s32.totalorder %v339, 0
      %vm373 = vmand %vm360, %vm370
      %vm374 = vmand %vm360, %vm371
      %vm375 = vmand %vm360, %vm372
      %vm376 = vmand %vm361, %vm370
      %vm377 = vmand %vm361, %vm371
      %vm378 = vmand %vm361, %vm372
      %vm379 = vmand %vm362, %vm370
      %vm380 = vmand %vm362, %vm371
      %vm381 = vmand %vm362, %vm372
      %vm382 = vmand %vm363, %vm370
      %vm383 = vmand %vm363, %vm371
      %vm384 = vmand %vm363, %vm372
      %vm385 = vmand %vm364, %vm370
      %vm386 = vmand %vm364, %vm371
      %vm387 = vmand %vm364, %vm372
      %vm388 = vmand %vm365, %vm370
      %vm389 = vmand %vm365, %vm371
      %vm390 = vmand %vm365, %vm372
      %vm391 = vmand %vm366, %vm370
      %vm392 = vmand %vm366, %vm371
      %vm393 = vmand %vm366, %vm372
      %vm394 = vmand %vm367, %vm370
      %vm395 = vmand %vm367, %vm371
      %vm396 = vmand %vm367, %vm372
      %vm397 = vmand %vm368, %vm370
      %vm398 = vmand %vm368, %vm371
      %vm399 = vmand %vm368, %vm372
      %vm400 = vmand %vm369, %vm370
      %vm401 = vmand %vm369, %vm371
      %vm402 = vmand %vm369, %vm372
      %vm403 = vcmp.lt.s32.totalorder %v337, 16
      %vm404 = vcmp.lt.s32.totalorder %v338, 16
      %vm405 = vcmp.lt.s32.totalorder %v339, 16
      %vm406 = vmand %vm373, %vm403
      %vm407 = vmand %vm374, %vm404
      %vm408 = vmand %vm375, %vm405
      %vm409 = vmand %vm376, %vm403
      %vm410 = vmand %vm377, %vm404
      %vm411 = vmand %vm378, %vm405
      %vm412 = vmand %vm379, %vm403
      %vm413 = vmand %vm380, %vm404
      %vm414 = vmand %vm381, %vm405
      %vm415 = vmand %vm382, %vm403
      %vm416 = vmand %vm383, %vm404
      %vm417 = vmand %vm384, %vm405
      %vm418 = vmand %vm385, %vm403
      %vm419 = vmand %vm386, %vm404
      %vm420 = vmand %vm387, %vm405
      %vm421 = vmand %vm388, %vm403
      %vm422 = vmand %vm389, %vm404
      %vm423 = vmand %vm390, %vm405
      %vm424 = vmand %vm391, %vm403
      %vm425 = vmand %vm392, %vm404
      %vm426 = vmand %vm393, %vm405
      %vm427 = vmand %vm394, %vm403
      %vm428 = vmand %vm395, %vm404
      %vm429 = vmand %vm396, %vm405
      %vm430 = vmand %vm397, %vm403
      %vm431 = vmand %vm398, %vm404
      %vm432 = vmand %vm399, %vm405
      %vm433 = vmand %vm400, %vm403
      %vm434 = vmand %vm401, %vm404
      %vm435 = vmand %vm402, %vm405
      %v436 = vld [vmem:[%s2] sm:$0xf]
      %v437 = vld [vmem:[%s2 + $0x4] sm:$0xf]
      %v438 = vld [vmem:[%s2 + $0x8] sm:$0xf]
      %v439 = vld [vmem:[%s2 + $0xc] sm:$0x3]
      %v440 = vld [vmem:[%s3] sm:$0x1]
      %v441 = vld [vmem:[%s4] sm:$0xf]
      %v442 = vld [vmem:[%s4 + $0x4] sm:$0xf]
      %v443 = vld [vmem:[%s4 + $0x8] sm:$0xf]
      %v444 = vld [vmem:[%s4 + $0xc] sm:$0xf]
      %v445 = vld [vmem:[%s4 + $0x10] sm:$0xf]
      %v446 = vld [vmem:[%s4 + $0x14] sm:$0xf]
      %v447 = vld [vmem:[%s4 + $0x18] sm:$0xf]
      %v448 = vld [vmem:[%s4 + $0x1c] sm:$0xf]
      %v449 = vld [vmem:[%s4 + $0x20] sm:$0xf]
      %v450 = vld [vmem:[%s4 + $0x24] sm:$0xf]
      %v451 = vld [vmem:[%s4 + $0x28] sm:$0xf]
      %v452 = vld [vmem:[%s4 + $0x2c] sm:$0xf]
      %v453 = vld [vmem:[%s4 + $0x30] sm:$0xf]
      %v454 = vld [vmem:[%s4 + $0x34] sm:$0xf]
      %v455 = vld [vmem:[%s4 + $0x38] sm:$0xf]
      %v456 = vld [vmem:[%s4 + $0x3c] sm:$0xf]
      %v457 = vld [vmem:[%s4 + $0x40] sm:$0xf]
      %v458 = vld [vmem:[%s4 + $0x44] sm:$0xf]
      %v459 = vld [vmem:[%s4 + $0x48] sm:$0xf]
      %v460 = vld [vmem:[%s4 + $0x4c] sm:$0xf]
      %v461 = vld [vmem:[%s4 + $0x50] sm:$0xf]
      %v462 = vld [vmem:[%s4 + $0x54] sm:$0xf]
      %v463 = vld [vmem:[%s4 + $0x58] sm:$0xf]
      %v464 = vld [vmem:[%s4 + $0x5c] sm:$0xf]
      %v465 = vld [vmem:[%s4 + $0x60] sm:$0xf]
      %v466 = vld [vmem:[%s4 + $0x64] sm:$0xf]
      %v467 = vld [vmem:[%s4 + $0x68] sm:$0xf]
      %v468 = vld [vmem:[%s4 + $0x6c] sm:$0xf]
      %v469 = vld [vmem:[%s4 + $0x70] sm:$0xf]
      %v470 = vld [vmem:[%s4 + $0x74] sm:$0xf]
      %v471 = vld [vmem:[%s4 + $0x78] sm:$0xf]
      %v472 = vld [vmem:[%s4 + $0x7c] sm:$0xf]
      %v473 = vld [vmem:[%s4 + $0x80] sm:$0xf]
      %v474 = vld [vmem:[%s4 + $0x84] sm:$0xf]
      %v475 = vld [vmem:[%s4 + $0x88] sm:$0xf]
      %v476 = vld [vmem:[%s4 + $0x8c] sm:$0xf]
      %v477 = vld [vmem:[%s4 + $0x90] sm:$0xf]
      %v478 = vld [vmem:[%s4 + $0x94] sm:$0xf]
      %v479 = vld [vmem:[%s4 + $0x98] sm:$0xf]
      %v480 = vld [vmem:[%s4 + $0x9c] sm:$0xf]
      %v481 = vld [vmem:[%s4 + $0xa0] sm:$0xf]
      %v482 = vld [vmem:[%s4 + $0xa4] sm:$0xf]
      %v483 = vld [vmem:[%s4 + $0xa8] sm:$0xf]
      %v484 = vld [vmem:[%s4 + $0xac] sm:$0xf]
      %v485 = vld [vmem:[%s4 + $0xb0] sm:$0xf]
      %v486 = vld [vmem:[%s4 + $0xb4] sm:$0xf]
      %v487 = vld [vmem:[%s4 + $0xb8] sm:$0xf]
      %v488 = vld [vmem:[%s4 + $0xbc] sm:$0xf]
      %v489 = vld [vmem:[%s4 + $0xc0] sm:$0xf]
      %v490 = vld [vmem:[%s4 + $0xc4] sm:$0xf]
      %v491 = vld [vmem:[%s4 + $0xc8] sm:$0xf]
      %v492 = vld [vmem:[%s4 + $0xcc] sm:$0xf]
      %v493 = vld [vmem:[%s4 + $0xd0] sm:$0xf]
      %v494 = vld [vmem:[%s4 + $0xd4] sm:$0xf]
      %v495 = vld [vmem:[%s4 + $0xd8] sm:$0xf]
      %v496 = vld [vmem:[%s4 + $0xdc] sm:$0xf]
      %v497 = vld [vmem:[%s4 + $0xe0] sm:$0xf]
      %v498 = vld [vmem:[%s4 + $0xe4] sm:$0xf]
      %v499 = vld [vmem:[%s4 + $0xe8] sm:$0xf]
      %v500 = vld [vmem:[%s4 + $0xec] sm:$0xf]
      %v501 = vld [vmem:[%s4 + $0xf0] sm:$0xf]
      %v502 = vld [vmem:[%s4 + $0xf4] sm:$0xf]
      %v503 = vld [vmem:[%s4 + $0xf8] sm:$0xf]
      %v504 = vld [vmem:[%s4 + $0xfc] sm:$0xf]
      %v505 = vld [vmem:[%s4 + $0x100] sm:$0xf]
      %v506 = vld [vmem:[%s4 + $0x104] sm:$0xf]
      %v507 = vld [vmem:[%s4 + $0x108] sm:$0xf]
      %v508 = vld [vmem:[%s4 + $0x10c] sm:$0xf]
      %v509 = vld [vmem:[%s4 + $0x110] sm:$0xf]
      %v510 = vld [vmem:[%s4 + $0x114] sm:$0xf]
      %v511 = vld [vmem:[%s4 + $0x118] sm:$0xf]
      %v512 = vld [vmem:[%s4 + $0x11c] sm:$0xf]
      %v513 = vld [vmem:[%s5] sm:$0x1]
      %v514 = vld [vmem:[%s294] sm:$0xf]
      %v515 = vld [vmem:[%s294 + $0x4] sm:$0xf]
      %v516 = vld [vmem:[%s294 + $0x8] sm:$0x1]
      %v517 = vld [vmem:[%s294 + $0xc] sm:$0xf]
      %v518 = vld [vmem:[%s294 + $0x10] sm:$0xf]
      %v519 = vld [vmem:[%s294 + $0x14] sm:$0x1]
      %v520 = vld [vmem:[%s294 + $0x18] sm:$0xf]
      %v521 = vld [vmem:[%s294 + $0x1c] sm:$0xf]
      %v522 = vld [vmem:[%s294 + $0x20] sm:$0x1]
      %v523 = vld [vmem:[%s294 + $0x24] sm:$0xf]
      %v524 = vld [vmem:[%s294 + $0x28] sm:$0xf]
      %v525 = vld [vmem:[%s294 + $0x2c] sm:$0x1]
      %v526 = vld [vmem:[%s294 + $0x30] sm:$0xf]
      %v527 = vld [vmem:[%s294 + $0x34] sm:$0xf]
      %v528 = vld [vmem:[%s294 + $0x38] sm:$0x1]
      %v529 = vld [vmem:[%s294 + $0x3c] sm:$0xf]
      %v530 = vld [vmem:[%s294 + $0x40] sm:$0xf]
      %v531 = vld [vmem:[%s294 + $0x44] sm:$0x1]
      %v532 = vld [vmem:[%s294 + $0x48] sm:$0xf]
      %v533 = vld [vmem:[%s294 + $0x4c] sm:$0xf]
      %v534 = vld [vmem:[%s294 + $0x50] sm:$0x1]
      %v535 = vld [vmem:[%s294 + $0x54] sm:$0xf]
      %v536 = vld [vmem:[%s294 + $0x58] sm:$0xf]
      %v537 = vld [vmem:[%s294 + $0x5c] sm:$0x1]
      %v538 = vld [vmem:[%s294 + $0x60] sm:$0xf]
      %v539 = vld [vmem:[%s294 + $0x64] sm:$0xf]
      %v540 = vld [vmem:[%s294 + $0x68] sm:$0x1]
      %v541 = vld [vmem:[%s294 + $0x6c] sm:$0xf]
      %v542 = vld [vmem:[%s294 + $0x70] sm:$0xf]
      %v543 = vld [vmem:[%s294 + $0x74] sm:$0x1]
      %v575 = vunpack.c.l.s4 1966171168
      %v576 = vunpack.c.0.s8 %v575
      %v577 = vlaneseq
      %v578 = vshrl.u32 %v577, 7
      %v579 = vsub.s32 %v576, %v578
      %v580 = vrot.slane %v514, %v579
      %v581 = vcombine.high %v580, %v580
      %v583 = vunpack.c.l.s4 1966171168
      %v584 = vunpack.c.0.s8 %v583
      %v585 = vlaneseq
      %v586 = vshrl.u32 %v585, 7
      %v587 = vsub.s32 %v584, %v586
      %v588 = vrot.slane %v580, %v587
      %v590 = vunpack.c.l.s4 1966171168
      %v591 = vunpack.c.0.s8 %v590
      %v592 = vlaneseq
      %v593 = vshrl.u32 %v592, 7
      %v594 = vsub.s32 %v591, %v593
      %v595 = vrot.slane %v581, %v594
      %v596 = vcombine.high %v588, %v588
      %v597 = vcombine.high %v595, %v595
      %v599 = vunpack.c.l.s4 1966171168
      %v600 = vunpack.c.0.s8 %v599
      %v601 = vlaneseq
      %v602 = vshrl.u32 %v601, 7
      %v603 = vsub.s32 %v600, %v602
      %v604 = vrot.slane %v515, %v603
      %v605 = vcombine.high %v604, %v604
      %v607 = vunpack.c.l.s4 1966171168
      %v608 = vunpack.c.0.s8 %v607
      %v609 = vlaneseq
      %v610 = vshrl.u32 %v609, 7
      %v611 = vsub.s32 %v608, %v610
      %v612 = vrot.slane %v604, %v611
      %v614 = vunpack.c.l.s4 1966171168
      %v615 = vunpack.c.0.s8 %v614
      %v616 = vlaneseq
      %v617 = vshrl.u32 %v616, 7
      %v618 = vsub.s32 %v615, %v617
      %v619 = vrot.slane %v605, %v618
      %v620 = vcombine.high %v612, %v612
      %v621 = vcombine.high %v619, %v619
      %v623 = vunpack.c.l.s4 1966171168
      %v624 = vunpack.c.0.s8 %v623
      %v625 = vlaneseq
      %v626 = vshrl.u32 %v625, 7
      %v627 = vsub.s32 %v624, %v626
      %v628 = vrot.slane %v516, %v627
      %v630 = vunpack.c.l.s4 1966171168
      %v631 = vunpack.c.0.s8 %v630
      %v632 = vlaneseq
      %v633 = vshrl.u32 %v632, 7
      %v634 = vsub.s32 %v631, %v633
      %v635 = vrot.slane %v628, %v634
      %v637 = vunpack.c.l.s4 1966171168
      %v638 = vunpack.c.0.s8 %v637
      %v639 = vlaneseq
      %v640 = vshrl.u32 %v639, 7
      %v641 = vsub.s32 %v638, %v640
      %v642 = vrot.slane %v517, %v641
      %v643 = vcombine.high %v642, %v642
      %v645 = vunpack.c.l.s4 1966171168
      %v646 = vunpack.c.0.s8 %v645
      %v647 = vlaneseq
      %v648 = vshrl.u32 %v647, 7
      %v649 = vsub.s32 %v646, %v648
      %v650 = vrot.slane %v642, %v649
      %v652 = vunpack.c.l.s4 1966171168
      %v653 = vunpack.c.0.s8 %v652
      %v654 = vlaneseq
      %v655 = vshrl.u32 %v654, 7
      %v656 = vsub.s32 %v653, %v655
      %v657 = vrot.slane %v643, %v656
      %v658 = vcombine.high %v650, %v650
      %v659 = vcombine.high %v657, %v657
      %v661 = vunpack.c.l.s4 1966171168
      %v662 = vunpack.c.0.s8 %v661
      %v663 = vlaneseq
      %v664 = vshrl.u32 %v663, 7
      %v665 = vsub.s32 %v662, %v664
      %v666 = vrot.slane %v518, %v665
      %v667 = vcombine.high %v666, %v666
      %v669 = vunpack.c.l.s4 1966171168
      %v670 = vunpack.c.0.s8 %v669
      %v671 = vlaneseq
      %v672 = vshrl.u32 %v671, 7
      %v673 = vsub.s32 %v670, %v672
      %v674 = vrot.slane %v666, %v673
      %v676 = vunpack.c.l.s4 1966171168
      %v677 = vunpack.c.0.s8 %v676
      %v678 = vlaneseq
      %v679 = vshrl.u32 %v678, 7
      %v680 = vsub.s32 %v677, %v679
      %v681 = vrot.slane %v667, %v680
      %v682 = vcombine.high %v674, %v674
      %v683 = vcombine.high %v681, %v681
      %v685 = vunpack.c.l.s4 1966171168
      %v686 = vunpack.c.0.s8 %v685
      %v687 = vlaneseq
      %v688 = vshrl.u32 %v687, 7
      %v689 = vsub.s32 %v686, %v688
      %v690 = vrot.slane %v519, %v689
      %v692 = vunpack.c.l.s4 1966171168
      %v693 = vunpack.c.0.s8 %v692
      %v694 = vlaneseq
      %v695 = vshrl.u32 %v694, 7
      %v696 = vsub.s32 %v693, %v695
      %v697 = vrot.slane %v690, %v696
      %v699 = vunpack.c.l.s4 1966171168
      %v700 = vunpack.c.0.s8 %v699
      %v701 = vlaneseq
      %v702 = vshrl.u32 %v701, 7
      %v703 = vsub.s32 %v700, %v702
      %v704 = vrot.slane %v520, %v703
      %v705 = vcombine.high %v704, %v704
      %v707 = vunpack.c.l.s4 1966171168
      %v708 = vunpack.c.0.s8 %v707
      %v709 = vlaneseq
      %v710 = vshrl.u32 %v709, 7
      %v711 = vsub.s32 %v708, %v710
      %v712 = vrot.slane %v704, %v711
      %v714 = vunpack.c.l.s4 1966171168
      %v715 = vunpack.c.0.s8 %v714
      %v716 = vlaneseq
      %v717 = vshrl.u32 %v716, 7
      %v718 = vsub.s32 %v715, %v717
      %v719 = vrot.slane %v705, %v718
      %v720 = vcombine.high %v712, %v712
      %v721 = vcombine.high %v719, %v719
      %v723 = vunpack.c.l.s4 1966171168
      %v724 = vunpack.c.0.s8 %v723
      %v725 = vlaneseq
      %v726 = vshrl.u32 %v725, 7
      %v727 = vsub.s32 %v724, %v726
      %v728 = vrot.slane %v521, %v727
      %v729 = vcombine.high %v728, %v728
      %v731 = vunpack.c.l.s4 1966171168
      %v732 = vunpack.c.0.s8 %v731
      %v733 = vlaneseq
      %v734 = vshrl.u32 %v733, 7
      %v735 = vsub.s32 %v732, %v734
      %v736 = vrot.slane %v728, %v735
      %v738 = vunpack.c.l.s4 1966171168
      %v739 = vunpack.c.0.s8 %v738
      %v740 = vlaneseq
      %v741 = vshrl.u32 %v740, 7
      %v742 = vsub.s32 %v739, %v741
      %v743 = vrot.slane %v729, %v742
      %v744 = vcombine.high %v736, %v736
      %v745 = vcombine.high %v743, %v743
      %v747 = vunpack.c.l.s4 1966171168
      %v748 = vunpack.c.0.s8 %v747
      %v749 = vlaneseq
      %v750 = vshrl.u32 %v749, 7
      %v751 = vsub.s32 %v748, %v750
      %v752 = vrot.slane %v522, %v751
      %v754 = vunpack.c.l.s4 1966171168
      %v755 = vunpack.c.0.s8 %v754
      %v756 = vlaneseq
      %v757 = vshrl.u32 %v756, 7
      %v758 = vsub.s32 %v755, %v757
      %v759 = vrot.slane %v752, %v758
      %v761 = vunpack.c.l.s4 1966171168
      %v762 = vunpack.c.0.s8 %v761
      %v763 = vlaneseq
      %v764 = vshrl.u32 %v763, 7
      %v765 = vsub.s32 %v762, %v764
      %v766 = vrot.slane %v523, %v765
      %v767 = vcombine.high %v766, %v766
      %v769 = vunpack.c.l.s4 1966171168
      %v770 = vunpack.c.0.s8 %v769
      %v771 = vlaneseq
      %v772 = vshrl.u32 %v771, 7
      %v773 = vsub.s32 %v770, %v772
      %v774 = vrot.slane %v766, %v773
      %v776 = vunpack.c.l.s4 1966171168
      %v777 = vunpack.c.0.s8 %v776
      %v778 = vlaneseq
      %v779 = vshrl.u32 %v778, 7
      %v780 = vsub.s32 %v777, %v779
      %v781 = vrot.slane %v767, %v780
      %v782 = vcombine.high %v774, %v774
      %v783 = vcombine.high %v781, %v781
      %v785 = vunpack.c.l.s4 1966171168
      %v786 = vunpack.c.0.s8 %v785
      %v787 = vlaneseq
      %v788 = vshrl.u32 %v787, 7
      %v789 = vsub.s32 %v786, %v788
      %v790 = vrot.slane %v524, %v789
      %v791 = vcombine.high %v790, %v790
      %v793 = vunpack.c.l.s4 1966171168
      %v794 = vunpack.c.0.s8 %v793
      %v795 = vlaneseq
      %v796 = vshrl.u32 %v795, 7
      %v797 = vsub.s32 %v794, %v796
      %v798 = vrot.slane %v790, %v797
      %v800 = vunpack.c.l.s4 1966171168
      %v801 = vunpack.c.0.s8 %v800
      %v802 = vlaneseq
      %v803 = vshrl.u32 %v802, 7
      %v804 = vsub.s32 %v801, %v803
      %v805 = vrot.slane %v791, %v804
      %v806 = vcombine.high %v798, %v798
      %v807 = vcombine.high %v805, %v805
      %v809 = vunpack.c.l.s4 1966171168
      %v810 = vunpack.c.0.s8 %v809
      %v811 = vlaneseq
      %v812 = vshrl.u32 %v811, 7
      %v813 = vsub.s32 %v810, %v812
      %v814 = vrot.slane %v525, %v813
      %v816 = vunpack.c.l.s4 1966171168
      %v817 = vunpack.c.0.s8 %v816
      %v818 = vlaneseq
      %v819 = vshrl.u32 %v818, 7
      %v820 = vsub.s32 %v817, %v819
      %v821 = vrot.slane %v814, %v820
      %v823 = vunpack.c.l.s4 1966171168
      %v824 = vunpack.c.0.s8 %v823
      %v825 = vlaneseq
      %v826 = vshrl.u32 %v825, 7
      %v827 = vsub.s32 %v824, %v826
      %v828 = vrot.slane %v526, %v827
      %v829 = vcombine.high %v828, %v828
      %v831 = vunpack.c.l.s4 1966171168
      %v832 = vunpack.c.0.s8 %v831
      %v833 = vlaneseq
      %v834 = vshrl.u32 %v833, 7
      %v835 = vsub.s32 %v832, %v834
      %v836 = vrot.slane %v828, %v835
      %v838 = vunpack.c.l.s4 1966171168
      %v839 = vunpack.c.0.s8 %v838
      %v840 = vlaneseq
      %v841 = vshrl.u32 %v840, 7
      %v842 = vsub.s32 %v839, %v841
      %v843 = vrot.slane %v829, %v842
      %v844 = vcombine.high %v836, %v836
      %v845 = vcombine.high %v843, %v843
      %v847 = vunpack.c.l.s4 1966171168
      %v848 = vunpack.c.0.s8 %v847
      %v849 = vlaneseq
      %v850 = vshrl.u32 %v849, 7
      %v851 = vsub.s32 %v848, %v850
      %v852 = vrot.slane %v527, %v851
      %v853 = vcombine.high %v852, %v852
      %v855 = vunpack.c.l.s4 1966171168
      %v856 = vunpack.c.0.s8 %v855
      %v857 = vlaneseq
      %v858 = vshrl.u32 %v857, 7
      %v859 = vsub.s32 %v856, %v858
      %v860 = vrot.slane %v852, %v859
      %v862 = vunpack.c.l.s4 1966171168
      %v863 = vunpack.c.0.s8 %v862
      %v864 = vlaneseq
      %v865 = vshrl.u32 %v864, 7
      %v866 = vsub.s32 %v863, %v865
      %v867 = vrot.slane %v853, %v866
      %v868 = vcombine.high %v860, %v860
      %v869 = vcombine.high %v867, %v867
      %v871 = vunpack.c.l.s4 1966171168
      %v872 = vunpack.c.0.s8 %v871
      %v873 = vlaneseq
      %v874 = vshrl.u32 %v873, 7
      %v875 = vsub.s32 %v872, %v874
      %v876 = vrot.slane %v528, %v875
      %v878 = vunpack.c.l.s4 1966171168
      %v879 = vunpack.c.0.s8 %v878
      %v880 = vlaneseq
      %v881 = vshrl.u32 %v880, 7
      %v882 = vsub.s32 %v879, %v881
      %v883 = vrot.slane %v876, %v882
      %v885 = vunpack.c.l.s4 1966171168
      %v886 = vunpack.c.0.s8 %v885
      %v887 = vlaneseq
      %v888 = vshrl.u32 %v887, 7
      %v889 = vsub.s32 %v886, %v888
      %v890 = vrot.slane %v529, %v889
      %v891 = vcombine.high %v890, %v890
      %v893 = vunpack.c.l.s4 1966171168
      %v894 = vunpack.c.0.s8 %v893
      %v895 = vlaneseq
      %v896 = vshrl.u32 %v895, 7
      %v897 = vsub.s32 %v894, %v896
      %v898 = vrot.slane %v890, %v897
      %v900 = vunpack.c.l.s4 1966171168
      %v901 = vunpack.c.0.s8 %v900
      %v902 = vlaneseq
      %v903 = vshrl.u32 %v902, 7
      %v904 = vsub.s32 %v901, %v903
      %v905 = vrot.slane %v891, %v904
      %v906 = vcombine.high %v898, %v898
      %v907 = vcombine.high %v905, %v905
      %v909 = vunpack.c.l.s4 1966171168
      %v910 = vunpack.c.0.s8 %v909
      %v911 = vlaneseq
      %v912 = vshrl.u32 %v911, 7
      %v913 = vsub.s32 %v910, %v912
      %v914 = vrot.slane %v530, %v913
      %v915 = vcombine.high %v914, %v914
      %v917 = vunpack.c.l.s4 1966171168
      %v918 = vunpack.c.0.s8 %v917
      %v919 = vlaneseq
      %v920 = vshrl.u32 %v919, 7
      %v921 = vsub.s32 %v918, %v920
      %v922 = vrot.slane %v914, %v921
      %v924 = vunpack.c.l.s4 1966171168
      %v925 = vunpack.c.0.s8 %v924
      %v926 = vlaneseq
      %v927 = vshrl.u32 %v926, 7
      %v928 = vsub.s32 %v925, %v927
      %v929 = vrot.slane %v915, %v928
      %v930 = vcombine.high %v922, %v922
      %v931 = vcombine.high %v929, %v929
      %v933 = vunpack.c.l.s4 1966171168
      %v934 = vunpack.c.0.s8 %v933
      %v935 = vlaneseq
      %v936 = vshrl.u32 %v935, 7
      %v937 = vsub.s32 %v934, %v936
      %v938 = vrot.slane %v531, %v937
      %v940 = vunpack.c.l.s4 1966171168
      %v941 = vunpack.c.0.s8 %v940
      %v942 = vlaneseq
      %v943 = vshrl.u32 %v942, 7
      %v944 = vsub.s32 %v941, %v943
      %v945 = vrot.slane %v938, %v944
      %v947 = vunpack.c.l.s4 1966171168
      %v948 = vunpack.c.0.s8 %v947
      %v949 = vlaneseq
      %v950 = vshrl.u32 %v949, 7
      %v951 = vsub.s32 %v948, %v950
      %v952 = vrot.slane %v532, %v951
      %v953 = vcombine.high %v952, %v952
      %v955 = vunpack.c.l.s4 1966171168
      %v956 = vunpack.c.0.s8 %v955
      %v957 = vlaneseq
      %v958 = vshrl.u32 %v957, 7
      %v959 = vsub.s32 %v956, %v958
      %v960 = vrot.slane %v952, %v959
      %v962 = vunpack.c.l.s4 1966171168
      %v963 = vunpack.c.0.s8 %v962
      %v964 = vlaneseq
      %v965 = vshrl.u32 %v964, 7
      %v966 = vsub.s32 %v963, %v965
      %v967 = vrot.slane %v953, %v966
      %v968 = vcombine.high %v960, %v960
      %v969 = vcombine.high %v967, %v967
      %v971 = vunpack.c.l.s4 1966171168
      %v972 = vunpack.c.0.s8 %v971
      %v973 = vlaneseq
      %v974 = vshrl.u32 %v973, 7
      %v975 = vsub.s32 %v972, %v974
      %v976 = vrot.slane %v533, %v975
      %v977 = vcombine.high %v976, %v976
      %v979 = vunpack.c.l.s4 1966171168
      %v980 = vunpack.c.0.s8 %v979
      %v981 = vlaneseq
      %v982 = vshrl.u32 %v981, 7
      %v983 = vsub.s32 %v980, %v982
      %v984 = vrot.slane %v976, %v983
      %v986 = vunpack.c.l.s4 1966171168
      %v987 = vunpack.c.0.s8 %v986
      %v988 = vlaneseq
      %v989 = vshrl.u32 %v988, 7
      %v990 = vsub.s32 %v987, %v989
      %v991 = vrot.slane %v977, %v990
      %v992 = vcombine.high %v984, %v984
      %v993 = vcombine.high %v991, %v991
      %v995 = vunpack.c.l.s4 1966171168
      %v996 = vunpack.c.0.s8 %v995
      %v997 = vlaneseq
      %v998 = vshrl.u32 %v997, 7
      %v999 = vsub.s32 %v996, %v998
      %v1000 = vrot.slane %v534, %v999
      %v1002 = vunpack.c.l.s4 1966171168
      %v1003 = vunpack.c.0.s8 %v1002
      %v1004 = vlaneseq
      %v1005 = vshrl.u32 %v1004, 7
      %v1006 = vsub.s32 %v1003, %v1005
      %v1007 = vrot.slane %v1000, %v1006
      %v1009 = vunpack.c.l.s4 1966171168
      %v1010 = vunpack.c.0.s8 %v1009
      %v1011 = vlaneseq
      %v1012 = vshrl.u32 %v1011, 7
      %v1013 = vsub.s32 %v1010, %v1012
      %v1014 = vrot.slane %v535, %v1013
      %v1015 = vcombine.high %v1014, %v1014
      %v1017 = vunpack.c.l.s4 1966171168
      %v1018 = vunpack.c.0.s8 %v1017
      %v1019 = vlaneseq
      %v1020 = vshrl.u32 %v1019, 7
      %v1021 = vsub.s32 %v1018, %v1020
      %v1022 = vrot.slane %v1014, %v1021
      %v1024 = vunpack.c.l.s4 1966171168
      %v1025 = vunpack.c.0.s8 %v1024
      %v1026 = vlaneseq
      %v1027 = vshrl.u32 %v1026, 7
      %v1028 = vsub.s32 %v1025, %v1027
      %v1029 = vrot.slane %v1015, %v1028
      %v1030 = vcombine.high %v1022, %v1022
      %v1031 = vcombine.high %v1029, %v1029
      %v1033 = vunpack.c.l.s4 1966171168
      %v1034 = vunpack.c.0.s8 %v1033
      %v1035 = vlaneseq
      %v1036 = vshrl.u32 %v1035, 7
      %v1037 = vsub.s32 %v1034, %v1036
      %v1038 = vrot.slane %v536, %v1037
      %v1039 = vcombine.high %v1038, %v1038
      %v1041 = vunpack.c.l.s4 1966171168
      %v1042 = vunpack.c.0.s8 %v1041
      %v1043 = vlaneseq
      %v1044 = vshrl.u32 %v1043, 7
      %v1045 = vsub.s32 %v1042, %v1044
      %v1046 = vrot.slane %v1038, %v1045
      %v1048 = vunpack.c.l.s4 1966171168
      %v1049 = vunpack.c.0.s8 %v1048
      %v1050 = vlaneseq
      %v1051 = vshrl.u32 %v1050, 7
      %v1052 = vsub.s32 %v1049, %v1051
      %v1053 = vrot.slane %v1039, %v1052
      %v1054 = vcombine.high %v1046, %v1046
      %v1055 = vcombine.high %v1053, %v1053
      %v1057 = vunpack.c.l.s4 1966171168
      %v1058 = vunpack.c.0.s8 %v1057
      %v1059 = vlaneseq
      %v1060 = vshrl.u32 %v1059, 7
      %v1061 = vsub.s32 %v1058, %v1060
      %v1062 = vrot.slane %v537, %v1061
      %v1064 = vunpack.c.l.s4 1966171168
      %v1065 = vunpack.c.0.s8 %v1064
      %v1066 = vlaneseq
      %v1067 = vshrl.u32 %v1066, 7
      %v1068 = vsub.s32 %v1065, %v1067
      %v1069 = vrot.slane %v1062, %v1068
      %v1071 = vunpack.c.l.s4 1966171168
      %v1072 = vunpack.c.0.s8 %v1071
      %v1073 = vlaneseq
      %v1074 = vshrl.u32 %v1073, 7
      %v1075 = vsub.s32 %v1072, %v1074
      %v1076 = vrot.slane %v538, %v1075
      %v1077 = vcombine.high %v1076, %v1076
      %v1079 = vunpack.c.l.s4 1966171168
      %v1080 = vunpack.c.0.s8 %v1079
      %v1081 = vlaneseq
      %v1082 = vshrl.u32 %v1081, 7
      %v1083 = vsub.s32 %v1080, %v1082
      %v1084 = vrot.slane %v1076, %v1083
      %v1086 = vunpack.c.l.s4 1966171168
      %v1087 = vunpack.c.0.s8 %v1086
      %v1088 = vlaneseq
      %v1089 = vshrl.u32 %v1088, 7
      %v1090 = vsub.s32 %v1087, %v1089
      %v1091 = vrot.slane %v1077, %v1090
      %v1092 = vcombine.high %v1084, %v1084
      %v1093 = vcombine.high %v1091, %v1091
      %v1095 = vunpack.c.l.s4 1966171168
      %v1096 = vunpack.c.0.s8 %v1095
      %v1097 = vlaneseq
      %v1098 = vshrl.u32 %v1097, 7
      %v1099 = vsub.s32 %v1096, %v1098
      %v1100 = vrot.slane %v539, %v1099
      %v1101 = vcombine.high %v1100, %v1100
      %v1103 = vunpack.c.l.s4 1966171168
      %v1104 = vunpack.c.0.s8 %v1103
      %v1105 = vlaneseq
      %v1106 = vshrl.u32 %v1105, 7
      %v1107 = vsub.s32 %v1104, %v1106
      %v1108 = vrot.slane %v1100, %v1107
      %v1110 = vunpack.c.l.s4 1966171168
      %v1111 = vunpack.c.0.s8 %v1110
      %v1112 = vlaneseq
      %v1113 = vshrl.u32 %v1112, 7
      %v1114 = vsub.s32 %v1111, %v1113
      %v1115 = vrot.slane %v1101, %v1114
      %v1116 = vcombine.high %v1108, %v1108
      %v1117 = vcombine.high %v1115, %v1115
      %v1119 = vunpack.c.l.s4 1966171168
      %v1120 = vunpack.c.0.s8 %v1119
      %v1121 = vlaneseq
      %v1122 = vshrl.u32 %v1121, 7
      %v1123 = vsub.s32 %v1120, %v1122
      %v1124 = vrot.slane %v540, %v1123
      %v1126 = vunpack.c.l.s4 1966171168
      %v1127 = vunpack.c.0.s8 %v1126
      %v1128 = vlaneseq
      %v1129 = vshrl.u32 %v1128, 7
      %v1130 = vsub.s32 %v1127, %v1129
      %v1131 = vrot.slane %v1124, %v1130
      %v1133 = vunpack.c.l.s4 1966171168
      %v1134 = vunpack.c.0.s8 %v1133
      %v1135 = vlaneseq
      %v1136 = vshrl.u32 %v1135, 7
      %v1137 = vsub.s32 %v1134, %v1136
      %v1138 = vrot.slane %v541, %v1137
      %v1139 = vcombine.high %v1138, %v1138
      %v1141 = vunpack.c.l.s4 1966171168
      %v1142 = vunpack.c.0.s8 %v1141
      %v1143 = vlaneseq
      %v1144 = vshrl.u32 %v1143, 7
      %v1145 = vsub.s32 %v1142, %v1144
      %v1146 = vrot.slane %v1138, %v1145
      %v1148 = vunpack.c.l.s4 1966171168
      %v1149 = vunpack.c.0.s8 %v1148
      %v1150 = vlaneseq
      %v1151 = vshrl.u32 %v1150, 7
      %v1152 = vsub.s32 %v1149, %v1151
      %v1153 = vrot.slane %v1139, %v1152
      %v1154 = vcombine.high %v1146, %v1146
      %v1155 = vcombine.high %v1153, %v1153
      %v1157 = vunpack.c.l.s4 1966171168
      %v1158 = vunpack.c.0.s8 %v1157
      %v1159 = vlaneseq
      %v1160 = vshrl.u32 %v1159, 7
      %v1161 = vsub.s32 %v1158, %v1160
      %v1162 = vrot.slane %v542, %v1161
      %v1163 = vcombine.high %v1162, %v1162
      %v1165 = vunpack.c.l.s4 1966171168
      %v1166 = vunpack.c.0.s8 %v1165
      %v1167 = vlaneseq
      %v1168 = vshrl.u32 %v1167, 7
      %v1169 = vsub.s32 %v1166, %v1168
      %v1170 = vrot.slane %v1162, %v1169
      %v1172 = vunpack.c.l.s4 1966171168
      %v1173 = vunpack.c.0.s8 %v1172
      %v1174 = vlaneseq
      %v1175 = vshrl.u32 %v1174, 7
      %v1176 = vsub.s32 %v1173, %v1175
      %v1177 = vrot.slane %v1163, %v1176
      %v1178 = vcombine.high %v1170, %v1170
      %v1179 = vcombine.high %v1177, %v1177
      %v1181 = vunpack.c.l.s4 1966171168
      %v1182 = vunpack.c.0.s8 %v1181
      %v1183 = vlaneseq
      %v1184 = vshrl.u32 %v1183, 7
      %v1185 = vsub.s32 %v1182, %v1184
      %v1186 = vrot.slane %v543, %v1185
      %v1188 = vunpack.c.l.s4 1966171168
      %v1189 = vunpack.c.0.s8 %v1188
      %v1190 = vlaneseq
      %v1191 = vshrl.u32 %v1190, 7
      %v1192 = vsub.s32 %v1189, %v1191
      %v1193 = vrot.slane %v1186, %v1192
      %v1195 = vlaneseq
      %v1196 = vshrl.u32 %v1195, 7
      %v1197 = vsub.s32 0, %v1196
      %v1198 = vrot.slane %v440, %v1197
      %v1200 = vcombine.low %v588, %v595
      %v1201 = vcombine.low %v596, %v597
      %v1202 = vcombine.low %v612, %v619
      %v1203 = vcombine.low %v620, %v621
      %v1205 = vunpack.c.l.s4 1966171168
      %v1206 = vunpack.c.0.s8 %v1205
      %v1207 = vlaneseq
      %v1208 = vshrl.u32 %v1207, 7
      %v1209 = vsub.s32 %v1206, %v1208
      %v1210 = vrot.slane %v1200, %v1209
      %v1212 = vunpack.c.l.s4 1966171168
      %v1213 = vunpack.c.0.s8 %v1212
      %v1214 = vlaneseq
      %v1215 = vshrl.u32 %v1214, 7
      %v1216 = vsub.s32 %v1213, %v1215
      %v1217 = vrot.slane %v1201, %v1216
      %v1219 = vunpack.c.l.s4 1966171168
      %v1220 = vunpack.c.0.s8 %v1219
      %v1221 = vlaneseq
      %v1222 = vshrl.u32 %v1221, 7
      %v1223 = vsub.s32 %v1220, %v1222
      %v1224 = vrot.slane %v1202, %v1223
      %v1226 = vunpack.c.l.s4 1966171168
      %v1227 = vunpack.c.0.s8 %v1226
      %v1228 = vlaneseq
      %v1229 = vshrl.u32 %v1228, 7
      %v1230 = vsub.s32 %v1227, %v1229
      %v1231 = vrot.slane %v1203, %v1230
      %v1232 = vcombine.low %v1210, %v1217
      %v1233 = vcombine.low %v1224, %v1231
      %v1235 = vunpack.c.l.s4 1966171168
      %v1236 = vunpack.c.0.s8 %v1235
      %v1237 = vlaneseq
      %v1238 = vshrl.u32 %v1237, 7
      %v1239 = vsub.s32 %v1236, %v1238
      %v1240 = vrot.slane %v1232, %v1239
      %v1242 = vunpack.c.l.s4 1966171168
      %v1243 = vunpack.c.0.s8 %v1242
      %v1244 = vlaneseq
      %v1245 = vshrl.u32 %v1244, 7
      %v1246 = vsub.s32 %v1243, %v1245
      %v1247 = vrot.slane %v1233, %v1246
      %v1248 = vcombine.low %v1240, %v1247
      %v1249 = vcombine.low %v635, %v650
      %v1250 = vcombine.low %v657, %v658
      %v1251 = vcombine.low %v659, %v674
      %v1252 = vcombine.low %v681, %v682
      %v1254 = vunpack.c.l.s4 1966171168
      %v1255 = vunpack.c.0.s8 %v1254
      %v1256 = vlaneseq
      %v1257 = vshrl.u32 %v1256, 7
      %v1258 = vsub.s32 %v1255, %v1257
      %v1259 = vrot.slane %v1249, %v1258
      %v1261 = vunpack.c.l.s4 1966171168
      %v1262 = vunpack.c.0.s8 %v1261
      %v1263 = vlaneseq
      %v1264 = vshrl.u32 %v1263, 7
      %v1265 = vsub.s32 %v1262, %v1264
      %v1266 = vrot.slane %v1250, %v1265
      %v1268 = vunpack.c.l.s4 1966171168
      %v1269 = vunpack.c.0.s8 %v1268
      %v1270 = vlaneseq
      %v1271 = vshrl.u32 %v1270, 7
      %v1272 = vsub.s32 %v1269, %v1271
      %v1273 = vrot.slane %v1251, %v1272
      %v1275 = vunpack.c.l.s4 1966171168
      %v1276 = vunpack.c.0.s8 %v1275
      %v1277 = vlaneseq
      %v1278 = vshrl.u32 %v1277, 7
      %v1279 = vsub.s32 %v1276, %v1278
      %v1280 = vrot.slane %v1252, %v1279
      %v1281 = vcombine.low %v1259, %v1266
      %v1282 = vcombine.low %v1273, %v1280
      %v1284 = vunpack.c.l.s4 1966171168
      %v1285 = vunpack.c.0.s8 %v1284
      %v1286 = vlaneseq
      %v1287 = vshrl.u32 %v1286, 7
      %v1288 = vsub.s32 %v1285, %v1287
      %v1289 = vrot.slane %v1281, %v1288
      %v1291 = vunpack.c.l.s4 1966171168
      %v1292 = vunpack.c.0.s8 %v1291
      %v1293 = vlaneseq
      %v1294 = vshrl.u32 %v1293, 7
      %v1295 = vsub.s32 %v1292, %v1294
      %v1296 = vrot.slane %v1282, %v1295
      %v1297 = vcombine.low %v1289, %v1296
      %v1298 = vcombine.low %v683, %v697
      %v1299 = vcombine.low %v712, %v719
      %v1300 = vcombine.low %v720, %v721
      %v1301 = vcombine.low %v736, %v743
      %v1303 = vunpack.c.l.s4 1966171168
      %v1304 = vunpack.c.0.s8 %v1303
      %v1305 = vlaneseq
      %v1306 = vshrl.u32 %v1305, 7
      %v1307 = vsub.s32 %v1304, %v1306
      %v1308 = vrot.slane %v1298, %v1307
      %v1310 = vunpack.c.l.s4 1966171168
      %v1311 = vunpack.c.0.s8 %v1310
      %v1312 = vlaneseq
      %v1313 = vshrl.u32 %v1312, 7
      %v1314 = vsub.s32 %v1311, %v1313
      %v1315 = vrot.slane %v1299, %v1314
      %v1317 = vunpack.c.l.s4 1966171168
      %v1318 = vunpack.c.0.s8 %v1317
      %v1319 = vlaneseq
      %v1320 = vshrl.u32 %v1319, 7
      %v1321 = vsub.s32 %v1318, %v1320
      %v1322 = vrot.slane %v1300, %v1321
      %v1324 = vunpack.c.l.s4 1966171168
      %v1325 = vunpack.c.0.s8 %v1324
      %v1326 = vlaneseq
      %v1327 = vshrl.u32 %v1326, 7
      %v1328 = vsub.s32 %v1325, %v1327
      %v1329 = vrot.slane %v1301, %v1328
      %v1330 = vcombine.low %v1308, %v1315
      %v1331 = vcombine.low %v1322, %v1329
      %v1333 = vunpack.c.l.s4 1966171168
      %v1334 = vunpack.c.0.s8 %v1333
      %v1335 = vlaneseq
      %v1336 = vshrl.u32 %v1335, 7
      %v1337 = vsub.s32 %v1334, %v1336
      %v1338 = vrot.slane %v1330, %v1337
      %v1340 = vunpack.c.l.s4 1966171168
      %v1341 = vunpack.c.0.s8 %v1340
      %v1342 = vlaneseq
      %v1343 = vshrl.u32 %v1342, 7
      %v1344 = vsub.s32 %v1341, %v1343
      %v1345 = vrot.slane %v1331, %v1344
      %v1346 = vcombine.low %v1338, %v1345
      %v1347 = vcombine.low %v744, %v745
      %v1348 = vcombine.low %v759, %v774
      %v1349 = vcombine.low %v781, %v782
      %v1350 = vcombine.low %v783, %v798
      %v1352 = vunpack.c.l.s4 1966171168
      %v1353 = vunpack.c.0.s8 %v1352
      %v1354 = vlaneseq
      %v1355 = vshrl.u32 %v1354, 7
      %v1356 = vsub.s32 %v1353, %v1355
      %v1357 = vrot.slane %v1347, %v1356
      %v1359 = vunpack.c.l.s4 1966171168
      %v1360 = vunpack.c.0.s8 %v1359
      %v1361 = vlaneseq
      %v1362 = vshrl.u32 %v1361, 7
      %v1363 = vsub.s32 %v1360, %v1362
      %v1364 = vrot.slane %v1348, %v1363
      %v1366 = vunpack.c.l.s4 1966171168
      %v1367 = vunpack.c.0.s8 %v1366
      %v1368 = vlaneseq
      %v1369 = vshrl.u32 %v1368, 7
      %v1370 = vsub.s32 %v1367, %v1369
      %v1371 = vrot.slane %v1349, %v1370
      %v1373 = vunpack.c.l.s4 1966171168
      %v1374 = vunpack.c.0.s8 %v1373
      %v1375 = vlaneseq
      %v1376 = vshrl.u32 %v1375, 7
      %v1377 = vsub.s32 %v1374, %v1376
      %v1378 = vrot.slane %v1350, %v1377
      %v1379 = vcombine.low %v1357, %v1364
      %v1380 = vcombine.low %v1371, %v1378
      %v1382 = vunpack.c.l.s4 1966171168
      %v1383 = vunpack.c.0.s8 %v1382
      %v1384 = vlaneseq
      %v1385 = vshrl.u32 %v1384, 7
      %v1386 = vsub.s32 %v1383, %v1385
      %v1387 = vrot.slane %v1379, %v1386
      %v1389 = vunpack.c.l.s4 1966171168
      %v1390 = vunpack.c.0.s8 %v1389
      %v1391 = vlaneseq
      %v1392 = vshrl.u32 %v1391, 7
      %v1393 = vsub.s32 %v1390, %v1392
      %v1394 = vrot.slane %v1380, %v1393
      %v1395 = vcombine.low %v1387, %v1394
      %v1396 = vcombine.low %v805, %v806
      %v1397 = vcombine.low %v807, %v821
      %v1398 = vcombine.low %v836, %v843
      %v1399 = vcombine.low %v844, %v845
      %v1401 = vunpack.c.l.s4 1966171168
      %v1402 = vunpack.c.0.s8 %v1401
      %v1403 = vlaneseq
      %v1404 = vshrl.u32 %v1403, 7
      %v1405 = vsub.s32 %v1402, %v1404
      %v1406 = vrot.slane %v1396, %v1405
      %v1408 = vunpack.c.l.s4 1966171168
      %v1409 = vunpack.c.0.s8 %v1408
      %v1410 = vlaneseq
      %v1411 = vshrl.u32 %v1410, 7
      %v1412 = vsub.s32 %v1409, %v1411
      %v1413 = vrot.slane %v1397, %v1412
      %v1415 = vunpack.c.l.s4 1966171168
      %v1416 = vunpack.c.0.s8 %v1415
      %v1417 = vlaneseq
      %v1418 = vshrl.u32 %v1417, 7
      %v1419 = vsub.s32 %v1416, %v1418
      %v1420 = vrot.slane %v1398, %v1419
      %v1422 = vunpack.c.l.s4 1966171168
      %v1423 = vunpack.c.0.s8 %v1422
      %v1424 = vlaneseq
      %v1425 = vshrl.u32 %v1424, 7
      %v1426 = vsub.s32 %v1423, %v1425
      %v1427 = vrot.slane %v1399, %v1426
      %v1428 = vcombine.low %v1406, %v1413
      %v1429 = vcombine.low %v1420, %v1427
      %v1431 = vunpack.c.l.s4 1966171168
      %v1432 = vunpack.c.0.s8 %v1431
      %v1433 = vlaneseq
      %v1434 = vshrl.u32 %v1433, 7
      %v1435 = vsub.s32 %v1432, %v1434
      %v1436 = vrot.slane %v1428, %v1435
      %v1438 = vunpack.c.l.s4 1966171168
      %v1439 = vunpack.c.0.s8 %v1438
      %v1440 = vlaneseq
      %v1441 = vshrl.u32 %v1440, 7
      %v1442 = vsub.s32 %v1439, %v1441
      %v1443 = vrot.slane %v1429, %v1442
      %v1444 = vcombine.low %v1436, %v1443
      %v1445 = vcombine.low %v860, %v867
      %v1446 = vcombine.low %v868, %v869
      %v1447 = vcombine.low %v883, %v898
      %v1448 = vcombine.low %v905, %v906
      %v1450 = vunpack.c.l.s4 1966171168
      %v1451 = vunpack.c.0.s8 %v1450
      %v1452 = vlaneseq
      %v1453 = vshrl.u32 %v1452, 7
      %v1454 = vsub.s32 %v1451, %v1453
      %v1455 = vrot.slane %v1445, %v1454
      %v1457 = vunpack.c.l.s4 1966171168
      %v1458 = vunpack.c.0.s8 %v1457
      %v1459 = vlaneseq
      %v1460 = vshrl.u32 %v1459, 7
      %v1461 = vsub.s32 %v1458, %v1460
      %v1462 = vrot.slane %v1446, %v1461
      %v1464 = vunpack.c.l.s4 1966171168
      %v1465 = vunpack.c.0.s8 %v1464
      %v1466 = vlaneseq
      %v1467 = vshrl.u32 %v1466, 7
      %v1468 = vsub.s32 %v1465, %v1467
      %v1469 = vrot.slane %v1447, %v1468
      %v1471 = vunpack.c.l.s4 1966171168
      %v1472 = vunpack.c.0.s8 %v1471
      %v1473 = vlaneseq
      %v1474 = vshrl.u32 %v1473, 7
      %v1475 = vsub.s32 %v1472, %v1474
      %v1476 = vrot.slane %v1448, %v1475
      %v1477 = vcombine.low %v1455, %v1462
      %v1478 = vcombine.low %v1469, %v1476
      %v1480 = vunpack.c.l.s4 1966171168
      %v1481 = vunpack.c.0.s8 %v1480
      %v1482 = vlaneseq
      %v1483 = vshrl.u32 %v1482, 7
      %v1484 = vsub.s32 %v1481, %v1483
      %v1485 = vrot.slane %v1477, %v1484
      %v1487 = vunpack.c.l.s4 1966171168
      %v1488 = vunpack.c.0.s8 %v1487
      %v1489 = vlaneseq
      %v1490 = vshrl.u32 %v1489, 7
      %v1491 = vsub.s32 %v1488, %v1490
      %v1492 = vrot.slane %v1478, %v1491
      %v1493 = vcombine.low %v1485, %v1492
      %v1494 = vcombine.low %v907, %v922
      %v1495 = vcombine.low %v929, %v930
      %v1496 = vcombine.low %v931, %v945
      %v1497 = vcombine.low %v960, %v967
      %v1499 = vunpack.c.l.s4 1966171168
      %v1500 = vunpack.c.0.s8 %v1499
      %v1501 = vlaneseq
      %v1502 = vshrl.u32 %v1501, 7
      %v1503 = vsub.s32 %v1500, %v1502
      %v1504 = vrot.slane %v1494, %v1503
      %v1506 = vunpack.c.l.s4 1966171168
      %v1507 = vunpack.c.0.s8 %v1506
      %v1508 = vlaneseq
      %v1509 = vshrl.u32 %v1508, 7
      %v1510 = vsub.s32 %v1507, %v1509
      %v1511 = vrot.slane %v1495, %v1510
      %v1513 = vunpack.c.l.s4 1966171168
      %v1514 = vunpack.c.0.s8 %v1513
      %v1515 = vlaneseq
      %v1516 = vshrl.u32 %v1515, 7
      %v1517 = vsub.s32 %v1514, %v1516
      %v1518 = vrot.slane %v1496, %v1517
      %v1520 = vunpack.c.l.s4 1966171168
      %v1521 = vunpack.c.0.s8 %v1520
      %v1522 = vlaneseq
      %v1523 = vshrl.u32 %v1522, 7
      %v1524 = vsub.s32 %v1521, %v1523
      %v1525 = vrot.slane %v1497, %v1524
      %v1526 = vcombine.low %v1504, %v1511
      %v1527 = vcombine.low %v1518, %v1525
      %v1529 = vunpack.c.l.s4 1966171168
      %v1530 = vunpack.c.0.s8 %v1529
      %v1531 = vlaneseq
      %v1532 = vshrl.u32 %v1531, 7
      %v1533 = vsub.s32 %v1530, %v1532
      %v1534 = vrot.slane %v1526, %v1533
      %v1536 = vunpack.c.l.s4 1966171168
      %v1537 = vunpack.c.0.s8 %v1536
      %v1538 = vlaneseq
      %v1539 = vshrl.u32 %v1538, 7
      %v1540 = vsub.s32 %v1537, %v1539
      %v1541 = vrot.slane %v1527, %v1540
      %v1542 = vcombine.low %v1534, %v1541
      %v1543 = vcombine.low %v968, %v969
      %v1544 = vcombine.low %v984, %v991
      %v1545 = vcombine.low %v992, %v993
      %v1546 = vcombine.low %v1007, %v1022
      %v1548 = vunpack.c.l.s4 1966171168
      %v1549 = vunpack.c.0.s8 %v1548
      %v1550 = vlaneseq
      %v1551 = vshrl.u32 %v1550, 7
      %v1552 = vsub.s32 %v1549, %v1551
      %v1553 = vrot.slane %v1543, %v1552
      %v1555 = vunpack.c.l.s4 1966171168
      %v1556 = vunpack.c.0.s8 %v1555
      %v1557 = vlaneseq
      %v1558 = vshrl.u32 %v1557, 7
      %v1559 = vsub.s32 %v1556, %v1558
      %v1560 = vrot.slane %v1544, %v1559
      %v1562 = vunpack.c.l.s4 1966171168
      %v1563 = vunpack.c.0.s8 %v1562
      %v1564 = vlaneseq
      %v1565 = vshrl.u32 %v1564, 7
      %v1566 = vsub.s32 %v1563, %v1565
      %v1567 = vrot.slane %v1545, %v1566
      %v1569 = vunpack.c.l.s4 1966171168
      %v1570 = vunpack.c.0.s8 %v1569
      %v1571 = vlaneseq
      %v1572 = vshrl.u32 %v1571, 7
      %v1573 = vsub.s32 %v1570, %v1572
      %v1574 = vrot.slane %v1546, %v1573
      %v1575 = vcombine.low %v1553, %v1560
      %v1576 = vcombine.low %v1567, %v1574
      %v1578 = vunpack.c.l.s4 1966171168
      %v1579 = vunpack.c.0.s8 %v1578
      %v1580 = vlaneseq
      %v1581 = vshrl.u32 %v1580, 7
      %v1582 = vsub.s32 %v1579, %v1581
      %v1583 = vrot.slane %v1575, %v1582
      %v1585 = vunpack.c.l.s4 1966171168
      %v1586 = vunpack.c.0.s8 %v1585
      %v1587 = vlaneseq
      %v1588 = vshrl.u32 %v1587, 7
      %v1589 = vsub.s32 %v1586, %v1588
      %v1590 = vrot.slane %v1576, %v1589
      %v1591 = vcombine.low %v1583, %v1590
      %v1592 = vcombine.low %v1029, %v1030
      %v1593 = vcombine.low %v1031, %v1046
      %v1594 = vcombine.low %v1053, %v1054
      %v1595 = vcombine.low %v1055, %v1069
      %v1597 = vunpack.c.l.s4 1966171168
      %v1598 = vunpack.c.0.s8 %v1597
      %v1599 = vlaneseq
      %v1600 = vshrl.u32 %v1599, 7
      %v1601 = vsub.s32 %v1598, %v1600
      %v1602 = vrot.slane %v1592, %v1601
      %v1604 = vunpack.c.l.s4 1966171168
      %v1605 = vunpack.c.0.s8 %v1604
      %v1606 = vlaneseq
      %v1607 = vshrl.u32 %v1606, 7
      %v1608 = vsub.s32 %v1605, %v1607
      %v1609 = vrot.slane %v1593, %v1608
      %v1611 = vunpack.c.l.s4 1966171168
      %v1612 = vunpack.c.0.s8 %v1611
      %v1613 = vlaneseq
      %v1614 = vshrl.u32 %v1613, 7
      %v1615 = vsub.s32 %v1612, %v1614
      %v1616 = vrot.slane %v1594, %v1615
      %v1618 = vunpack.c.l.s4 1966171168
      %v1619 = vunpack.c.0.s8 %v1618
      %v1620 = vlaneseq
      %v1621 = vshrl.u32 %v1620, 7
      %v1622 = vsub.s32 %v1619, %v1621
      %v1623 = vrot.slane %v1595, %v1622
      %v1624 = vcombine.low %v1602, %v1609
      %v1625 = vcombine.low %v1616, %v1623
      %v1627 = vunpack.c.l.s4 1966171168
      %v1628 = vunpack.c.0.s8 %v1627
      %v1629 = vlaneseq
      %v1630 = vshrl.u32 %v1629, 7
      %v1631 = vsub.s32 %v1628, %v1630
      %v1632 = vrot.slane %v1624, %v1631
      %v1634 = vunpack.c.l.s4 1966171168
      %v1635 = vunpack.c.0.s8 %v1634
      %v1636 = vlaneseq
      %v1637 = vshrl.u32 %v1636, 7
      %v1638 = vsub.s32 %v1635, %v1637
      %v1639 = vrot.slane %v1625, %v1638
      %v1640 = vcombine.low %v1632, %v1639
      %v1641 = vcombine.low %v1084, %v1091
      %v1642 = vcombine.low %v1092, %v1093
      %v1643 = vcombine.low %v1108, %v1115
      %v1644 = vcombine.low %v1116, %v1117
      %v1646 = vunpack.c.l.s4 1966171168
      %v1647 = vunpack.c.0.s8 %v1646
      %v1648 = vlaneseq
      %v1649 = vshrl.u32 %v1648, 7
      %v1650 = vsub.s32 %v1647, %v1649
      %v1651 = vrot.slane %v1641, %v1650
      %v1653 = vunpack.c.l.s4 1966171168
      %v1654 = vunpack.c.0.s8 %v1653
      %v1655 = vlaneseq
      %v1656 = vshrl.u32 %v1655, 7
      %v1657 = vsub.s32 %v1654, %v1656
      %v1658 = vrot.slane %v1642, %v1657
      %v1660 = vunpack.c.l.s4 1966171168
      %v1661 = vunpack.c.0.s8 %v1660
      %v1662 = vlaneseq
      %v1663 = vshrl.u32 %v1662, 7
      %v1664 = vsub.s32 %v1661, %v1663
      %v1665 = vrot.slane %v1643, %v1664
      %v1667 = vunpack.c.l.s4 1966171168
      %v1668 = vunpack.c.0.s8 %v1667
      %v1669 = vlaneseq
      %v1670 = vshrl.u32 %v1669, 7
      %v1671 = vsub.s32 %v1668, %v1670
      %v1672 = vrot.slane %v1644, %v1671
      %v1673 = vcombine.low %v1651, %v1658
      %v1674 = vcombine.low %v1665, %v1672
      %v1676 = vunpack.c.l.s4 1966171168
      %v1677 = vunpack.c.0.s8 %v1676
      %v1678 = vlaneseq
      %v1679 = vshrl.u32 %v1678, 7
      %v1680 = vsub.s32 %v1677, %v1679
      %v1681 = vrot.slane %v1673, %v1680
      %v1683 = vunpack.c.l.s4 1966171168
      %v1684 = vunpack.c.0.s8 %v1683
      %v1685 = vlaneseq
      %v1686 = vshrl.u32 %v1685, 7
      %v1687 = vsub.s32 %v1684, %v1686
      %v1688 = vrot.slane %v1674, %v1687
      %v1689 = vcombine.low %v1681, %v1688
      %v1690 = vcombine.low %v1131, %v1146
      %v1691 = vcombine.low %v1153, %v1154
      %v1692 = vcombine.low %v1155, %v1170
      %v1693 = vcombine.low %v1177, %v1178
      %v1695 = vunpack.c.l.s4 1966171168
      %v1696 = vunpack.c.0.s8 %v1695
      %v1697 = vlaneseq
      %v1698 = vshrl.u32 %v1697, 7
      %v1699 = vsub.s32 %v1696, %v1698
      %v1700 = vrot.slane %v1690, %v1699
      %v1702 = vunpack.c.l.s4 1966171168
      %v1703 = vunpack.c.0.s8 %v1702
      %v1704 = vlaneseq
      %v1705 = vshrl.u32 %v1704, 7
      %v1706 = vsub.s32 %v1703, %v1705
      %v1707 = vrot.slane %v1691, %v1706
      %v1709 = vunpack.c.l.s4 1966171168
      %v1710 = vunpack.c.0.s8 %v1709
      %v1711 = vlaneseq
      %v1712 = vshrl.u32 %v1711, 7
      %v1713 = vsub.s32 %v1710, %v1712
      %v1714 = vrot.slane %v1692, %v1713
      %v1716 = vunpack.c.l.s4 1966171168
      %v1717 = vunpack.c.0.s8 %v1716
      %v1718 = vlaneseq
      %v1719 = vshrl.u32 %v1718, 7
      %v1720 = vsub.s32 %v1717, %v1719
      %v1721 = vrot.slane %v1693, %v1720
      %v1722 = vcombine.low %v1700, %v1707
      %v1723 = vcombine.low %v1714, %v1721
      %v1725 = vunpack.c.l.s4 1966171168
      %v1726 = vunpack.c.0.s8 %v1725
      %v1727 = vlaneseq
      %v1728 = vshrl.u32 %v1727, 7
      %v1729 = vsub.s32 %v1726, %v1728
      %v1730 = vrot.slane %v1722, %v1729
      %v1732 = vunpack.c.l.s4 1966171168
      %v1733 = vunpack.c.0.s8 %v1732
      %v1734 = vlaneseq
      %v1735 = vshrl.u32 %v1734, 7
      %v1736 = vsub.s32 %v1733, %v1735
      %v1737 = vrot.slane %v1723, %v1736
      %v1738 = vcombine.low %v1730, %v1737
      %v1739 = vcombine.low %v1179, %v1193
      %v1741 = vunpack.c.l.s4 1966171168
      %v1742 = vunpack.c.0.s8 %v1741
      %v1743 = vlaneseq
      %v1744 = vshrl.u32 %v1743, 7
      %v1745 = vsub.s32 %v1742, %v1744
      %v1746 = vrot.slane %v1739, %v1745
      %v1748 = vunpack.c.l.s4 1966171168
      %v1749 = vunpack.c.0.s8 %v1748
      %v1750 = vlaneseq
      %v1751 = vshrl.u32 %v1750, 7
      %v1752 = vsub.s32 %v1749, %v1751
      %v1753 = vrot.slane %v1746, %v1752
      %v1758 = vunpack.c.l.b16 %v436
      %v1759 = vunpack.c.l.b16 %v437
      %v1760 = vunpack.c.l.b16 %v438
      %v1761 = vunpack.c.l.b16 %v439
      %v1762 = vpack.c.b16 %v1759, %v1758
      %v1763 = vpack.c.b16 %v1761, %v1760
      %vm1765 = vcmask 220160
      %v1767 = vsel %vm1765, %v1248, 0
      %v1770 = vsel %vm1765, %v1297, 0
      %v1773 = vsel %vm1765, %v1346, 0
      %v1776 = vsel %vm1765, %v1395, 0
      %v1779 = vsel %vm1765, %v1444, 0
      %v1782 = vsel %vm1765, %v1493, 0
      %v1785 = vsel %vm1765, %v1542, 0
      %v1788 = vsel %vm1765, %v1591, 0
      %v1791 = vsel %vm1765, %v1640, 0
      %v1794 = vsel %vm1765, %v1689, 0
      %v1797 = vsel %vm1765, %v1738, 0
      %v1800 = vsel %vm1765, %v1753, 0
      %vm1802 = vcmask 1044480
      %vm1803 = vcmask 1045504
      %v1804 = vsel %vm1802, 4294967295, 65535
      %v1805 = vsel %vm1803, %v1804, 0
      %v1807 = vand.u32 %v1763, %v1805
      %1809 = vmatprep.subr.bf16.mxu0 0
      %1810 = vmatpush1.bf16.msra.mxu0 %v1762
      %1811 = vmatprep.subr.bf16.mxu0 0
      %1812 = vmatpush1.bf16.msra.mxu0 %v1807
      %1813 = vmatprep.subr.bf16.mxu0 0
      %1814 = vmatpush1.bf16.msra.mxu0 0
      %1815 = vmatprep.subr.bf16.mxu0 0
      %1816 = vmatpush1.bf16.msra.mxu0 0
      %1817 = vmatprep.subr.bf16.mxu0 0
      %1818 = vmatpush1.bf16.msra.mxu0 0
      %1819 = vmatprep.subr.bf16.mxu0 0
      %1820 = vmatpush1.bf16.msra.mxu0 0
      %1821 = vmatprep.subr.bf16.mxu0 0
      %1822 = vmatpush1.bf16.msra.mxu0 0
      %1823 = vmatprep.subr.bf16.mxu0 0
      %1824 = vmatpush1.bf16.msra.mxu0 0
      %1825 = vmatprep.subr.bf16.mxu0 0
      %1826 = vmatpush1.bf16.msra.mxu0 0
      %1827 = vmatprep.subr.bf16.mxu0 0
      %1828 = vmatpush1.bf16.msra.mxu0 0
      %1829 = vmatprep.subr.bf16.mxu0 0
      %1830 = vmatpush1.bf16.msra.mxu0 0
      %1831 = vmatprep.subr.bf16.mxu0 0
      %1832 = vmatpush1.bf16.msra.mxu0 0
      %1833 = vmatprep.subr.bf16.mxu0 0
      %1834 = vmatpush1.bf16.msra.mxu0 0
      %1835 = vmatprep.subr.bf16.mxu0 0
      %1836 = vmatpush1.bf16.msra.mxu0 0
      %1837 = vmatprep.subr.bf16.mxu0 0
      %1838 = vmatpush1.bf16.msra.mxu0 0
      %1839 = vmatprep.subr.bf16.mxu0 0
      %1840 = vmatpush1.bf16.msra.mxu0 0
      %1841 = vmatprep.mubr.bf16.mxu0 0
      %1842 = vmatmul.mubr.bf16.gmra.mrb[0].mxu0 %v1767
      %v1843 = vpop.f32.mrb[0].mxu0
      %v1844 = vadd.f32 %v1198, %v1843
      %v1845 = vpop.f32.mrb[0].mxu0
      %v1846 = vpop.f32.mrb[0].mxu0
      %v1847 = vadd.f32 %v1198, %v1846
      %v1848 = vpop.f32.mrb[0].mxu0
      %1849 = vmatprep.mubr.bf16.mxu0 0
      %1850 = vmatmul.mubr.bf16.gmra.mrb[0].mxu0 %v1770
      %v1851 = vpop.f32.mrb[0].mxu0
      %v1852 = vadd.f32 %v1198, %v1851
      %v1853 = vpop.f32.mrb[0].mxu0
      %v1854 = vpop.f32.mrb[0].mxu0
      %v1855 = vadd.f32 %v1198, %v1854
      %v1856 = vpop.f32.mrb[0].mxu0
      %1857 = vmatprep.mubr.bf16.mxu0 0
      %1858 = vmatmul.mubr.bf16.gmra.mrb[0].mxu0 %v1773
      %v1859 = vpop.f32.mrb[0].mxu0
      %v1860 = vadd.f32 %v1198, %v1859
      %v1861 = vpop.f32.mrb[0].mxu0
      %v1862 = vpop.f32.mrb[0].mxu0
      %v1863 = vadd.f32 %v1198, %v1862
      %v1864 = vpop.f32.mrb[0].mxu0
      %1865 = vmatprep.mubr.bf16.mxu0 0
      %1866 = vmatmul.mubr.bf16.gmra.mrb[0].mxu0 %v1776
      %v1867 = vpop.f32.mrb[0].mxu0
      %v1868 = vadd.f32 %v1198, %v1867
      %v1869 = vpop.f32.mrb[0].mxu0
      %v1870 = vpop.f32.mrb[0].mxu0
      %v1871 = vadd.f32 %v1198, %v1870
      %v1872 = vpop.f32.mrb[0].mxu0
      %1873 = vmatprep.mubr.bf16.mxu0 0
      %1874 = vmatmul.mubr.bf16.gmra.mrb[0].mxu0 %v1779
      %v1875 = vpop.f32.mrb[0].mxu0
      %v1876 = vadd.f32 %v1198, %v1875
      %v1877 = vpop.f32.mrb[0].mxu0
      %v1878 = vpop.f32.mrb[0].mxu0
      %v1879 = vadd.f32 %v1198, %v1878
      %v1880 = vpop.f32.mrb[0].mxu0
      %1881 = vmatprep.mubr.bf16.mxu0 0
      %1882 = vmatmul.mubr.bf16.gmra.mrb[0].mxu0 %v1782
      %v1883 = vpop.f32.mrb[0].mxu0
      %v1884 = vadd.f32 %v1198, %v1883
      %v1885 = vpop.f32.mrb[0].mxu0
      %v1886 = vpop.f32.mrb[0].mxu0
      %v1887 = vadd.f32 %v1198, %v1886
      %v1888 = vpop.f32.mrb[0].mxu0
      %1889 = vmatprep.mubr.bf16.mxu0 0
      %1890 = vmatmul.mubr.bf16.gmra.mrb[0].mxu0 %v1785
      %v1891 = vpop.f32.mrb[0].mxu0
      %v1892 = vadd.f32 %v1198, %v1891
      %v1893 = vpop.f32.mrb[0].mxu0
      %v1894 = vpop.f32.mrb[0].mxu0
      %v1895 = vadd.f32 %v1198, %v1894
      %v1896 = vpop.f32.mrb[0].mxu0
      %1897 = vmatprep.mubr.bf16.mxu0 0
      %1898 = vmatmul.mubr.bf16.gmra.mrb[0].mxu0 %v1788
      %v1899 = vpop.f32.mrb[0].mxu0
      %v1900 = vadd.f32 %v1198, %v1899
      %v1901 = vpop.f32.mrb[0].mxu0
      %v1902 = vpop.f32.mrb[0].mxu0
      %v1903 = vadd.f32 %v1198, %v1902
      %v1904 = vpop.f32.mrb[0].mxu0
      %1905 = vmatprep.mubr.bf16.mxu0 0
      %1906 = vmatmul.mubr.bf16.gmra.mrb[0].mxu0 %v1791
      %v1907 = vpop.f32.mrb[0].mxu0
      %v1908 = vadd.f32 %v1198, %v1907
      %v1909 = vpop.f32.mrb[0].mxu0
      %v1910 = vpop.f32.mrb[0].mxu0
      %v1911 = vadd.f32 %v1198, %v1910
      %v1912 = vpop.f32.mrb[0].mxu0
      %1913 = vmatprep.mubr.bf16.mxu0 0
      %1914 = vmatmul.mubr.bf16.gmra.mrb[0].mxu0 %v1794
      %v1915 = vpop.f32.mrb[0].mxu0
      %v1916 = vadd.f32 %v1198, %v1915
      %v1917 = vpop.f32.mrb[0].mxu0
      %v1918 = vpop.f32.mrb[0].mxu0
      %v1919 = vadd.f32 %v1198, %v1918
      %v1920 = vpop.f32.mrb[0].mxu0
      %1921 = vmatprep.mubr.bf16.mxu0 0
      %1922 = vmatmul.mubr.bf16.gmra.mrb[0].mxu0 %v1797
      %v1923 = vpop.f32.mrb[0].mxu0
      %v1924 = vadd.f32 %v1198, %v1923
      %v1925 = vpop.f32.mrb[0].mxu0
      %v1926 = vpop.f32.mrb[0].mxu0
      %v1927 = vadd.f32 %v1198, %v1926
      %v1928 = vpop.f32.mrb[0].mxu0
      %1929 = vmatprep.mubr.bf16.mxu0 0
      %1930 = vmatmul.mubr.bf16.gmra.mrb[0].mxu0 %v1800
      %v1931 = vpop.f32.mrb[0].mxu0
      %v1932 = vadd.f32 %v1198, %v1931
      %v1933 = vpop.f32.mrb[0].mxu0
      %v1934 = vpop.f32.mrb[0].mxu0
      %v1935 = vpop.f32.mrb[0].mxu0
      %1936 = vdwg.mxu0
      %v1937 = vmax.f32 %v1844, 0.0
      %v1938 = vmax.f32 %v1847, 0.0
      %v1939 = vmax.f32 %v1852, 0.0
      %v1940 = vmax.f32 %v1855, 0.0
      %v1941 = vmax.f32 %v1860, 0.0
      %v1942 = vmax.f32 %v1863, 0.0
      %v1943 = vmax.f32 %v1868, 0.0
      %v1944 = vmax.f32 %v1871, 0.0
      %v1945 = vmax.f32 %v1876, 0.0
      %v1946 = vmax.f32 %v1879, 0.0
      %v1947 = vmax.f32 %v1884, 0.0
      %v1948 = vmax.f32 %v1887, 0.0
      %v1949 = vmax.f32 %v1892, 0.0
      %v1950 = vmax.f32 %v1895, 0.0
      %v1951 = vmax.f32 %v1900, 0.0
      %v1952 = vmax.f32 %v1903, 0.0
      %v1953 = vmax.f32 %v1908, 0.0
      %v1954 = vmax.f32 %v1911, 0.0
      %v1955 = vmax.f32 %v1916, 0.0
      %v1956 = vmax.f32 %v1919, 0.0
      %v1957 = vmax.f32 %v1924, 0.0
      %v1958 = vmax.f32 %v1927, 0.0
      %v1959 = vmax.f32 %v1932, 0.0
      %v1983 = vcombine.high %v1937, %v1937
      %v1985 = vunpack.c.l.s4 1983009808
      %v1986 = vunpack.c.0.s8 %v1985
      %v1987 = vlaneseq
      %v1988 = vshrl.u32 %v1987, 7
      %v1989 = vsub.s32 %v1986, %v1988
      %v1990 = vrot.slane %v1937, %v1989
      %v1992 = vunpack.c.l.s4 1983009808
      %v1993 = vunpack.c.0.s8 %v1992
      %v1994 = vlaneseq
      %v1995 = vshrl.u32 %v1994, 7
      %v1996 = vsub.s32 %v1993, %v1995
      %v1997 = vrot.slane %v1983, %v1996
      %v1998 = vcombine.high %v1990, %v1990
      %v1999 = vcombine.high %v1997, %v1997
      %v2000 = vcombine.high %v1938, %v1938
      %v2002 = vunpack.c.l.s4 1983009808
      %v2003 = vunpack.c.0.s8 %v2002
      %v2004 = vlaneseq
      %v2005 = vshrl.u32 %v2004, 7
      %v2006 = vsub.s32 %v2003, %v2005
      %v2007 = vrot.slane %v1938, %v2006
      %v2009 = vunpack.c.l.s4 1983009808
      %v2010 = vunpack.c.0.s8 %v2009
      %v2011 = vlaneseq
      %v2012 = vshrl.u32 %v2011, 7
      %v2013 = vsub.s32 %v2010, %v2012
      %v2014 = vrot.slane %v2000, %v2013
      %v2015 = vcombine.high %v2007, %v2007
      %v2016 = vcombine.high %v2014, %v2014
      %v2017 = vcombine.high %v1939, %v1939
      %v2019 = vunpack.c.l.s4 1983009808
      %v2020 = vunpack.c.0.s8 %v2019
      %v2021 = vlaneseq
      %v2022 = vshrl.u32 %v2021, 7
      %v2023 = vsub.s32 %v2020, %v2022
      %v2024 = vrot.slane %v1939, %v2023
      %v2026 = vunpack.c.l.s4 1983009808
      %v2027 = vunpack.c.0.s8 %v2026
      %v2028 = vlaneseq
      %v2029 = vshrl.u32 %v2028, 7
      %v2030 = vsub.s32 %v2027, %v2029
      %v2031 = vrot.slane %v2017, %v2030
      %v2032 = vcombine.high %v2024, %v2024
      %v2033 = vcombine.high %v2031, %v2031
      %v2034 = vcombine.high %v1940, %v1940
      %v2036 = vunpack.c.l.s4 1983009808
      %v2037 = vunpack.c.0.s8 %v2036
      %v2038 = vlaneseq
      %v2039 = vshrl.u32 %v2038, 7
      %v2040 = vsub.s32 %v2037, %v2039
      %v2041 = vrot.slane %v1940, %v2040
      %v2043 = vunpack.c.l.s4 1983009808
      %v2044 = vunpack.c.0.s8 %v2043
      %v2045 = vlaneseq
      %v2046 = vshrl.u32 %v2045, 7
      %v2047 = vsub.s32 %v2044, %v2046
      %v2048 = vrot.slane %v2034, %v2047
      %v2049 = vcombine.high %v2041, %v2041
      %v2050 = vcombine.high %v2048, %v2048
      %v2051 = vcombine.high %v1941, %v1941
      %v2053 = vunpack.c.l.s4 1983009808
      %v2054 = vunpack.c.0.s8 %v2053
      %v2055 = vlaneseq
      %v2056 = vshrl.u32 %v2055, 7
      %v2057 = vsub.s32 %v2054, %v2056
      %v2058 = vrot.slane %v1941, %v2057
      %v2060 = vunpack.c.l.s4 1983009808
      %v2061 = vunpack.c.0.s8 %v2060
      %v2062 = vlaneseq
      %v2063 = vshrl.u32 %v2062, 7
      %v2064 = vsub.s32 %v2061, %v2063
      %v2065 = vrot.slane %v2051, %v2064
      %v2066 = vcombine.high %v2058, %v2058
      %v2067 = vcombine.high %v2065, %v2065
      %v2068 = vcombine.high %v1942, %v1942
      %v2070 = vunpack.c.l.s4 1983009808
      %v2071 = vunpack.c.0.s8 %v2070
      %v2072 = vlaneseq
      %v2073 = vshrl.u32 %v2072, 7
      %v2074 = vsub.s32 %v2071, %v2073
      %v2075 = vrot.slane %v1942, %v2074
      %v2077 = vunpack.c.l.s4 1983009808
      %v2078 = vunpack.c.0.s8 %v2077
      %v2079 = vlaneseq
      %v2080 = vshrl.u32 %v2079, 7
      %v2081 = vsub.s32 %v2078, %v2080
      %v2082 = vrot.slane %v2068, %v2081
      %v2083 = vcombine.high %v2075, %v2075
      %v2084 = vcombine.high %v2082, %v2082
      %v2085 = vcombine.high %v1943, %v1943
      %v2087 = vunpack.c.l.s4 1983009808
      %v2088 = vunpack.c.0.s8 %v2087
      %v2089 = vlaneseq
      %v2090 = vshrl.u32 %v2089, 7
      %v2091 = vsub.s32 %v2088, %v2090
      %v2092 = vrot.slane %v1943, %v2091
      %v2094 = vunpack.c.l.s4 1983009808
      %v2095 = vunpack.c.0.s8 %v2094
      %v2096 = vlaneseq
      %v2097 = vshrl.u32 %v2096, 7
      %v2098 = vsub.s32 %v2095, %v2097
      %v2099 = vrot.slane %v2085, %v2098
      %v2100 = vcombine.high %v2092, %v2092
      %v2101 = vcombine.high %v2099, %v2099
      %v2102 = vcombine.high %v1944, %v1944
      %v2104 = vunpack.c.l.s4 1983009808
      %v2105 = vunpack.c.0.s8 %v2104
      %v2106 = vlaneseq
      %v2107 = vshrl.u32 %v2106, 7
      %v2108 = vsub.s32 %v2105, %v2107
      %v2109 = vrot.slane %v1944, %v2108
      %v2111 = vunpack.c.l.s4 1983009808
      %v2112 = vunpack.c.0.s8 %v2111
      %v2113 = vlaneseq
      %v2114 = vshrl.u32 %v2113, 7
      %v2115 = vsub.s32 %v2112, %v2114
      %v2116 = vrot.slane %v2102, %v2115
      %v2117 = vcombine.high %v2109, %v2109
      %v2118 = vcombine.high %v2116, %v2116
      %v2119 = vcombine.high %v1945, %v1945
      %v2121 = vunpack.c.l.s4 1983009808
      %v2122 = vunpack.c.0.s8 %v2121
      %v2123 = vlaneseq
      %v2124 = vshrl.u32 %v2123, 7
      %v2125 = vsub.s32 %v2122, %v2124
      %v2126 = vrot.slane %v1945, %v2125
      %v2128 = vunpack.c.l.s4 1983009808
      %v2129 = vunpack.c.0.s8 %v2128
      %v2130 = vlaneseq
      %v2131 = vshrl.u32 %v2130, 7
      %v2132 = vsub.s32 %v2129, %v2131
      %v2133 = vrot.slane %v2119, %v2132
      %v2134 = vcombine.high %v2126, %v2126
      %v2135 = vcombine.high %v2133, %v2133
      %v2136 = vcombine.high %v1946, %v1946
      %v2138 = vunpack.c.l.s4 1983009808
      %v2139 = vunpack.c.0.s8 %v2138
      %v2140 = vlaneseq
      %v2141 = vshrl.u32 %v2140, 7
      %v2142 = vsub.s32 %v2139, %v2141
      %v2143 = vrot.slane %v1946, %v2142
      %v2145 = vunpack.c.l.s4 1983009808
      %v2146 = vunpack.c.0.s8 %v2145
      %v2147 = vlaneseq
      %v2148 = vshrl.u32 %v2147, 7
      %v2149 = vsub.s32 %v2146, %v2148
      %v2150 = vrot.slane %v2136, %v2149
      %v2151 = vcombine.high %v2143, %v2143
      %v2152 = vcombine.high %v2150, %v2150
      %v2153 = vcombine.high %v1947, %v1947
      %v2155 = vunpack.c.l.s4 1983009808
      %v2156 = vunpack.c.0.s8 %v2155
      %v2157 = vlaneseq
      %v2158 = vshrl.u32 %v2157, 7
      %v2159 = vsub.s32 %v2156, %v2158
      %v2160 = vrot.slane %v1947, %v2159
      %v2162 = vunpack.c.l.s4 1983009808
      %v2163 = vunpack.c.0.s8 %v2162
      %v2164 = vlaneseq
      %v2165 = vshrl.u32 %v2164, 7
      %v2166 = vsub.s32 %v2163, %v2165
      %v2167 = vrot.slane %v2153, %v2166
      %v2168 = vcombine.high %v2160, %v2160
      %v2169 = vcombine.high %v2167, %v2167
      %v2170 = vcombine.high %v1948, %v1948
      %v2172 = vunpack.c.l.s4 1983009808
      %v2173 = vunpack.c.0.s8 %v2172
      %v2174 = vlaneseq
      %v2175 = vshrl.u32 %v2174, 7
      %v2176 = vsub.s32 %v2173, %v2175
      %v2177 = vrot.slane %v1948, %v2176
      %v2179 = vunpack.c.l.s4 1983009808
      %v2180 = vunpack.c.0.s8 %v2179
      %v2181 = vlaneseq
      %v2182 = vshrl.u32 %v2181, 7
      %v2183 = vsub.s32 %v2180, %v2182
      %v2184 = vrot.slane %v2170, %v2183
      %v2185 = vcombine.high %v2177, %v2177
      %v2186 = vcombine.high %v2184, %v2184
      %v2187 = vcombine.high %v1949, %v1949
      %v2189 = vunpack.c.l.s4 1983009808
      %v2190 = vunpack.c.0.s8 %v2189
      %v2191 = vlaneseq
      %v2192 = vshrl.u32 %v2191, 7
      %v2193 = vsub.s32 %v2190, %v2192
      %v2194 = vrot.slane %v1949, %v2193
      %v2196 = vunpack.c.l.s4 1983009808
      %v2197 = vunpack.c.0.s8 %v2196
      %v2198 = vlaneseq
      %v2199 = vshrl.u32 %v2198, 7
      %v2200 = vsub.s32 %v2197, %v2199
      %v2201 = vrot.slane %v2187, %v2200
      %v2202 = vcombine.high %v2194, %v2194
      %v2203 = vcombine.high %v2201, %v2201
      %v2204 = vcombine.high %v1950, %v1950
      %v2206 = vunpack.c.l.s4 1983009808
      %v2207 = vunpack.c.0.s8 %v2206
      %v2208 = vlaneseq
      %v2209 = vshrl.u32 %v2208, 7
      %v2210 = vsub.s32 %v2207, %v2209
      %v2211 = vrot.slane %v1950, %v2210
      %v2213 = vunpack.c.l.s4 1983009808
      %v2214 = vunpack.c.0.s8 %v2213
      %v2215 = vlaneseq
      %v2216 = vshrl.u32 %v2215, 7
      %v2217 = vsub.s32 %v2214, %v2216
      %v2218 = vrot.slane %v2204, %v2217
      %v2219 = vcombine.high %v2211, %v2211
      %v2220 = vcombine.high %v2218, %v2218
      %v2221 = vcombine.high %v1951, %v1951
      %v2223 = vunpack.c.l.s4 1983009808
      %v2224 = vunpack.c.0.s8 %v2223
      %v2225 = vlaneseq
      %v2226 = vshrl.u32 %v2225, 7
      %v2227 = vsub.s32 %v2224, %v2226
      %v2228 = vrot.slane %v1951, %v2227
      %v2230 = vunpack.c.l.s4 1983009808
      %v2231 = vunpack.c.0.s8 %v2230
      %v2232 = vlaneseq
      %v2233 = vshrl.u32 %v2232, 7
      %v2234 = vsub.s32 %v2231, %v2233
      %v2235 = vrot.slane %v2221, %v2234
      %v2236 = vcombine.high %v2228, %v2228
      %v2237 = vcombine.high %v2235, %v2235
      %v2238 = vcombine.high %v1952, %v1952
      %v2240 = vunpack.c.l.s4 1983009808
      %v2241 = vunpack.c.0.s8 %v2240
      %v2242 = vlaneseq
      %v2243 = vshrl.u32 %v2242, 7
      %v2244 = vsub.s32 %v2241, %v2243
      %v2245 = vrot.slane %v1952, %v2244
      %v2247 = vunpack.c.l.s4 1983009808
      %v2248 = vunpack.c.0.s8 %v2247
      %v2249 = vlaneseq
      %v2250 = vshrl.u32 %v2249, 7
      %v2251 = vsub.s32 %v2248, %v2250
      %v2252 = vrot.slane %v2238, %v2251
      %v2253 = vcombine.high %v2245, %v2245
      %v2254 = vcombine.high %v2252, %v2252
      %v2255 = vcombine.high %v1953, %v1953
      %v2257 = vunpack.c.l.s4 1983009808
      %v2258 = vunpack.c.0.s8 %v2257
      %v2259 = vlaneseq
      %v2260 = vshrl.u32 %v2259, 7
      %v2261 = vsub.s32 %v2258, %v2260
      %v2262 = vrot.slane %v1953, %v2261
      %v2264 = vunpack.c.l.s4 1983009808
      %v2265 = vunpack.c.0.s8 %v2264
      %v2266 = vlaneseq
      %v2267 = vshrl.u32 %v2266, 7
      %v2268 = vsub.s32 %v2265, %v2267
      %v2269 = vrot.slane %v2255, %v2268
      %v2270 = vcombine.high %v2262, %v2262
      %v2271 = vcombine.high %v2269, %v2269
      %v2272 = vcombine.high %v1954, %v1954
      %v2274 = vunpack.c.l.s4 1983009808
      %v2275 = vunpack.c.0.s8 %v2274
      %v2276 = vlaneseq
      %v2277 = vshrl.u32 %v2276, 7
      %v2278 = vsub.s32 %v2275, %v2277
      %v2279 = vrot.slane %v1954, %v2278
      %v2281 = vunpack.c.l.s4 1983009808
      %v2282 = vunpack.c.0.s8 %v2281
      %v2283 = vlaneseq
      %v2284 = vshrl.u32 %v2283, 7
      %v2285 = vsub.s32 %v2282, %v2284
      %v2286 = vrot.slane %v2272, %v2285
      %v2287 = vcombine.high %v2279, %v2279
      %v2288 = vcombine.high %v2286, %v2286
      %v2289 = vcombine.high %v1955, %v1955
      %v2291 = vunpack.c.l.s4 1983009808
      %v2292 = vunpack.c.0.s8 %v2291
      %v2293 = vlaneseq
      %v2294 = vshrl.u32 %v2293, 7
      %v2295 = vsub.s32 %v2292, %v2294
      %v2296 = vrot.slane %v1955, %v2295
      %v2298 = vunpack.c.l.s4 1983009808
      %v2299 = vunpack.c.0.s8 %v2298
      %v2300 = vlaneseq
      %v2301 = vshrl.u32 %v2300, 7
      %v2302 = vsub.s32 %v2299, %v2301
      %v2303 = vrot.slane %v2289, %v2302
      %v2304 = vcombine.high %v2296, %v2296
      %v2305 = vcombine.high %v2303, %v2303
      %v2306 = vcombine.high %v1956, %v1956
      %v2308 = vunpack.c.l.s4 1983009808
      %v2309 = vunpack.c.0.s8 %v2308
      %v2310 = vlaneseq
      %v2311 = vshrl.u32 %v2310, 7
      %v2312 = vsub.s32 %v2309, %v2311
      %v2313 = vrot.slane %v1956, %v2312
      %v2315 = vunpack.c.l.s4 1983009808
      %v2316 = vunpack.c.0.s8 %v2315
      %v2317 = vlaneseq
      %v2318 = vshrl.u32 %v2317, 7
      %v2319 = vsub.s32 %v2316, %v2318
      %v2320 = vrot.slane %v2306, %v2319
      %v2321 = vcombine.high %v2313, %v2313
      %v2322 = vcombine.high %v2320, %v2320
      %v2323 = vcombine.high %v1957, %v1957
      %v2325 = vunpack.c.l.s4 1983009808
      %v2326 = vunpack.c.0.s8 %v2325
      %v2327 = vlaneseq
      %v2328 = vshrl.u32 %v2327, 7
      %v2329 = vsub.s32 %v2326, %v2328
      %v2330 = vrot.slane %v1957, %v2329
      %v2332 = vunpack.c.l.s4 1983009808
      %v2333 = vunpack.c.0.s8 %v2332
      %v2334 = vlaneseq
      %v2335 = vshrl.u32 %v2334, 7
      %v2336 = vsub.s32 %v2333, %v2335
      %v2337 = vrot.slane %v2323, %v2336
      %v2338 = vcombine.high %v2330, %v2330
      %v2339 = vcombine.high %v2337, %v2337
      %v2340 = vcombine.high %v1958, %v1958
      %v2342 = vunpack.c.l.s4 1983009808
      %v2343 = vunpack.c.0.s8 %v2342
      %v2344 = vlaneseq
      %v2345 = vshrl.u32 %v2344, 7
      %v2346 = vsub.s32 %v2343, %v2345
      %v2347 = vrot.slane %v1958, %v2346
      %v2349 = vunpack.c.l.s4 1983009808
      %v2350 = vunpack.c.0.s8 %v2349
      %v2351 = vlaneseq
      %v2352 = vshrl.u32 %v2351, 7
      %v2353 = vsub.s32 %v2350, %v2352
      %v2354 = vrot.slane %v2340, %v2353
      %v2355 = vcombine.high %v2347, %v2347
      %v2356 = vcombine.high %v2354, %v2354
      %v2358 = vunpack.c.l.s4 1983009808
      %v2359 = vunpack.c.0.s8 %v2358
      %v2360 = vlaneseq
      %v2361 = vshrl.u32 %v2360, 7
      %v2362 = vsub.s32 %v2359, %v2361
      %v2363 = vrot.slane %v1959, %v2362
      %v2364 = vcombine.high %v2363, %v2363
      %v2365 = vcombine.low %v1990, %v1998
      %v2366 = vcombine.low %v1997, %v1999
      %v2368 = vunpack.c.l.s4 1983009808
      %v2369 = vunpack.c.0.s8 %v2368
      %v2370 = vlaneseq
      %v2371 = vshrl.u32 %v2370, 7
      %v2372 = vsub.s32 %v2369, %v2371
      %v2373 = vrot.slane %v2365, %v2372
      %v2375 = vunpack.c.l.s4 1983009808
      %v2376 = vunpack.c.0.s8 %v2375
      %v2377 = vlaneseq
      %v2378 = vshrl.u32 %v2377, 7
      %v2379 = vsub.s32 %v2376, %v2378
      %v2380 = vrot.slane %v2366, %v2379
      %v2381 = vcombine.low %v2373, %v2380
      %v2382 = vcombine.low %v2007, %v2015
      %v2383 = vcombine.low %v2014, %v2016
      %v2385 = vunpack.c.l.s4 1983009808
      %v2386 = vunpack.c.0.s8 %v2385
      %v2387 = vlaneseq
      %v2388 = vshrl.u32 %v2387, 7
      %v2389 = vsub.s32 %v2386, %v2388
      %v2390 = vrot.slane %v2382, %v2389
      %v2392 = vunpack.c.l.s4 1983009808
      %v2393 = vunpack.c.0.s8 %v2392
      %v2394 = vlaneseq
      %v2395 = vshrl.u32 %v2394, 7
      %v2396 = vsub.s32 %v2393, %v2395
      %v2397 = vrot.slane %v2383, %v2396
      %v2398 = vcombine.low %v2390, %v2397
      %v2400 = vunpack.c.l.s4 1983009808
      %v2401 = vunpack.c.0.s8 %v2400
      %v2402 = vlaneseq
      %v2403 = vshrl.u32 %v2402, 7
      %v2404 = vsub.s32 %v2401, %v2403
      %v2405 = vrot.slane %v2024, %v2404
      %v2406 = vcombine.low %v2032, %v2031
      %v2407 = vcombine.low %v2033, %v2041
      %v2409 = vunpack.c.l.s4 1983009808
      %v2410 = vunpack.c.0.s8 %v2409
      %v2411 = vlaneseq
      %v2412 = vshrl.u32 %v2411, 7
      %v2413 = vsub.s32 %v2410, %v2412
      %v2414 = vrot.slane %v2406, %v2413
      %v2416 = vunpack.c.l.s4 1983009808
      %v2417 = vunpack.c.0.s8 %v2416
      %v2418 = vlaneseq
      %v2419 = vshrl.u32 %v2418, 7
      %v2420 = vsub.s32 %v2417, %v2419
      %v2421 = vrot.slane %v2407, %v2420
      %v2422 = vcombine.low %v2414, %v2421
      %v2423 = vcombine.low %v2049, %v2048
      %v2424 = vcombine.low %v2050, %v2058
      %v2426 = vunpack.c.l.s4 1983009808
      %v2427 = vunpack.c.0.s8 %v2426
      %v2428 = vlaneseq
      %v2429 = vshrl.u32 %v2428, 7
      %v2430 = vsub.s32 %v2427, %v2429
      %v2431 = vrot.slane %v2423, %v2430
      %v2433 = vunpack.c.l.s4 1983009808
      %v2434 = vunpack.c.0.s8 %v2433
      %v2435 = vlaneseq
      %v2436 = vshrl.u32 %v2435, 7
      %v2437 = vsub.s32 %v2434, %v2436
      %v2438 = vrot.slane %v2424, %v2437
      %v2439 = vcombine.low %v2431, %v2438
      %v2441 = vunpack.c.l.s4 1983009808
      %v2442 = vunpack.c.0.s8 %v2441
      %v2443 = vlaneseq
      %v2444 = vshrl.u32 %v2443, 7
      %v2445 = vsub.s32 %v2442, %v2444
      %v2446 = vrot.slane %v2066, %v2445
      %v2447 = vcombine.low %v2065, %v2067
      %v2448 = vcombine.low %v2075, %v2083
      %v2450 = vunpack.c.l.s4 1983009808
      %v2451 = vunpack.c.0.s8 %v2450
      %v2452 = vlaneseq
      %v2453 = vshrl.u32 %v2452, 7
      %v2454 = vsub.s32 %v2451, %v2453
      %v2455 = vrot.slane %v2447, %v2454
      %v2457 = vunpack.c.l.s4 1983009808
      %v2458 = vunpack.c.0.s8 %v2457
      %v2459 = vlaneseq
      %v2460 = vshrl.u32 %v2459, 7
      %v2461 = vsub.s32 %v2458, %v2460
      %v2462 = vrot.slane %v2448, %v2461
      %v2463 = vcombine.low %v2455, %v2462
      %v2464 = vcombine.low %v2082, %v2084
      %v2465 = vcombine.low %v2092, %v2100
      %v2467 = vunpack.c.l.s4 1983009808
      %v2468 = vunpack.c.0.s8 %v2467
      %v2469 = vlaneseq
      %v2470 = vshrl.u32 %v2469, 7
      %v2471 = vsub.s32 %v2468, %v2470
      %v2472 = vrot.slane %v2464, %v2471
      %v2474 = vunpack.c.l.s4 1983009808
      %v2475 = vunpack.c.0.s8 %v2474
      %v2476 = vlaneseq
      %v2477 = vshrl.u32 %v2476, 7
      %v2478 = vsub.s32 %v2475, %v2477
      %v2479 = vrot.slane %v2465, %v2478
      %v2480 = vcombine.low %v2472, %v2479
      %v2482 = vunpack.c.l.s4 1983009808
      %v2483 = vunpack.c.0.s8 %v2482
      %v2484 = vlaneseq
      %v2485 = vshrl.u32 %v2484, 7
      %v2486 = vsub.s32 %v2483, %v2485
      %v2487 = vrot.slane %v2099, %v2486
      %v2488 = vcombine.low %v2101, %v2109
      %v2489 = vcombine.low %v2117, %v2116
      %v2491 = vunpack.c.l.s4 1983009808
      %v2492 = vunpack.c.0.s8 %v2491
      %v2493 = vlaneseq
      %v2494 = vshrl.u32 %v2493, 7
      %v2495 = vsub.s32 %v2492, %v2494
      %v2496 = vrot.slane %v2488, %v2495
      %v2498 = vunpack.c.l.s4 1983009808
      %v2499 = vunpack.c.0.s8 %v2498
      %v2500 = vlaneseq
      %v2501 = vshrl.u32 %v2500, 7
      %v2502 = vsub.s32 %v2499, %v2501
      %v2503 = vrot.slane %v2489, %v2502
      %v2504 = vcombine.low %v2496, %v2503
      %v2505 = vcombine.low %v2118, %v2126
      %v2506 = vcombine.low %v2134, %v2133
      %v2508 = vunpack.c.l.s4 1983009808
      %v2509 = vunpack.c.0.s8 %v2508
      %v2510 = vlaneseq
      %v2511 = vshrl.u32 %v2510, 7
      %v2512 = vsub.s32 %v2509, %v2511
      %v2513 = vrot.slane %v2505, %v2512
      %v2515 = vunpack.c.l.s4 1983009808
      %v2516 = vunpack.c.0.s8 %v2515
      %v2517 = vlaneseq
      %v2518 = vshrl.u32 %v2517, 7
      %v2519 = vsub.s32 %v2516, %v2518
      %v2520 = vrot.slane %v2506, %v2519
      %v2521 = vcombine.low %v2513, %v2520
      %v2523 = vunpack.c.l.s4 1983009808
      %v2524 = vunpack.c.0.s8 %v2523
      %v2525 = vlaneseq
      %v2526 = vshrl.u32 %v2525, 7
      %v2527 = vsub.s32 %v2524, %v2526
      %v2528 = vrot.slane %v2135, %v2527
      %v2529 = vcombine.low %v2143, %v2151
      %v2530 = vcombine.low %v2150, %v2152
      %v2532 = vunpack.c.l.s4 1983009808
      %v2533 = vunpack.c.0.s8 %v2532
      %v2534 = vlaneseq
      %v2535 = vshrl.u32 %v2534, 7
      %v2536 = vsub.s32 %v2533, %v2535
      %v2537 = vrot.slane %v2529, %v2536
      %v2539 = vunpack.c.l.s4 1983009808
      %v2540 = vunpack.c.0.s8 %v2539
      %v2541 = vlaneseq
      %v2542 = vshrl.u32 %v2541, 7
      %v2543 = vsub.s32 %v2540, %v2542
      %v2544 = vrot.slane %v2530, %v2543
      %v2545 = vcombine.low %v2537, %v2544
      %v2546 = vcombine.low %v2160, %v2168
      %v2547 = vcombine.low %v2167, %v2169
      %v2549 = vunpack.c.l.s4 1983009808
      %v2550 = vunpack.c.0.s8 %v2549
      %v2551 = vlaneseq
      %v2552 = vshrl.u32 %v2551, 7
      %v2553 = vsub.s32 %v2550, %v2552
      %v2554 = vrot.slane %v2546, %v2553
      %v2556 = vunpack.c.l.s4 1983009808
      %v2557 = vunpack.c.0.s8 %v2556
      %v2558 = vlaneseq
      %v2559 = vshrl.u32 %v2558, 7
      %v2560 = vsub.s32 %v2557, %v2559
      %v2561 = vrot.slane %v2547, %v2560
      %v2562 = vcombine.low %v2554, %v2561
      %v2564 = vunpack.c.l.s4 1983009808
      %v2565 = vunpack.c.0.s8 %v2564
      %v2566 = vlaneseq
      %v2567 = vshrl.u32 %v2566, 7
      %v2568 = vsub.s32 %v2565, %v2567
      %v2569 = vrot.slane %v2177, %v2568
      %v2570 = vcombine.low %v2185, %v2184
      %v2571 = vcombine.low %v2186, %v2194
      %v2573 = vunpack.c.l.s4 1983009808
      %v2574 = vunpack.c.0.s8 %v2573
      %v2575 = vlaneseq
      %v2576 = vshrl.u32 %v2575, 7
      %v2577 = vsub.s32 %v2574, %v2576
      %v2578 = vrot.slane %v2570, %v2577
      %v2580 = vunpack.c.l.s4 1983009808
      %v2581 = vunpack.c.0.s8 %v2580
      %v2582 = vlaneseq
      %v2583 = vshrl.u32 %v2582, 7
      %v2584 = vsub.s32 %v2581, %v2583
      %v2585 = vrot.slane %v2571, %v2584
      %v2586 = vcombine.low %v2578, %v2585
      %v2587 = vcombine.low %v2202, %v2201
      %v2588 = vcombine.low %v2203, %v2211
      %v2590 = vunpack.c.l.s4 1983009808
      %v2591 = vunpack.c.0.s8 %v2590
      %v2592 = vlaneseq
      %v2593 = vshrl.u32 %v2592, 7
      %v2594 = vsub.s32 %v2591, %v2593
      %v2595 = vrot.slane %v2587, %v2594
      %v2597 = vunpack.c.l.s4 1983009808
      %v2598 = vunpack.c.0.s8 %v2597
      %v2599 = vlaneseq
      %v2600 = vshrl.u32 %v2599, 7
      %v2601 = vsub.s32 %v2598, %v2600
      %v2602 = vrot.slane %v2588, %v2601
      %v2603 = vcombine.low %v2595, %v2602
      %v2605 = vunpack.c.l.s4 1983009808
      %v2606 = vunpack.c.0.s8 %v2605
      %v2607 = vlaneseq
      %v2608 = vshrl.u32 %v2607, 7
      %v2609 = vsub.s32 %v2606, %v2608
      %v2610 = vrot.slane %v2219, %v2609
      %v2611 = vcombine.low %v2218, %v2220
      %v2612 = vcombine.low %v2228, %v2236
      %v2614 = vunpack.c.l.s4 1983009808
      %v2615 = vunpack.c.0.s8 %v2614
      %v2616 = vlaneseq
      %v2617 = vshrl.u32 %v2616, 7
      %v2618 = vsub.s32 %v2615, %v2617
      %v2619 = vrot.slane %v2611, %v2618
      %v2621 = vunpack.c.l.s4 1983009808
      %v2622 = vunpack.c.0.s8 %v2621
      %v2623 = vlaneseq
      %v2624 = vshrl.u32 %v2623, 7
      %v2625 = vsub.s32 %v2622, %v2624
      %v2626 = vrot.slane %v2612, %v2625
      %v2627 = vcombine.low %v2619, %v2626
      %v2628 = vcombine.low %v2235, %v2237
      %v2629 = vcombine.low %v2245, %v2253
      %v2631 = vunpack.c.l.s4 1983009808
      %v2632 = vunpack.c.0.s8 %v2631
      %v2633 = vlaneseq
      %v2634 = vshrl.u32 %v2633, 7
      %v2635 = vsub.s32 %v2632, %v2634
      %v2636 = vrot.slane %v2628, %v2635
      %v2638 = vunpack.c.l.s4 1983009808
      %v2639 = vunpack.c.0.s8 %v2638
      %v2640 = vlaneseq
      %v2641 = vshrl.u32 %v2640, 7
      %v2642 = vsub.s32 %v2639, %v2641
      %v2643 = vrot.slane %v2629, %v2642
      %v2644 = vcombine.low %v2636, %v2643
      %v2646 = vunpack.c.l.s4 1983009808
      %v2647 = vunpack.c.0.s8 %v2646
      %v2648 = vlaneseq
      %v2649 = vshrl.u32 %v2648, 7
      %v2650 = vsub.s32 %v2647, %v2649
      %v2651 = vrot.slane %v2252, %v2650
      %v2652 = vcombine.low %v2254, %v2262
      %v2653 = vcombine.low %v2270, %v2269
      %v2655 = vunpack.c.l.s4 1983009808
      %v2656 = vunpack.c.0.s8 %v2655
      %v2657 = vlaneseq
      %v2658 = vshrl.u32 %v2657, 7
      %v2659 = vsub.s32 %v2656, %v2658
      %v2660 = vrot.slane %v2652, %v2659
      %v2662 = vunpack.c.l.s4 1983009808
      %v2663 = vunpack.c.0.s8 %v2662
      %v2664 = vlaneseq
      %v2665 = vshrl.u32 %v2664, 7
      %v2666 = vsub.s32 %v2663, %v2665
      %v2667 = vrot.slane %v2653, %v2666
      %v2668 = vcombine.low %v2660, %v2667
      %v2669 = vcombine.low %v2271, %v2279
      %v2670 = vcombine.low %v2287, %v2286
      %v2672 = vunpack.c.l.s4 1983009808
      %v2673 = vunpack.c.0.s8 %v2672
      %v2674 = vlaneseq
      %v2675 = vshrl.u32 %v2674, 7
      %v2676 = vsub.s32 %v2673, %v2675
      %v2677 = vrot.slane %v2669, %v2676
      %v2679 = vunpack.c.l.s4 1983009808
      %v2680 = vunpack.c.0.s8 %v2679
      %v2681 = vlaneseq
      %v2682 = vshrl.u32 %v2681, 7
      %v2683 = vsub.s32 %v2680, %v2682
      %v2684 = vrot.slane %v2670, %v2683
      %v2685 = vcombine.low %v2677, %v2684
      %v2687 = vunpack.c.l.s4 1983009808
      %v2688 = vunpack.c.0.s8 %v2687
      %v2689 = vlaneseq
      %v2690 = vshrl.u32 %v2689, 7
      %v2691 = vsub.s32 %v2688, %v2690
      %v2692 = vrot.slane %v2288, %v2691
      %v2693 = vcombine.low %v2296, %v2304
      %v2694 = vcombine.low %v2303, %v2305
      %v2696 = vunpack.c.l.s4 1983009808
      %v2697 = vunpack.c.0.s8 %v2696
      %v2698 = vlaneseq
      %v2699 = vshrl.u32 %v2698, 7
      %v2700 = vsub.s32 %v2697, %v2699
      %v2701 = vrot.slane %v2693, %v2700
      %v2703 = vunpack.c.l.s4 1983009808
      %v2704 = vunpack.c.0.s8 %v2703
      %v2705 = vlaneseq
      %v2706 = vshrl.u32 %v2705, 7
      %v2707 = vsub.s32 %v2704, %v2706
      %v2708 = vrot.slane %v2694, %v2707
      %v2709 = vcombine.low %v2701, %v2708
      %v2710 = vcombine.low %v2313, %v2321
      %v2711 = vcombine.low %v2320, %v2322
      %v2713 = vunpack.c.l.s4 1983009808
      %v2714 = vunpack.c.0.s8 %v2713
      %v2715 = vlaneseq
      %v2716 = vshrl.u32 %v2715, 7
      %v2717 = vsub.s32 %v2714, %v2716
      %v2718 = vrot.slane %v2710, %v2717
      %v2720 = vunpack.c.l.s4 1983009808
      %v2721 = vunpack.c.0.s8 %v2720
      %v2722 = vlaneseq
      %v2723 = vshrl.u32 %v2722, 7
      %v2724 = vsub.s32 %v2721, %v2723
      %v2725 = vrot.slane %v2711, %v2724
      %v2726 = vcombine.low %v2718, %v2725
      %v2728 = vunpack.c.l.s4 1983009808
      %v2729 = vunpack.c.0.s8 %v2728
      %v2730 = vlaneseq
      %v2731 = vshrl.u32 %v2730, 7
      %v2732 = vsub.s32 %v2729, %v2731
      %v2733 = vrot.slane %v2330, %v2732
      %v2734 = vcombine.low %v2338, %v2337
      %v2735 = vcombine.low %v2339, %v2347
      %v2737 = vunpack.c.l.s4 1983009808
      %v2738 = vunpack.c.0.s8 %v2737
      %v2739 = vlaneseq
      %v2740 = vshrl.u32 %v2739, 7
      %v2741 = vsub.s32 %v2738, %v2740
      %v2742 = vrot.slane %v2734, %v2741
      %v2744 = vunpack.c.l.s4 1983009808
      %v2745 = vunpack.c.0.s8 %v2744
      %v2746 = vlaneseq
      %v2747 = vshrl.u32 %v2746, 7
      %v2748 = vsub.s32 %v2745, %v2747
      %v2749 = vrot.slane %v2735, %v2748
      %v2750 = vcombine.low %v2742, %v2749
      %v2751 = vcombine.low %v2355, %v2354
      %v2752 = vcombine.low %v2356, %v2363
      %v2754 = vunpack.c.l.s4 1983009808
      %v2755 = vunpack.c.0.s8 %v2754
      %v2756 = vlaneseq
      %v2757 = vshrl.u32 %v2756, 7
      %v2758 = vsub.s32 %v2755, %v2757
      %v2759 = vrot.slane %v2751, %v2758
      %v2761 = vunpack.c.l.s4 1983009808
      %v2762 = vunpack.c.0.s8 %v2761
      %v2763 = vlaneseq
      %v2764 = vshrl.u32 %v2763, 7
      %v2765 = vsub.s32 %v2762, %v2764
      %v2766 = vrot.slane %v2752, %v2765
      %v2767 = vcombine.low %v2759, %v2766
      %v2769 = vunpack.c.l.s4 1983009808
      %v2770 = vunpack.c.0.s8 %v2769
      %v2771 = vlaneseq
      %v2772 = vshrl.u32 %v2771, 7
      %v2773 = vsub.s32 %v2770, %v2772
      %v2774 = vrot.slane %v2364, %v2773
      %v2805 = vsel %vm406, %v2381, 0.0
      %v2806 = vsel %vm407, %v2398, 0.0
      %v2807 = vsel %vm408, %v2405, 0.0
      %v2808 = vsel %vm409, %v2422, 0.0
      %v2809 = vsel %vm410, %v2439, 0.0
      %v2810 = vsel %vm411, %v2446, 0.0
      %v2811 = vsel %vm412, %v2463, 0.0
      %v2812 = vsel %vm413, %v2480, 0.0
      %v2813 = vsel %vm414, %v2487, 0.0
      %v2814 = vsel %vm415, %v2504, 0.0
      %v2815 = vsel %vm416, %v2521, 0.0
      %v2816 = vsel %vm417, %v2528, 0.0
      %v2817 = vsel %vm418, %v2545, 0.0
      %v2818 = vsel %vm419, %v2562, 0.0
      %v2819 = vsel %vm420, %v2569, 0.0
      %v2820 = vsel %vm421, %v2586, 0.0
      %v2821 = vsel %vm422, %v2603, 0.0
      %v2822 = vsel %vm423, %v2610, 0.0
      %v2823 = vsel %vm424, %v2627, 0.0
      %v2824 = vsel %vm425, %v2644, 0.0
      %v2825 = vsel %vm426, %v2651, 0.0
      %v2826 = vsel %vm427, %v2668, 0.0
      %v2827 = vsel %vm428, %v2685, 0.0
      %v2828 = vsel %vm429, %v2692, 0.0
      %v2829 = vsel %vm430, %v2709, 0.0
      %v2830 = vsel %vm431, %v2726, 0.0
      %v2831 = vsel %vm432, %v2733, 0.0
      %v2832 = vsel %vm433, %v2750, 0.0
      %v2833 = vsel %vm434, %v2767, 0.0
      %v2834 = vsel %vm435, %v2774, 0.0
      %v2835 = vpack.c.bf16 %v2806, %v2805
      %v2836 = vpack.c.bf16 %v2807, %v2807
      %v2837 = vpack.c.bf16 %v2809, %v2808
      %v2838 = vpack.c.bf16 %v2810, %v2810
      %v2839 = vpack.c.bf16 %v2812, %v2811
      %v2840 = vpack.c.bf16 %v2813, %v2813
      %v2841 = vpack.c.bf16 %v2815, %v2814
      %v2842 = vpack.c.bf16 %v2816, %v2816
      %v2843 = vpack.c.bf16 %v2818, %v2817
      %v2844 = vpack.c.bf16 %v2819, %v2819
      %v2845 = vpack.c.bf16 %v2821, %v2820
      %v2846 = vpack.c.bf16 %v2822, %v2822
      %v2847 = vpack.c.bf16 %v2824, %v2823
      %v2848 = vpack.c.bf16 %v2825, %v2825
      %v2849 = vpack.c.bf16 %v2827, %v2826
      %v2850 = vpack.c.bf16 %v2828, %v2828
      %v2851 = vpack.c.bf16 %v2830, %v2829
      %v2852 = vpack.c.bf16 %v2831, %v2831
      %v2853 = vpack.c.bf16 %v2833, %v2832
      %v2854 = vpack.c.bf16 %v2834, %v2834
      %vm2855 = vcmask 523264
      %2856 = vst.msk [vmem:[#allocation2] sm:$0xff] %vm2855, %v2835
      %2857 = vst.msk [vmem:[#allocation2 + $0x28] sm:$0xff] %vm2855, %v2837
      %2858 = vst.msk [vmem:[#allocation2 + $0x50] sm:$0xff] %vm2855, %v2839
      %2859 = vst.msk [vmem:[#allocation2 + $0x78] sm:$0xff] %vm2855, %v2841
      %2860 = vst.msk [vmem:[#allocation2 + $0xa0] sm:$0xff] %vm2855, %v2843
      %2861 = vst.msk [vmem:[#allocation2 + $0xc8] sm:$0xff] %vm2855, %v2845
      %2862 = vst.msk [vmem:[#allocation2 + $0xf0] sm:$0xff] %vm2855, %v2847
      %2863 = vst.msk [vmem:[#allocation2 + $0x118] sm:$0xff] %vm2855, %v2849
      %vm2864 = vsmask.f32 7424
      %v2866 = vshrl.u32 %v2835, 16
      %v2868 = vshll.u32 %v2835, 16
      %v2870 = vrot.slane %v2868, 1
      %v2871 = vor.u32 %v2866, %v2870
      %v2873 = vshll.u32 %v2836, 16
      %v2875 = vrot.slane %v2873, 1
      %v2876 = vsel %vm2864, %v2871, %v2875
      %v2878 = vshrl.u32 %v2837, 16
      %v2880 = vshll.u32 %v2837, 16
      %v2882 = vrot.slane %v2880, 1
      %v2883 = vor.u32 %v2878, %v2882
      %v2885 = vshll.u32 %v2838, 16
      %v2887 = vrot.slane %v2885, 1
      %v2888 = vsel %vm2864, %v2883, %v2887
      %v2890 = vshrl.u32 %v2839, 16
      %v2892 = vshll.u32 %v2839, 16
      %v2894 = vrot.slane %v2892, 1
      %v2895 = vor.u32 %v2890, %v2894
      %v2897 = vshll.u32 %v2840, 16
      %v2899 = vrot.slane %v2897, 1
      %v2900 = vsel %vm2864, %v2895, %v2899
      %v2902 = vshrl.u32 %v2841, 16
      %v2904 = vshll.u32 %v2841, 16
      %v2906 = vrot.slane %v2904, 1
      %v2907 = vor.u32 %v2902, %v2906
      %v2909 = vshll.u32 %v2842, 16
      %v2911 = vrot.slane %v2909, 1
      %v2912 = vsel %vm2864, %v2907, %v2911
      %v2914 = vshrl.u32 %v2843, 16
      %v2916 = vshll.u32 %v2843, 16
      %v2918 = vrot.slane %v2916, 1
      %v2919 = vor.u32 %v2914, %v2918
      %v2921 = vshll.u32 %v2844, 16
      %v2923 = vrot.slane %v2921, 1
      %v2924 = vsel %vm2864, %v2919, %v2923
      %v2926 = vshrl.u32 %v2845, 16
      %v2928 = vshll.u32 %v2845, 16
      %v2930 = vrot.slane %v2928, 1
      %v2931 = vor.u32 %v2926, %v2930
      %v2933 = vshll.u32 %v2846, 16
      %v2935 = vrot.slane %v2933, 1
      %v2936 = vsel %vm2864, %v2931, %v2935
      %v2938 = vshrl.u32 %v2847, 16
      %v2940 = vshll.u32 %v2847, 16
      %v2942 = vrot.slane %v2940, 1
      %v2943 = vor.u32 %v2938, %v2942
      %v2945 = vshll.u32 %v2848, 16
      %v2947 = vrot.slane %v2945, 1
      %v2948 = vsel %vm2864, %v2943, %v2947
      %v2950 = vshrl.u32 %v2849, 16
      %v2952 = vshll.u32 %v2849, 16
      %v2954 = vrot.slane %v2952, 1
      %v2955 = vor.u32 %v2950, %v2954
      %v2957 = vshll.u32 %v2850, 16
      %v2959 = vrot.slane %v2957, 1
      %v2960 = vsel %vm2864, %v2955, %v2959
      %2961 = vrot.lane.b32.xlu0 %v2876, 64
      %v2962 = vpop.permute.xlu0 %2961
      %2963 = vrot.lane.b32.xlu0 %v2888, 64
      %v2964 = vpop.permute.xlu0 %2963
      %2965 = vrot.lane.b32.xlu0 %v2900, 64
      %v2966 = vpop.permute.xlu0 %2965
      %2967 = vrot.lane.b32.xlu0 %v2912, 64
      %v2968 = vpop.permute.xlu0 %2967
      %2969 = vrot.lane.b32.xlu0 %v2924, 64
      %v2970 = vpop.permute.xlu0 %2969
      %2971 = vrot.lane.b32.xlu0 %v2936, 64
      %v2972 = vpop.permute.xlu0 %2971
      %2973 = vrot.lane.b32.xlu0 %v2948, 64
      %v2974 = vpop.permute.xlu0 %2973
      %2975 = vrot.lane.b32.xlu0 %v2960, 64
      %v2976 = vpop.permute.xlu0 %2975
      %vm2985 = vcmask 1048064
      %2986 = vst.msk [vmem:[#allocation2] sm:$0xff] %vm2985, %v2962
      %2987 = vst.msk [vmem:[#allocation2 + $0x28] sm:$0xff] %vm2985, %v2964
      %2988 = vst.msk [vmem:[#allocation2 + $0x50] sm:$0xff] %vm2985, %v2966
      %2989 = vst.msk [vmem:[#allocation2 + $0x78] sm:$0xff] %vm2985, %v2968
      %2990 = vst.msk [vmem:[#allocation2 + $0xa0] sm:$0xff] %vm2985, %v2970
      %2991 = vst.msk [vmem:[#allocation2 + $0xc8] sm:$0xff] %vm2985, %v2972
      %2992 = vst.msk [vmem:[#allocation2 + $0xf0] sm:$0xff] %vm2985, %v2974
      %2993 = vst.msk [vmem:[#allocation2 + $0x118] sm:$0xff] %vm2985, %v2976
      %vm3010 = vcmask 1046528
      %v3011 = vrot.slane %v2835, 1
      %v3012 = vrot.slane %v2836, 1
      %v3013 = vsel %vm3010, %v3011, %v3012
      %v3014 = vrot.slane %v2837, 1
      %v3015 = vrot.slane %v2838, 1
      %v3016 = vsel %vm3010, %v3014, %v3015
      %v3017 = vrot.slane %v2839, 1
      %v3018 = vrot.slane %v2840, 1
      %v3019 = vsel %vm3010, %v3017, %v3018
      %v3020 = vrot.slane %v2841, 1
      %v3021 = vrot.slane %v2842, 1
      %v3022 = vsel %vm3010, %v3020, %v3021
      %v3023 = vrot.slane %v2843, 1
      %v3024 = vrot.slane %v2844, 1
      %v3025 = vsel %vm3010, %v3023, %v3024
      %v3026 = vrot.slane %v2845, 1
      %v3027 = vrot.slane %v2846, 1
      %v3028 = vsel %vm3010, %v3026, %v3027
      %v3029 = vrot.slane %v2847, 1
      %v3030 = vrot.slane %v2848, 1
      %v3031 = vsel %vm3010, %v3029, %v3030
      %v3032 = vrot.slane %v2849, 1
      %v3033 = vrot.slane %v2850, 1
      %v3034 = vsel %vm3010, %v3032, %v3033
      %3043 = vst.msk [vmem:[#allocation2 + $0x8] sm:$0xff] %vm2855, %v3013
      %3044 = vst.msk [vmem:[#allocation2 + $0x30] sm:$0xff] %vm2855, %v3016
      %3045 = vst.msk [vmem:[#allocation2 + $0x58] sm:$0xff] %vm2855, %v3019
      %3046 = vst.msk [vmem:[#allocation2 + $0x80] sm:$0xff] %vm2855, %v3022
      %3047 = vst.msk [vmem:[#allocation2 + $0xa8] sm:$0xff] %vm2855, %v3025
      %3048 = vst.msk [vmem:[#allocation2 + $0xd0] sm:$0xff] %vm2855, %v3028
      %3049 = vst.msk [vmem:[#allocation2 + $0xf8] sm:$0xff] %vm2855, %v3031
      %3050 = vst.msk [vmem:[#allocation2 + $0x120] sm:$0xff] %vm2855, %v3034
      %3052 = vrot.lane.b32.xlu0 %v2837, 64
      %v3053 = vpop.permute.xlu0 %3052
      %3054 = vrot.lane.b32.xlu0 %v2839, 64
      %v3055 = vpop.permute.xlu0 %3054
      %3056 = vrot.lane.b32.xlu0 %v2841, 64
      %v3057 = vpop.permute.xlu0 %3056
      %3058 = vrot.lane.b32.xlu0 %v2843, 64
      %v3059 = vpop.permute.xlu0 %3058
      %3060 = vrot.lane.b32.xlu0 %v2845, 64
      %v3061 = vpop.permute.xlu0 %3060
      %3062 = vrot.lane.b32.xlu0 %v2847, 64
      %v3063 = vpop.permute.xlu0 %3062
      %3064 = vrot.lane.b32.xlu0 %v2849, 64
      %v3065 = vpop.permute.xlu0 %3064
      %3066 = vrot.lane.b32.xlu0 %v2851, 64
      %v3067 = vpop.permute.xlu0 %3066
      %3076 = vst.msk [vmem:[#allocation2 + $0x8] sm:$0xff] %vm2985, %v3053
      %3077 = vst.msk [vmem:[#allocation2 + $0x30] sm:$0xff] %vm2985, %v3055
      %3078 = vst.msk [vmem:[#allocation2 + $0x58] sm:$0xff] %vm2985, %v3057
      %3079 = vst.msk [vmem:[#allocation2 + $0x80] sm:$0xff] %vm2985, %v3059
      %3080 = vst.msk [vmem:[#allocation2 + $0xa8] sm:$0xff] %vm2985, %v3061
      %3081 = vst.msk [vmem:[#allocation2 + $0xd0] sm:$0xff] %vm2985, %v3063
      %3082 = vst.msk [vmem:[#allocation2 + $0xf8] sm:$0xff] %vm2985, %v3065
      %3083 = vst.msk [vmem:[#allocation2 + $0x120] sm:$0xff] %vm2985, %v3067
      %v3085 = vshrl.u32 %v2851, 16
      %v3087 = vshll.u32 %v2851, 16
      %v3089 = vrot.slane %v3087, 1
      %v3090 = vor.u32 %v3085, %v3089
      %v3092 = vshll.u32 %v2852, 16
      %v3094 = vrot.slane %v3092, 1
      %v3095 = vsel %vm2864, %v3090, %v3094
      %3104 = vst.msk [vmem:[#allocation2 + $0x10] sm:$0xff] %vm2855, %v2888
      %3105 = vst.msk [vmem:[#allocation2 + $0x38] sm:$0xff] %vm2855, %v2900
      %3106 = vst.msk [vmem:[#allocation2 + $0x60] sm:$0xff] %vm2855, %v2912
      %3107 = vst.msk [vmem:[#allocation2 + $0x88] sm:$0xff] %vm2855, %v2924
      %3108 = vst.msk [vmem:[#allocation2 + $0xb0] sm:$0xff] %vm2855, %v2936
      %3109 = vst.msk [vmem:[#allocation2 + $0xd8] sm:$0xff] %vm2855, %v2948
      %3110 = vst.msk [vmem:[#allocation2 + $0x100] sm:$0xff] %vm2855, %v2960
      %3111 = vst.msk [vmem:[#allocation2 + $0x128] sm:$0xff] %vm2855, %v3095
      %v3113 = vrot.slane %v2851, 1
      %v3114 = vrot.slane %v2852, 1
      %v3115 = vsel %vm3010, %v3113, %v3114
      %3116 = vrot.lane.b32.xlu0 %v3016, 64
      %v3117 = vpop.permute.xlu0 %3116
      %3118 = vrot.lane.b32.xlu0 %v3019, 64
      %v3119 = vpop.permute.xlu0 %3118
      %3120 = vrot.lane.b32.xlu0 %v3022, 64
      %v3121 = vpop.permute.xlu0 %3120
      %3122 = vrot.lane.b32.xlu0 %v3025, 64
      %v3123 = vpop.permute.xlu0 %3122
      %3124 = vrot.lane.b32.xlu0 %v3028, 64
      %v3125 = vpop.permute.xlu0 %3124
      %3126 = vrot.lane.b32.xlu0 %v3031, 64
      %v3127 = vpop.permute.xlu0 %3126
      %3128 = vrot.lane.b32.xlu0 %v3034, 64
      %v3129 = vpop.permute.xlu0 %3128
      %3130 = vrot.lane.b32.xlu0 %v3115, 64
      %v3131 = vpop.permute.xlu0 %3130
      %3140 = vst.msk [vmem:[#allocation2 + $0x10] sm:$0xff] %vm2985, %v3117
      %3141 = vst.msk [vmem:[#allocation2 + $0x38] sm:$0xff] %vm2985, %v3119
      %3142 = vst.msk [vmem:[#allocation2 + $0x60] sm:$0xff] %vm2985, %v3121
      %3143 = vst.msk [vmem:[#allocation2 + $0x88] sm:$0xff] %vm2985, %v3123
      %3144 = vst.msk [vmem:[#allocation2 + $0xb0] sm:$0xff] %vm2985, %v3125
      %3145 = vst.msk [vmem:[#allocation2 + $0xd8] sm:$0xff] %vm2985, %v3127
      %3146 = vst.msk [vmem:[#allocation2 + $0x100] sm:$0xff] %vm2985, %v3129
      %3147 = vst.msk [vmem:[#allocation2 + $0x128] sm:$0xff] %vm2985, %v3131
      %3148 = vst.msk [vmem:[#allocation2 + $0x18] sm:$0xff] %vm2855, %v2839
      %3149 = vst.msk [vmem:[#allocation2 + $0x40] sm:$0xff] %vm2855, %v2841
      %3150 = vst.msk [vmem:[#allocation2 + $0x68] sm:$0xff] %vm2855, %v2843
      %3151 = vst.msk [vmem:[#allocation2 + $0x90] sm:$0xff] %vm2855, %v2845
      %3152 = vst.msk [vmem:[#allocation2 + $0xb8] sm:$0xff] %vm2855, %v2847
      %3153 = vst.msk [vmem:[#allocation2 + $0xe0] sm:$0xff] %vm2855, %v2849
      %3154 = vst.msk [vmem:[#allocation2 + $0x108] sm:$0xff] %vm2855, %v2851
      %3155 = vst.msk [vmem:[#allocation2 + $0x130] sm:$0xff] %vm2855, %v2853
      %v3157 = vshrl.u32 %v2853, 16
      %v3159 = vshll.u32 %v2853, 16
      %v3161 = vrot.slane %v3159, 1
      %v3162 = vor.u32 %v3157, %v3161
      %v3164 = vshll.u32 %v2854, 16
      %v3166 = vrot.slane %v3164, 1
      %v3167 = vsel %vm2864, %v3162, %v3166
      %3168 = vrot.lane.b32.xlu0 %v3095, 64
      %v3169 = vpop.permute.xlu0 %3168
      %3170 = vrot.lane.b32.xlu0 %v3167, 64
      %v3171 = vpop.permute.xlu0 %3170
      %3174 = vst.msk [vmem:[#allocation2 + $0x18] sm:$0xff] %vm2985, %v2966
      %3175 = vst.msk [vmem:[#allocation2 + $0x40] sm:$0xff] %vm2985, %v2968
      %3176 = vst.msk [vmem:[#allocation2 + $0x68] sm:$0xff] %vm2985, %v2970
      %3177 = vst.msk [vmem:[#allocation2 + $0x90] sm:$0xff] %vm2985, %v2972
      %3178 = vst.msk [vmem:[#allocation2 + $0xb8] sm:$0xff] %vm2985, %v2974
      %3179 = vst.msk [vmem:[#allocation2 + $0xe0] sm:$0xff] %vm2985, %v2976
      %3180 = vst.msk [vmem:[#allocation2 + $0x108] sm:$0xff] %vm2985, %v3169
      %3181 = vst.msk [vmem:[#allocation2 + $0x130] sm:$0xff] %vm2985, %v3171
      %v3184 = vrot.slane %v2853, 1
      %v3185 = vrot.slane %v2854, 1
      %v3186 = vsel %vm3010, %v3184, %v3185
      %3189 = vst.msk [vmem:[#allocation2 + $0x20] sm:$0xff] %vm2855, %v3019
      %3190 = vst.msk [vmem:[#allocation2 + $0x48] sm:$0xff] %vm2855, %v3022
      %3191 = vst.msk [vmem:[#allocation2 + $0x70] sm:$0xff] %vm2855, %v3025
      %3192 = vst.msk [vmem:[#allocation2 + $0x98] sm:$0xff] %vm2855, %v3028
      %3193 = vst.msk [vmem:[#allocation2 + $0xc0] sm:$0xff] %vm2855, %v3031
      %3194 = vst.msk [vmem:[#allocation2 + $0xe8] sm:$0xff] %vm2855, %v3034
      %3195 = vst.msk [vmem:[#allocation2 + $0x110] sm:$0xff] %vm2855, %v3115
      %3196 = vst.msk [vmem:[#allocation2 + $0x138] sm:$0xff] %vm2855, %v3186
      %v3197 = vld [vmem:[#allocation2] sm:$0xff]
      %v3198 = vld [vmem:[#allocation2 + $0x8] sm:$0xff]
      %v3199 = vld [vmem:[#allocation2 + $0x10] sm:$0xff]
      %v3200 = vld [vmem:[#allocation2 + $0x18] sm:$0xff]
      %v3201 = vld [vmem:[#allocation2 + $0x20] sm:$0xff]
      %v3202 = vld [vmem:[#allocation2 + $0x28] sm:$0xff]
      %v3203 = vld [vmem:[#allocation2 + $0x30] sm:$0xff]
      %v3204 = vld [vmem:[#allocation2 + $0x38] sm:$0xff]
      %v3205 = vld [vmem:[#allocation2 + $0x40] sm:$0xff]
      %v3206 = vld [vmem:[#allocation2 + $0x48] sm:$0xff]
      %v3207 = vld [vmem:[#allocation2 + $0x50] sm:$0xff]
      %v3208 = vld [vmem:[#allocation2 + $0x58] sm:$0xff]
      %v3209 = vld [vmem:[#allocation2 + $0x60] sm:$0xff]
      %v3210 = vld [vmem:[#allocation2 + $0x68] sm:$0xff]
      %v3211 = vld [vmem:[#allocation2 + $0x70] sm:$0xff]
      %v3212 = vld [vmem:[#allocation2 + $0x78] sm:$0xff]
      %v3213 = vld [vmem:[#allocation2 + $0x80] sm:$0xff]
      %v3214 = vld [vmem:[#allocation2 + $0x88] sm:$0xff]
      %v3215 = vld [vmem:[#allocation2 + $0x90] sm:$0xff]
      %v3216 = vld [vmem:[#allocation2 + $0x98] sm:$0xff]
      %v3217 = vld [vmem:[#allocation2 + $0xa0] sm:$0xff]
      %v3218 = vld [vmem:[#allocation2 + $0xa8] sm:$0xff]
      %v3219 = vld [vmem:[#allocation2 + $0xb0] sm:$0xff]
      %v3220 = vld [vmem:[#allocation2 + $0xb8] sm:$0xff]
      %v3221 = vld [vmem:[#allocation2 + $0xc0] sm:$0xff]
      %v3222 = vld [vmem:[#allocation2 + $0xc8] sm:$0xff]
      %v3223 = vld [vmem:[#allocation2 + $0xd0] sm:$0xff]
      %v3224 = vld [vmem:[#allocation2 + $0xd8] sm:$0xff]
      %v3225 = vld [vmem:[#allocation2 + $0xe0] sm:$0xff]
      %v3226 = vld [vmem:[#allocation2 + $0xe8] sm:$0xff]
      %v3227 = vld [vmem:[#allocation2 + $0xf0] sm:$0xff]
      %v3228 = vld [vmem:[#allocation2 + $0xf8] sm:$0xff]
      %v3229 = vld [vmem:[#allocation2 + $0x100] sm:$0xff]
      %v3230 = vld [vmem:[#allocation2 + $0x108] sm:$0xff]
      %v3231 = vld [vmem:[#allocation2 + $0x110] sm:$0xff]
      %v3232 = vld [vmem:[#allocation2 + $0x118] sm:$0xff]
      %v3233 = vld [vmem:[#allocation2 + $0x120] sm:$0xff]
      %v3234 = vld [vmem:[#allocation2 + $0x128] sm:$0xff]
      %v3235 = vld [vmem:[#allocation2 + $0x130] sm:$0xff]
      %v3236 = vld [vmem:[#allocation2 + $0x138] sm:$0xff]
      %v3238 = vlaneseq
      %v3239 = vshrl.u32 %v3238, 7
      %v3240 = vsub.s32 0, %v3239
      %v3241 = vrot.slane %v513, %v3240
      %v3315 = vunpack.c.l.b16 %v441
      %v3316 = vunpack.c.l.b16 %v442
      %v3317 = vunpack.c.l.b16 %v443
      %v3318 = vunpack.c.l.b16 %v444
      %v3319 = vunpack.c.l.b16 %v445
      %v3320 = vunpack.c.l.b16 %v446
      %v3321 = vunpack.c.l.b16 %v447
      %v3322 = vunpack.c.l.b16 %v448
      %v3323 = vunpack.c.l.b16 %v449
      %v3324 = vunpack.c.l.b16 %v450
      %v3325 = vunpack.c.l.b16 %v451
      %v3326 = vunpack.c.l.b16 %v452
      %v3327 = vunpack.c.l.b16 %v453
      %v3328 = vunpack.c.l.b16 %v454
      %v3329 = vunpack.c.l.b16 %v455
      %v3330 = vunpack.c.l.b16 %v456
      %v3331 = vunpack.c.l.b16 %v457
      %v3332 = vunpack.c.l.b16 %v458
      %v3333 = vunpack.c.l.b16 %v459
      %v3334 = vunpack.c.l.b16 %v460
      %v3335 = vunpack.c.l.b16 %v461
      %v3336 = vunpack.c.l.b16 %v462
      %v3337 = vunpack.c.l.b16 %v463
      %v3338 = vunpack.c.l.b16 %v464
      %v3339 = vunpack.c.l.b16 %v465
      %v3340 = vunpack.c.l.b16 %v466
      %v3341 = vunpack.c.l.b16 %v467
      %v3342 = vunpack.c.l.b16 %v468
      %v3343 = vunpack.c.l.b16 %v469
      %v3344 = vunpack.c.l.b16 %v470
      %v3345 = vunpack.c.l.b16 %v471
      %v3346 = vunpack.c.l.b16 %v472
      %v3347 = vunpack.c.l.b16 %v473
      %v3348 = vunpack.c.l.b16 %v474
      %v3349 = vunpack.c.l.b16 %v475
      %v3350 = vunpack.c.l.b16 %v476
      %v3351 = vunpack.c.l.b16 %v477
      %v3352 = vunpack.c.l.b16 %v478
      %v3353 = vunpack.c.l.b16 %v479
      %v3354 = vunpack.c.l.b16 %v480
      %v3355 = vunpack.c.l.b16 %v481
      %v3356 = vunpack.c.l.b16 %v482
      %v3357 = vunpack.c.l.b16 %v483
      %v3358 = vunpack.c.l.b16 %v484
      %v3359 = vunpack.c.l.b16 %v485
      %v3360 = vunpack.c.l.b16 %v486
      %v3361 = vunpack.c.l.b16 %v487
      %v3362 = vunpack.c.l.b16 %v488
      %v3363 = vunpack.c.l.b16 %v489
      %v3364 = vunpack.c.l.b16 %v490
      %v3365 = vunpack.c.l.b16 %v491
      %v3366 = vunpack.c.l.b16 %v492
      %v3367 = vunpack.c.l.b16 %v493
      %v3368 = vunpack.c.l.b16 %v494
      %v3369 = vunpack.c.l.b16 %v495
      %v3370 = vunpack.c.l.b16 %v496
      %v3371 = vunpack.c.l.b16 %v497
      %v3372 = vunpack.c.l.b16 %v498
      %v3373 = vunpack.c.l.b16 %v499
      %v3374 = vunpack.c.l.b16 %v500
      %v3375 = vunpack.c.l.b16 %v501
      %v3376 = vunpack.c.l.b16 %v502
      %v3377 = vunpack.c.l.b16 %v503
      %v3378 = vunpack.c.l.b16 %v504
      %v3379 = vunpack.c.l.b16 %v505
      %v3380 = vunpack.c.l.b16 %v506
      %v3381 = vunpack.c.l.b16 %v507
      %v3382 = vunpack.c.l.b16 %v508
      %v3383 = vunpack.c.l.b16 %v509
      %v3384 = vunpack.c.l.b16 %v510
      %v3385 = vunpack.c.l.b16 %v511
      %v3386 = vunpack.c.l.b16 %v512
      %v3387 = vpack.c.b16 %v3316, %v3315
      %v3388 = vpack.c.b16 %v3318, %v3317
      %v3389 = vpack.c.b16 %v3320, %v3319
      %v3390 = vpack.c.b16 %v3322, %v3321
      %v3391 = vpack.c.b16 %v3324, %v3323
      %v3392 = vpack.c.b16 %v3326, %v3325
      %v3393 = vpack.c.b16 %v3328, %v3327
      %v3394 = vpack.c.b16 %v3330, %v3329
      %v3395 = vpack.c.b16 %v3332, %v3331
      %v3396 = vpack.c.b16 %v3334, %v3333
      %v3397 = vpack.c.b16 %v3336, %v3335
      %v3398 = vpack.c.b16 %v3338, %v3337
      %v3399 = vpack.c.b16 %v3340, %v3339
      %v3400 = vpack.c.b16 %v3342, %v3341
      %v3401 = vpack.c.b16 %v3344, %v3343
      %v3402 = vpack.c.b16 %v3346, %v3345
      %v3403 = vpack.c.b16 %v3348, %v3347
      %v3404 = vpack.c.b16 %v3350, %v3349
      %v3405 = vpack.c.b16 %v3352, %v3351
      %v3406 = vpack.c.b16 %v3354, %v3353
      %v3407 = vpack.c.b16 %v3356, %v3355
      %v3408 = vpack.c.b16 %v3358, %v3357
      %v3409 = vpack.c.b16 %v3360, %v3359
      %v3410 = vpack.c.b16 %v3362, %v3361
      %v3411 = vpack.c.b16 %v3364, %v3363
      %v3412 = vpack.c.b16 %v3366, %v3365
      %v3413 = vpack.c.b16 %v3368, %v3367
      %v3414 = vpack.c.b16 %v3370, %v3369
      %v3415 = vpack.c.b16 %v3372, %v3371
      %v3416 = vpack.c.b16 %v3374, %v3373
      %v3417 = vpack.c.b16 %v3376, %v3375
      %v3418 = vpack.c.b16 %v3378, %v3377
      %v3419 = vpack.c.b16 %v3380, %v3379
      %v3420 = vpack.c.b16 %v3382, %v3381
      %v3421 = vpack.c.b16 %v3384, %v3383
      %v3422 = vpack.c.b16 %v3386, %v3385
      %v3460 = vsel %vm2855, %v3201, 0
      %v3463 = vsel %vm2855, %v3206, 0
      %v3466 = vsel %vm2855, %v3211, 0
      %v3469 = vsel %vm2855, %v3216, 0
      %v3472 = vsel %vm2855, %v3221, 0
      %v3475 = vsel %vm2855, %v3226, 0
      %v3478 = vsel %vm2855, %v3231, 0
      %v3481 = vsel %vm2855, %v3236, 0
      %3483 = vmatprep.subr.bf16.mxu0 0
      %3484 = vmatpush1.bf16.msra.mxu0 %v3387
      %3485 = vmatprep.subr.bf16.mxu0 0
      %3486 = vmatpush1.bf16.msra.mxu0 %v3388
      %3487 = vmatprep.subr.bf16.mxu0 0
      %3488 = vmatpush1.bf16.msra.mxu0 %v3389
      %3489 = vmatprep.subr.bf16.mxu0 0
      %3490 = vmatpush1.bf16.msra.mxu0 %v3390
      %3491 = vmatprep.subr.bf16.mxu0 0
      %3492 = vmatpush1.bf16.msra.mxu0 %v3391
      %3493 = vmatprep.subr.bf16.mxu0 0
      %3494 = vmatpush1.bf16.msra.mxu0 %v3392
      %3495 = vmatprep.subr.bf16.mxu0 0
      %3496 = vmatpush1.bf16.msra.mxu0 %v3393
      %3497 = vmatprep.subr.bf16.mxu0 0
      %3498 = vmatpush1.bf16.msra.mxu0 %v3394
      %3499 = vmatprep.subr.bf16.mxu0 0
      %3500 = vmatpush1.bf16.msra.mxu0 %v3395
      %3501 = vmatprep.subr.bf16.mxu0 0
      %3502 = vmatpush1.bf16.msra.mxu0 %v3396
      %3503 = vmatprep.subr.bf16.mxu0 0
      %3504 = vmatpush1.bf16.msra.mxu0 %v3397
      %3505 = vmatprep.subr.bf16.mxu0 0
      %3506 = vmatpush1.bf16.msra.mxu0 %v3398
      %3507 = vmatprep.subr.bf16.mxu0 0
      %3508 = vmatpush1.bf16.msra.mxu0 %v3399
      %3509 = vmatprep.subr.bf16.mxu0 0
      %3510 = vmatpush1.bf16.msra.mxu0 %v3400
      %3511 = vmatprep.subr.bf16.mxu0 0
      %3512 = vmatpush1.bf16.msra.mxu0 %v3401
      %3513 = vmatprep.subr.bf16.mxu0 0
      %3514 = vmatpush1.bf16.msra.mxu0 %v3402
      %3515 = vmatprep.mubr.bf16.mxu0 %v3198
      %3516 = vmatmul.mubr.bf16.gmra.mrb[0].mxu0 %v3197
      %v3517 = vpop.f32.mrb[0].mxu0
      %v3518 = vadd.f32 %v3241, %v3517
      %v3519 = vpop.f32.mrb[0].mxu0
      %v3520 = vpop.f32.mrb[0].mxu0
      %v3521 = vadd.f32 %v3241, %v3520
      %v3522 = vpop.f32.mrb[0].mxu0
      %3523 = vmatprep.mubr.bf16.mxu0 %v3203
      %3524 = vmatmul.mubr.bf16.gmra.mrb[0].mxu0 %v3202
      %v3525 = vpop.f32.mrb[0].mxu0
      %v3526 = vadd.f32 %v3241, %v3525
      %v3527 = vpop.f32.mrb[0].mxu0
      %v3528 = vpop.f32.mrb[0].mxu0
      %v3529 = vadd.f32 %v3241, %v3528
      %v3530 = vpop.f32.mrb[0].mxu0
      %3531 = vmatprep.mubr.bf16.mxu0 %v3208
      %3532 = vmatmul.mubr.bf16.gmra.mrb[0].mxu0 %v3207
      %v3533 = vpop.f32.mrb[0].mxu0
      %v3534 = vadd.f32 %v3241, %v3533
      %v3535 = vpop.f32.mrb[0].mxu0
      %v3536 = vpop.f32.mrb[0].mxu0
      %v3537 = vadd.f32 %v3241, %v3536
      %v3538 = vpop.f32.mrb[0].mxu0
      %3539 = vmatprep.mubr.bf16.mxu0 %v3213
      %3540 = vmatmul.mubr.bf16.gmra.mrb[0].mxu0 %v3212
      %v3541 = vpop.f32.mrb[0].mxu0
      %v3542 = vadd.f32 %v3241, %v3541
      %v3543 = vpop.f32.mrb[0].mxu0
      %v3544 = vpop.f32.mrb[0].mxu0
      %v3545 = vadd.f32 %v3241, %v3544
      %v3546 = vpop.f32.mrb[0].mxu0
      %3547 = vmatprep.mubr.bf16.mxu0 %v3218
      %3548 = vmatmul.mubr.bf16.gmra.mrb[0].mxu0 %v3217
      %v3549 = vpop.f32.mrb[0].mxu0
      %v3550 = vadd.f32 %v3241, %v3549
      %v3551 = vpop.f32.mrb[0].mxu0
      %v3552 = vpop.f32.mrb[0].mxu0
      %v3553 = vadd.f32 %v3241, %v3552
      %v3554 = vpop.f32.mrb[0].mxu0
      %3555 = vmatprep.mubr.bf16.mxu0 %v3223
      %3556 = vmatmul.mubr.bf16.gmra.mrb[0].mxu0 %v3222
      %v3557 = vpop.f32.mrb[0].mxu0
      %v3558 = vadd.f32 %v3241, %v3557
      %v3559 = vpop.f32.mrb[0].mxu0
      %v3560 = vpop.f32.mrb[0].mxu0
      %v3561 = vadd.f32 %v3241, %v3560
      %v3562 = vpop.f32.mrb[0].mxu0
      %3563 = vmatprep.mubr.bf16.mxu0 %v3228
      %3564 = vmatmul.mubr.bf16.gmra.mrb[0].mxu0 %v3227
      %v3565 = vpop.f32.mrb[0].mxu0
      %v3566 = vadd.f32 %v3241, %v3565
      %v3567 = vpop.f32.mrb[0].mxu0
      %v3568 = vpop.f32.mrb[0].mxu0
      %v3569 = vadd.f32 %v3241, %v3568
      %v3570 = vpop.f32.mrb[0].mxu0
      %3571 = vmatprep.mubr.bf16.mxu0 %v3233
      %3572 = vmatmul.mubr.bf16.gmra.mrb[0].mxu0 %v3232
      %v3573 = vpop.f32.mrb[0].mxu0
      %v3574 = vadd.f32 %v3241, %v3573
      %v3575 = vpop.f32.mrb[0].mxu0
      %v3576 = vpop.f32.mrb[0].mxu0
      %v3577 = vadd.f32 %v3241, %v3576
      %v3578 = vpop.f32.mrb[0].mxu0
      %3579 = vdwg.mxu0
      %3580 = vmatprep.subr.bf16.mxu0 0
      %3581 = vmatpush1.bf16.msra.mxu0 %v3403
      %3582 = vmatprep.subr.bf16.mxu0 0
      %3583 = vmatpush1.bf16.msra.mxu0 %v3404
      %3584 = vmatprep.subr.bf16.mxu0 0
      %3585 = vmatpush1.bf16.msra.mxu0 %v3405
      %3586 = vmatprep.subr.bf16.mxu0 0
      %3587 = vmatpush1.bf16.msra.mxu0 %v3406
      %3588 = vmatprep.subr.bf16.mxu0 0
      %3589 = vmatpush1.bf16.msra.mxu0 %v3407
      %3590 = vmatprep.subr.bf16.mxu0 0
      %3591 = vmatpush1.bf16.msra.mxu0 %v3408
      %3592 = vmatprep.subr.bf16.mxu0 0
      %3593 = vmatpush1.bf16.msra.mxu0 %v3409
      %3594 = vmatprep.subr.bf16.mxu0 0
      %3595 = vmatpush1.bf16.msra.mxu0 %v3410
      %3596 = vmatprep.subr.bf16.mxu0 0
      %3597 = vmatpush1.bf16.msra.mxu0 %v3411
      %3598 = vmatprep.subr.bf16.mxu0 0
      %3599 = vmatpush1.bf16.msra.mxu0 %v3412
      %3600 = vmatprep.subr.bf16.mxu0 0
      %3601 = vmatpush1.bf16.msra.mxu0 %v3413
      %3602 = vmatprep.subr.bf16.mxu0 0
      %3603 = vmatpush1.bf16.msra.mxu0 %v3414
      %3604 = vmatprep.subr.bf16.mxu0 0
      %3605 = vmatpush1.bf16.msra.mxu0 %v3415
      %3606 = vmatprep.subr.bf16.mxu0 0
      %3607 = vmatpush1.bf16.msra.mxu0 %v3416
      %3608 = vmatprep.subr.bf16.mxu0 0
      %3609 = vmatpush1.bf16.msra.mxu0 %v3417
      %3610 = vmatprep.subr.bf16.mxu0 0
      %3611 = vmatpush1.bf16.msra.mxu0 %v3418
      %3612 = vmatprep.mubr.bf16.mxu0 %v3200
      %3613 = vmatmul.mubr.bf16.gmra.mrb[0].mxu0 %v3199
      %v3614 = vpop.f32.mrb[0].mxu0
      %v3615 = vadd.f32 %v3518, %v3614
      %v3616 = vpop.f32.mrb[0].mxu0
      %v3617 = vpop.f32.mrb[0].mxu0
      %v3618 = vadd.f32 %v3521, %v3617
      %v3619 = vpop.f32.mrb[0].mxu0
      %3620 = vmatprep.mubr.bf16.mxu0 %v3205
      %3621 = vmatmul.mubr.bf16.gmra.mrb[0].mxu0 %v3204
      %v3622 = vpop.f32.mrb[0].mxu0
      %v3623 = vadd.f32 %v3526, %v3622
      %v3624 = vpop.f32.mrb[0].mxu0
      %v3625 = vpop.f32.mrb[0].mxu0
      %v3626 = vadd.f32 %v3529, %v3625
      %v3627 = vpop.f32.mrb[0].mxu0
      %3628 = vmatprep.mubr.bf16.mxu0 %v3210
      %3629 = vmatmul.mubr.bf16.gmra.mrb[0].mxu0 %v3209
      %v3630 = vpop.f32.mrb[0].mxu0
      %v3631 = vadd.f32 %v3534, %v3630
      %v3632 = vpop.f32.mrb[0].mxu0
      %v3633 = vpop.f32.mrb[0].mxu0
      %v3634 = vadd.f32 %v3537, %v3633
      %v3635 = vpop.f32.mrb[0].mxu0
      %3636 = vmatprep.mubr.bf16.mxu0 %v3215
      %3637 = vmatmul.mubr.bf16.gmra.mrb[0].mxu0 %v3214
      %v3638 = vpop.f32.mrb[0].mxu0
      %v3639 = vadd.f32 %v3542, %v3638
      %v3640 = vpop.f32.mrb[0].mxu0
      %v3641 = vpop.f32.mrb[0].mxu0
      %v3642 = vadd.f32 %v3545, %v3641
      %v3643 = vpop.f32.mrb[0].mxu0
      %3644 = vmatprep.mubr.bf16.mxu0 %v3220
      %3645 = vmatmul.mubr.bf16.gmra.mrb[0].mxu0 %v3219
      %v3646 = vpop.f32.mrb[0].mxu0
      %v3647 = vadd.f32 %v3550, %v3646
      %v3648 = vpop.f32.mrb[0].mxu0
      %v3649 = vpop.f32.mrb[0].mxu0
      %v3650 = vadd.f32 %v3553, %v3649
      %v3651 = vpop.f32.mrb[0].mxu0
      %3652 = vmatprep.mubr.bf16.mxu0 %v3225
      %3653 = vmatmul.mubr.bf16.gmra.mrb[0].mxu0 %v3224
      %v3654 = vpop.f32.mrb[0].mxu0
      %v3655 = vadd.f32 %v3558, %v3654
      %v3656 = vpop.f32.mrb[0].mxu0
      %v3657 = vpop.f32.mrb[0].mxu0
      %v3658 = vadd.f32 %v3561, %v3657
      %v3659 = vpop.f32.mrb[0].mxu0
      %3660 = vmatprep.mubr.bf16.mxu0 %v3230
      %3661 = vmatmul.mubr.bf16.gmra.mrb[0].mxu0 %v3229
      %v3662 = vpop.f32.mrb[0].mxu0
      %v3663 = vadd.f32 %v3566, %v3662
      %v3664 = vpop.f32.mrb[0].mxu0
      %v3665 = vpop.f32.mrb[0].mxu0
      %v3666 = vadd.f32 %v3569, %v3665
      %v3667 = vpop.f32.mrb[0].mxu0
      %3668 = vmatprep.mubr.bf16.mxu0 %v3235
      %3669 = vmatmul.mubr.bf16.gmra.mrb[0].mxu0 %v3234
      %v3670 = vpop.f32.mrb[0].mxu0
      %v3671 = vadd.f32 %v3574, %v3670
      %v3672 = vpop.f32.mrb[0].mxu0
      %v3673 = vpop.f32.mrb[0].mxu0
      %v3674 = vadd.f32 %v3577, %v3673
      %v3675 = vpop.f32.mrb[0].mxu0
      %3676 = vdwg.mxu0
      %3677 = vmatprep.subr.bf16.mxu0 0
      %3678 = vmatpush1.bf16.msra.mxu0 %v3419
      %3679 = vmatprep.subr.bf16.mxu0 0
      %3680 = vmatpush1.bf16.msra.mxu0 %v3420
      %3681 = vmatprep.subr.bf16.mxu0 0
      %3682 = vmatpush1.bf16.msra.mxu0 %v3421
      %3683 = vmatprep.subr.bf16.mxu0 0
      %3684 = vmatpush1.bf16.msra.mxu0 %v3422
      %3685 = vmatprep.subr.bf16.mxu0 0
      %3686 = vmatpush1.bf16.msra.mxu0 0
      %3687 = vmatprep.subr.bf16.mxu0 0
      %3688 = vmatpush1.bf16.msra.mxu0 0
      %3689 = vmatprep.subr.bf16.mxu0 0
      %3690 = vmatpush1.bf16.msra.mxu0 0
      %3691 = vmatprep.subr.bf16.mxu0 0
      %3692 = vmatpush1.bf16.msra.mxu0 0
      %3693 = vmatprep.subr.bf16.mxu0 0
      %3694 = vmatpush1.bf16.msra.mxu0 0
      %3695 = vmatprep.subr.bf16.mxu0 0
      %3696 = vmatpush1.bf16.msra.mxu0 0
      %3697 = vmatprep.subr.bf16.mxu0 0
      %3698 = vmatpush1.bf16.msra.mxu0 0
      %3699 = vmatprep.subr.bf16.mxu0 0
      %3700 = vmatpush1.bf16.msra.mxu0 0
      %3701 = vmatprep.subr.bf16.mxu0 0
      %3702 = vmatpush1.bf16.msra.mxu0 0
      %3703 = vmatprep.subr.bf16.mxu0 0
      %3704 = vmatpush1.bf16.msra.mxu0 0
      %3705 = vmatprep.subr.bf16.mxu0 0
      %3706 = vmatpush1.bf16.msra.mxu0 0
      %3707 = vmatprep.subr.bf16.mxu0 0
      %3708 = vmatpush1.bf16.msra.mxu0 0
      %3709 = vmatprep.mubr.bf16.mxu0 0
      %3710 = vmatmul.mubr.bf16.gmra.mrb[0].mxu0 %v3460
      %v3711 = vpop.f32.mrb[0].mxu0
      %v3712 = vadd.f32 %v3615, %v3711
      %v3713 = vpop.f32.mrb[0].mxu0
      %v3714 = vpop.f32.mrb[0].mxu0
      %v3715 = vadd.f32 %v3618, %v3714
      %v3716 = vpop.f32.mrb[0].mxu0
      %3717 = vmatprep.mubr.bf16.mxu0 0
      %3718 = vmatmul.mubr.bf16.gmra.mrb[0].mxu0 %v3463
      %v3719 = vpop.f32.mrb[0].mxu0
      %v3720 = vadd.f32 %v3623, %v3719
      %v3721 = vpop.f32.mrb[0].mxu0
      %v3722 = vpop.f32.mrb[0].mxu0
      %v3723 = vadd.f32 %v3626, %v3722
      %v3724 = vpop.f32.mrb[0].mxu0
      %3725 = vmatprep.mubr.bf16.mxu0 0
      %3726 = vmatmul.mubr.bf16.gmra.mrb[0].mxu0 %v3466
      %v3727 = vpop.f32.mrb[0].mxu0
      %v3728 = vadd.f32 %v3631, %v3727
      %v3729 = vpop.f32.mrb[0].mxu0
      %v3730 = vpop.f32.mrb[0].mxu0
      %v3731 = vadd.f32 %v3634, %v3730
      %v3732 = vpop.f32.mrb[0].mxu0
      %3733 = vmatprep.mubr.bf16.mxu0 0
      %3734 = vmatmul.mubr.bf16.gmra.mrb[0].mxu0 %v3469
      %v3735 = vpop.f32.mrb[0].mxu0
      %v3736 = vadd.f32 %v3639, %v3735
      %v3737 = vpop.f32.mrb[0].mxu0
      %v3738 = vpop.f32.mrb[0].mxu0
      %v3739 = vadd.f32 %v3642, %v3738
      %v3740 = vpop.f32.mrb[0].mxu0
      %3741 = vmatprep.mubr.bf16.mxu0 0
      %3742 = vmatmul.mubr.bf16.gmra.mrb[0].mxu0 %v3472
      %v3743 = vpop.f32.mrb[0].mxu0
      %v3744 = vadd.f32 %v3647, %v3743
      %v3745 = vpop.f32.mrb[0].mxu0
      %v3746 = vpop.f32.mrb[0].mxu0
      %v3747 = vadd.f32 %v3650, %v3746
      %v3748 = vpop.f32.mrb[0].mxu0
      %3749 = vmatprep.mubr.bf16.mxu0 0
      %3750 = vmatmul.mubr.bf16.gmra.mrb[0].mxu0 %v3475
      %v3751 = vpop.f32.mrb[0].mxu0
      %v3752 = vadd.f32 %v3655, %v3751
      %v3753 = vpop.f32.mrb[0].mxu0
      %v3754 = vpop.f32.mrb[0].mxu0
      %v3755 = vadd.f32 %v3658, %v3754
      %v3756 = vpop.f32.mrb[0].mxu0
      %3757 = vmatprep.mubr.bf16.mxu0 0
      %3758 = vmatmul.mubr.bf16.gmra.mrb[0].mxu0 %v3478
      %v3759 = vpop.f32.mrb[0].mxu0
      %v3760 = vadd.f32 %v3663, %v3759
      %v3761 = vpop.f32.mrb[0].mxu0
      %v3762 = vpop.f32.mrb[0].mxu0
      %v3763 = vadd.f32 %v3666, %v3762
      %v3764 = vpop.f32.mrb[0].mxu0
      %3765 = vmatprep.mubr.bf16.mxu0 0
      %3766 = vmatmul.mubr.bf16.gmra.mrb[0].mxu0 %v3481
      %v3767 = vpop.f32.mrb[0].mxu0
      %v3768 = vadd.f32 %v3671, %v3767
      %v3769 = vpop.f32.mrb[0].mxu0
      %v3770 = vpop.f32.mrb[0].mxu0
      %v3771 = vadd.f32 %v3674, %v3770
      %v3772 = vpop.f32.mrb[0].mxu0
      %3773 = vdwg.mxu0
      %v3774 = vmax.f32 %v3712, 0.0
      %v3775 = vmax.f32 %v3715, 0.0
      %v3776 = vmax.f32 %v3720, 0.0
      %v3777 = vmax.f32 %v3723, 0.0
      %v3778 = vmax.f32 %v3728, 0.0
      %v3779 = vmax.f32 %v3731, 0.0
      %v3780 = vmax.f32 %v3736, 0.0
      %v3781 = vmax.f32 %v3739, 0.0
      %v3782 = vmax.f32 %v3744, 0.0
      %v3783 = vmax.f32 %v3747, 0.0
      %v3784 = vmax.f32 %v3752, 0.0
      %v3785 = vmax.f32 %v3755, 0.0
      %v3786 = vmax.f32 %v3760, 0.0
      %v3787 = vmax.f32 %v3763, 0.0
      %v3788 = vmax.f32 %v3768, 0.0
      %v3789 = vmax.f32 %v3771, 0.0
      %v3790 = vld [vmem:[%s299] sm:$0xf]
      %v3791 = vld [vmem:[%s299 + $0x4] sm:$0xf]
      %v3792 = vld [vmem:[%s299 + $0x8] sm:$0x1]
      %v3793 = vld [vmem:[%s299 + $0xc] sm:$0xf]
      %v3794 = vld [vmem:[%s299 + $0x10] sm:$0xf]
      %v3795 = vld [vmem:[%s299 + $0x14] sm:$0x1]
      %v3796 = vld [vmem:[%s299 + $0x18] sm:$0xf]
      %v3797 = vld [vmem:[%s299 + $0x1c] sm:$0xf]
      %v3798 = vld [vmem:[%s299 + $0x20] sm:$0x1]
      %v3799 = vld [vmem:[%s299 + $0x24] sm:$0xf]
      %v3800 = vld [vmem:[%s299 + $0x28] sm:$0xf]
      %v3801 = vld [vmem:[%s299 + $0x2c] sm:$0x1]
      %v3802 = vld [vmem:[%s299 + $0x30] sm:$0xf]
      %v3803 = vld [vmem:[%s299 + $0x34] sm:$0xf]
      %v3804 = vld [vmem:[%s299 + $0x38] sm:$0x1]
      %v3805 = vld [vmem:[%s299 + $0x3c] sm:$0xf]
      %v3806 = vld [vmem:[%s299 + $0x40] sm:$0xf]
      %v3807 = vld [vmem:[%s299 + $0x44] sm:$0x1]
      %v3808 = vld [vmem:[%s299 + $0x48] sm:$0xf]
      %v3809 = vld [vmem:[%s299 + $0x4c] sm:$0xf]
      %v3810 = vld [vmem:[%s299 + $0x50] sm:$0x1]
      %v3811 = vld [vmem:[%s299 + $0x54] sm:$0xf]
      %v3812 = vld [vmem:[%s299 + $0x58] sm:$0xf]
      %v3813 = vld [vmem:[%s299 + $0x5c] sm:$0x1]
      %v3814 = vld [vmem:[%s299 + $0x60] sm:$0xf]
      %v3815 = vld [vmem:[%s299 + $0x64] sm:$0xf]
      %v3816 = vld [vmem:[%s299 + $0x68] sm:$0x1]
      %v3817 = vld [vmem:[%s299 + $0x6c] sm:$0xf]
      %v3818 = vld [vmem:[%s299 + $0x70] sm:$0xf]
      %v3819 = vld [vmem:[%s299 + $0x74] sm:$0x1]
      %v3851 = vunpack.c.l.s4 1966171168
      %v3852 = vunpack.c.0.s8 %v3851
      %v3853 = vlaneseq
      %v3854 = vshrl.u32 %v3853, 7
      %v3855 = vsub.s32 %v3852, %v3854
      %v3856 = vrot.slane %v3790, %v3855
      %v3857 = vcombine.high %v3856, %v3856
      %v3859 = vunpack.c.l.s4 1966171168
      %v3860 = vunpack.c.0.s8 %v3859
      %v3861 = vlaneseq
      %v3862 = vshrl.u32 %v3861, 7
      %v3863 = vsub.s32 %v3860, %v3862
      %v3864 = vrot.slane %v3856, %v3863
      %v3866 = vunpack.c.l.s4 1966171168
      %v3867 = vunpack.c.0.s8 %v3866
      %v3868 = vlaneseq
      %v3869 = vshrl.u32 %v3868, 7
      %v3870 = vsub.s32 %v3867, %v3869
      %v3871 = vrot.slane %v3857, %v3870
      %v3872 = vcombine.high %v3864, %v3864
      %v3873 = vcombine.high %v3871, %v3871
      %v3875 = vunpack.c.l.s4 1966171168
      %v3876 = vunpack.c.0.s8 %v3875
      %v3877 = vlaneseq
      %v3878 = vshrl.u32 %v3877, 7
      %v3879 = vsub.s32 %v3876, %v3878
      %v3880 = vrot.slane %v3791, %v3879
      %v3881 = vcombine.high %v3880, %v3880
      %v3883 = vunpack.c.l.s4 1966171168
      %v3884 = vunpack.c.0.s8 %v3883
      %v3885 = vlaneseq
      %v3886 = vshrl.u32 %v3885, 7
      %v3887 = vsub.s32 %v3884, %v3886
      %v3888 = vrot.slane %v3880, %v3887
      %v3890 = vunpack.c.l.s4 1966171168
      %v3891 = vunpack.c.0.s8 %v3890
      %v3892 = vlaneseq
      %v3893 = vshrl.u32 %v3892, 7
      %v3894 = vsub.s32 %v3891, %v3893
      %v3895 = vrot.slane %v3881, %v3894
      %v3896 = vcombine.high %v3888, %v3888
      %v3897 = vcombine.high %v3895, %v3895
      %v3899 = vunpack.c.l.s4 1966171168
      %v3900 = vunpack.c.0.s8 %v3899
      %v3901 = vlaneseq
      %v3902 = vshrl.u32 %v3901, 7
      %v3903 = vsub.s32 %v3900, %v3902
      %v3904 = vrot.slane %v3792, %v3903
      %v3906 = vunpack.c.l.s4 1966171168
      %v3907 = vunpack.c.0.s8 %v3906
      %v3908 = vlaneseq
      %v3909 = vshrl.u32 %v3908, 7
      %v3910 = vsub.s32 %v3907, %v3909
      %v3911 = vrot.slane %v3904, %v3910
      %v3913 = vunpack.c.l.s4 1966171168
      %v3914 = vunpack.c.0.s8 %v3913
      %v3915 = vlaneseq
      %v3916 = vshrl.u32 %v3915, 7
      %v3917 = vsub.s32 %v3914, %v3916
      %v3918 = vrot.slane %v3793, %v3917
      %v3919 = vcombine.high %v3918, %v3918
      %v3921 = vunpack.c.l.s4 1966171168
      %v3922 = vunpack.c.0.s8 %v3921
      %v3923 = vlaneseq
      %v3924 = vshrl.u32 %v3923, 7
      %v3925 = vsub.s32 %v3922, %v3924
      %v3926 = vrot.slane %v3918, %v3925
      %v3928 = vunpack.c.l.s4 1966171168
      %v3929 = vunpack.c.0.s8 %v3928
      %v3930 = vlaneseq
      %v3931 = vshrl.u32 %v3930, 7
      %v3932 = vsub.s32 %v3929, %v3931
      %v3933 = vrot.slane %v3919, %v3932
      %v3934 = vcombine.high %v3926, %v3926
      %v3935 = vcombine.high %v3933, %v3933
      %v3937 = vunpack.c.l.s4 1966171168
      %v3938 = vunpack.c.0.s8 %v3937
      %v3939 = vlaneseq
      %v3940 = vshrl.u32 %v3939, 7
      %v3941 = vsub.s32 %v3938, %v3940
      %v3942 = vrot.slane %v3794, %v3941
      %v3943 = vcombine.high %v3942, %v3942
      %v3945 = vunpack.c.l.s4 1966171168
      %v3946 = vunpack.c.0.s8 %v3945
      %v3947 = vlaneseq
      %v3948 = vshrl.u32 %v3947, 7
      %v3949 = vsub.s32 %v3946, %v3948
      %v3950 = vrot.slane %v3942, %v3949
      %v3952 = vunpack.c.l.s4 1966171168
      %v3953 = vunpack.c.0.s8 %v3952
      %v3954 = vlaneseq
      %v3955 = vshrl.u32 %v3954, 7
      %v3956 = vsub.s32 %v3953, %v3955
      %v3957 = vrot.slane %v3943, %v3956
      %v3958 = vcombine.high %v3950, %v3950
      %v3959 = vcombine.high %v3957, %v3957
      %v3961 = vunpack.c.l.s4 1966171168
      %v3962 = vunpack.c.0.s8 %v3961
      %v3963 = vlaneseq
      %v3964 = vshrl.u32 %v3963, 7
      %v3965 = vsub.s32 %v3962, %v3964
      %v3966 = vrot.slane %v3795, %v3965
      %v3968 = vunpack.c.l.s4 1966171168
      %v3969 = vunpack.c.0.s8 %v3968
      %v3970 = vlaneseq
      %v3971 = vshrl.u32 %v3970, 7
      %v3972 = vsub.s32 %v3969, %v3971
      %v3973 = vrot.slane %v3966, %v3972
      %v3975 = vunpack.c.l.s4 1966171168
      %v3976 = vunpack.c.0.s8 %v3975
      %v3977 = vlaneseq
      %v3978 = vshrl.u32 %v3977, 7
      %v3979 = vsub.s32 %v3976, %v3978
      %v3980 = vrot.slane %v3796, %v3979
      %v3981 = vcombine.high %v3980, %v3980
      %v3983 = vunpack.c.l.s4 1966171168
      %v3984 = vunpack.c.0.s8 %v3983
      %v3985 = vlaneseq
      %v3986 = vshrl.u32 %v3985, 7
      %v3987 = vsub.s32 %v3984, %v3986
      %v3988 = vrot.slane %v3980, %v3987
      %v3990 = vunpack.c.l.s4 1966171168
      %v3991 = vunpack.c.0.s8 %v3990
      %v3992 = vlaneseq
      %v3993 = vshrl.u32 %v3992, 7
      %v3994 = vsub.s32 %v3991, %v3993
      %v3995 = vrot.slane %v3981, %v3994
      %v3996 = vcombine.high %v3988, %v3988
      %v3997 = vcombine.high %v3995, %v3995
      %v3999 = vunpack.c.l.s4 1966171168
      %v4000 = vunpack.c.0.s8 %v3999
      %v4001 = vlaneseq
      %v4002 = vshrl.u32 %v4001, 7
      %v4003 = vsub.s32 %v4000, %v4002
      %v4004 = vrot.slane %v3797, %v4003
      %v4005 = vcombine.high %v4004, %v4004
      %v4007 = vunpack.c.l.s4 1966171168
      %v4008 = vunpack.c.0.s8 %v4007
      %v4009 = vlaneseq
      %v4010 = vshrl.u32 %v4009, 7
      %v4011 = vsub.s32 %v4008, %v4010
      %v4012 = vrot.slane %v4004, %v4011
      %v4014 = vunpack.c.l.s4 1966171168
      %v4015 = vunpack.c.0.s8 %v4014
      %v4016 = vlaneseq
      %v4017 = vshrl.u32 %v4016, 7
      %v4018 = vsub.s32 %v4015, %v4017
      %v4019 = vrot.slane %v4005, %v4018
      %v4020 = vcombine.high %v4012, %v4012
      %v4021 = vcombine.high %v4019, %v4019
      %v4023 = vunpack.c.l.s4 1966171168
      %v4024 = vunpack.c.0.s8 %v4023
      %v4025 = vlaneseq
      %v4026 = vshrl.u32 %v4025, 7
      %v4027 = vsub.s32 %v4024, %v4026
      %v4028 = vrot.slane %v3798, %v4027
      %v4030 = vunpack.c.l.s4 1966171168
      %v4031 = vunpack.c.0.s8 %v4030
      %v4032 = vlaneseq
      %v4033 = vshrl.u32 %v4032, 7
      %v4034 = vsub.s32 %v4031, %v4033
      %v4035 = vrot.slane %v4028, %v4034
      %v4037 = vunpack.c.l.s4 1966171168
      %v4038 = vunpack.c.0.s8 %v4037
      %v4039 = vlaneseq
      %v4040 = vshrl.u32 %v4039, 7
      %v4041 = vsub.s32 %v4038, %v4040
      %v4042 = vrot.slane %v3799, %v4041
      %v4043 = vcombine.high %v4042, %v4042
      %v4045 = vunpack.c.l.s4 1966171168
      %v4046 = vunpack.c.0.s8 %v4045
      %v4047 = vlaneseq
      %v4048 = vshrl.u32 %v4047, 7
      %v4049 = vsub.s32 %v4046, %v4048
      %v4050 = vrot.slane %v4042, %v4049
      %v4052 = vunpack.c.l.s4 1966171168
      %v4053 = vunpack.c.0.s8 %v4052
      %v4054 = vlaneseq
      %v4055 = vshrl.u32 %v4054, 7
      %v4056 = vsub.s32 %v4053, %v4055
      %v4057 = vrot.slane %v4043, %v4056
      %v4058 = vcombine.high %v4050, %v4050
      %v4059 = vcombine.high %v4057, %v4057
      %v4061 = vunpack.c.l.s4 1966171168
      %v4062 = vunpack.c.0.s8 %v4061
      %v4063 = vlaneseq
      %v4064 = vshrl.u32 %v4063, 7
      %v4065 = vsub.s32 %v4062, %v4064
      %v4066 = vrot.slane %v3800, %v4065
      %v4067 = vcombine.high %v4066, %v4066
      %v4069 = vunpack.c.l.s4 1966171168
      %v4070 = vunpack.c.0.s8 %v4069
      %v4071 = vlaneseq
      %v4072 = vshrl.u32 %v4071, 7
      %v4073 = vsub.s32 %v4070, %v4072
      %v4074 = vrot.slane %v4066, %v4073
      %v4076 = vunpack.c.l.s4 1966171168
      %v4077 = vunpack.c.0.s8 %v4076
      %v4078 = vlaneseq
      %v4079 = vshrl.u32 %v4078, 7
      %v4080 = vsub.s32 %v4077, %v4079
      %v4081 = vrot.slane %v4067, %v4080
      %v4082 = vcombine.high %v4074, %v4074
      %v4083 = vcombine.high %v4081, %v4081
      %v4085 = vunpack.c.l.s4 1966171168
      %v4086 = vunpack.c.0.s8 %v4085
      %v4087 = vlaneseq
      %v4088 = vshrl.u32 %v4087, 7
      %v4089 = vsub.s32 %v4086, %v4088
      %v4090 = vrot.slane %v3801, %v4089
      %v4092 = vunpack.c.l.s4 1966171168
      %v4093 = vunpack.c.0.s8 %v4092
      %v4094 = vlaneseq
      %v4095 = vshrl.u32 %v4094, 7
      %v4096 = vsub.s32 %v4093, %v4095
      %v4097 = vrot.slane %v4090, %v4096
      %v4099 = vunpack.c.l.s4 1966171168
      %v4100 = vunpack.c.0.s8 %v4099
      %v4101 = vlaneseq
      %v4102 = vshrl.u32 %v4101, 7
      %v4103 = vsub.s32 %v4100, %v4102
      %v4104 = vrot.slane %v3802, %v4103
      %v4105 = vcombine.high %v4104, %v4104
      %v4107 = vunpack.c.l.s4 1966171168
      %v4108 = vunpack.c.0.s8 %v4107
      %v4109 = vlaneseq
      %v4110 = vshrl.u32 %v4109, 7
      %v4111 = vsub.s32 %v4108, %v4110
      %v4112 = vrot.slane %v4104, %v4111
      %v4114 = vunpack.c.l.s4 1966171168
      %v4115 = vunpack.c.0.s8 %v4114
      %v4116 = vlaneseq
      %v4117 = vshrl.u32 %v4116, 7
      %v4118 = vsub.s32 %v4115, %v4117
      %v4119 = vrot.slane %v4105, %v4118
      %v4120 = vcombine.high %v4112, %v4112
      %v4121 = vcombine.high %v4119, %v4119
      %v4123 = vunpack.c.l.s4 1966171168
      %v4124 = vunpack.c.0.s8 %v4123
      %v4125 = vlaneseq
      %v4126 = vshrl.u32 %v4125, 7
      %v4127 = vsub.s32 %v4124, %v4126
      %v4128 = vrot.slane %v3803, %v4127
      %v4129 = vcombine.high %v4128, %v4128
      %v4131 = vunpack.c.l.s4 1966171168
      %v4132 = vunpack.c.0.s8 %v4131
      %v4133 = vlaneseq
      %v4134 = vshrl.u32 %v4133, 7
      %v4135 = vsub.s32 %v4132, %v4134
      %v4136 = vrot.slane %v4128, %v4135
      %v4138 = vunpack.c.l.s4 1966171168
      %v4139 = vunpack.c.0.s8 %v4138
      %v4140 = vlaneseq
      %v4141 = vshrl.u32 %v4140, 7
      %v4142 = vsub.s32 %v4139, %v4141
      %v4143 = vrot.slane %v4129, %v4142
      %v4144 = vcombine.high %v4136, %v4136
      %v4145 = vcombine.high %v4143, %v4143
      %v4147 = vunpack.c.l.s4 1966171168
      %v4148 = vunpack.c.0.s8 %v4147
      %v4149 = vlaneseq
      %v4150 = vshrl.u32 %v4149, 7
      %v4151 = vsub.s32 %v4148, %v4150
      %v4152 = vrot.slane %v3804, %v4151
      %v4154 = vunpack.c.l.s4 1966171168
      %v4155 = vunpack.c.0.s8 %v4154
      %v4156 = vlaneseq
      %v4157 = vshrl.u32 %v4156, 7
      %v4158 = vsub.s32 %v4155, %v4157
      %v4159 = vrot.slane %v4152, %v4158
      %v4161 = vunpack.c.l.s4 1966171168
      %v4162 = vunpack.c.0.s8 %v4161
      %v4163 = vlaneseq
      %v4164 = vshrl.u32 %v4163, 7
      %v4165 = vsub.s32 %v4162, %v4164
      %v4166 = vrot.slane %v3805, %v4165
      %v4167 = vcombine.high %v4166, %v4166
      %v4169 = vunpack.c.l.s4 1966171168
      %v4170 = vunpack.c.0.s8 %v4169
      %v4171 = vlaneseq
      %v4172 = vshrl.u32 %v4171, 7
      %v4173 = vsub.s32 %v4170, %v4172
      %v4174 = vrot.slane %v4166, %v4173
      %v4176 = vunpack.c.l.s4 1966171168
      %v4177 = vunpack.c.0.s8 %v4176
      %v4178 = vlaneseq
      %v4179 = vshrl.u32 %v4178, 7
      %v4180 = vsub.s32 %v4177, %v4179
      %v4181 = vrot.slane %v4167, %v4180
      %v4182 = vcombine.high %v4174, %v4174
      %v4183 = vcombine.high %v4181, %v4181
      %v4185 = vunpack.c.l.s4 1966171168
      %v4186 = vunpack.c.0.s8 %v4185
      %v4187 = vlaneseq
      %v4188 = vshrl.u32 %v4187, 7
      %v4189 = vsub.s32 %v4186, %v4188
      %v4190 = vrot.slane %v3806, %v4189
      %v4191 = vcombine.high %v4190, %v4190
      %v4193 = vunpack.c.l.s4 1966171168
      %v4194 = vunpack.c.0.s8 %v4193
      %v4195 = vlaneseq
      %v4196 = vshrl.u32 %v4195, 7
      %v4197 = vsub.s32 %v4194, %v4196
      %v4198 = vrot.slane %v4190, %v4197
      %v4200 = vunpack.c.l.s4 1966171168
      %v4201 = vunpack.c.0.s8 %v4200
      %v4202 = vlaneseq
      %v4203 = vshrl.u32 %v4202, 7
      %v4204 = vsub.s32 %v4201, %v4203
      %v4205 = vrot.slane %v4191, %v4204
      %v4206 = vcombine.high %v4198, %v4198
      %v4207 = vcombine.high %v4205, %v4205
      %v4209 = vunpack.c.l.s4 1966171168
      %v4210 = vunpack.c.0.s8 %v4209
      %v4211 = vlaneseq
      %v4212 = vshrl.u32 %v4211, 7
      %v4213 = vsub.s32 %v4210, %v4212
      %v4214 = vrot.slane %v3807, %v4213
      %v4216 = vunpack.c.l.s4 1966171168
      %v4217 = vunpack.c.0.s8 %v4216
      %v4218 = vlaneseq
      %v4219 = vshrl.u32 %v4218, 7
      %v4220 = vsub.s32 %v4217, %v4219
      %v4221 = vrot.slane %v4214, %v4220
      %v4223 = vunpack.c.l.s4 1966171168
      %v4224 = vunpack.c.0.s8 %v4223
      %v4225 = vlaneseq
      %v4226 = vshrl.u32 %v4225, 7
      %v4227 = vsub.s32 %v4224, %v4226
      %v4228 = vrot.slane %v3808, %v4227
      %v4229 = vcombine.high %v4228, %v4228
      %v4231 = vunpack.c.l.s4 1966171168
      %v4232 = vunpack.c.0.s8 %v4231
      %v4233 = vlaneseq
      %v4234 = vshrl.u32 %v4233, 7
      %v4235 = vsub.s32 %v4232, %v4234
      %v4236 = vrot.slane %v4228, %v4235
      %v4238 = vunpack.c.l.s4 1966171168
      %v4239 = vunpack.c.0.s8 %v4238
      %v4240 = vlaneseq
      %v4241 = vshrl.u32 %v4240, 7
      %v4242 = vsub.s32 %v4239, %v4241
      %v4243 = vrot.slane %v4229, %v4242
      %v4244 = vcombine.high %v4236, %v4236
      %v4245 = vcombine.high %v4243, %v4243
      %v4247 = vunpack.c.l.s4 1966171168
      %v4248 = vunpack.c.0.s8 %v4247
      %v4249 = vlaneseq
      %v4250 = vshrl.u32 %v4249, 7
      %v4251 = vsub.s32 %v4248, %v4250
      %v4252 = vrot.slane %v3809, %v4251
      %v4253 = vcombine.high %v4252, %v4252
      %v4255 = vunpack.c.l.s4 1966171168
      %v4256 = vunpack.c.0.s8 %v4255
      %v4257 = vlaneseq
      %v4258 = vshrl.u32 %v4257, 7
      %v4259 = vsub.s32 %v4256, %v4258
      %v4260 = vrot.slane %v4252, %v4259
      %v4262 = vunpack.c.l.s4 1966171168
      %v4263 = vunpack.c.0.s8 %v4262
      %v4264 = vlaneseq
      %v4265 = vshrl.u32 %v4264, 7
      %v4266 = vsub.s32 %v4263, %v4265
      %v4267 = vrot.slane %v4253, %v4266
      %v4268 = vcombine.high %v4260, %v4260
      %v4269 = vcombine.high %v4267, %v4267
      %v4271 = vunpack.c.l.s4 1966171168
      %v4272 = vunpack.c.0.s8 %v4271
      %v4273 = vlaneseq
      %v4274 = vshrl.u32 %v4273, 7
      %v4275 = vsub.s32 %v4272, %v4274
      %v4276 = vrot.slane %v3810, %v4275
      %v4278 = vunpack.c.l.s4 1966171168
      %v4279 = vunpack.c.0.s8 %v4278
      %v4280 = vlaneseq
      %v4281 = vshrl.u32 %v4280, 7
      %v4282 = vsub.s32 %v4279, %v4281
      %v4283 = vrot.slane %v4276, %v4282
      %v4285 = vunpack.c.l.s4 1966171168
      %v4286 = vunpack.c.0.s8 %v4285
      %v4287 = vlaneseq
      %v4288 = vshrl.u32 %v4287, 7
      %v4289 = vsub.s32 %v4286, %v4288
      %v4290 = vrot.slane %v3811, %v4289
      %v4291 = vcombine.high %v4290, %v4290
      %v4293 = vunpack.c.l.s4 1966171168
      %v4294 = vunpack.c.0.s8 %v4293
      %v4295 = vlaneseq
      %v4296 = vshrl.u32 %v4295, 7
      %v4297 = vsub.s32 %v4294, %v4296
      %v4298 = vrot.slane %v4290, %v4297
      %v4300 = vunpack.c.l.s4 1966171168
      %v4301 = vunpack.c.0.s8 %v4300
      %v4302 = vlaneseq
      %v4303 = vshrl.u32 %v4302, 7
      %v4304 = vsub.s32 %v4301, %v4303
      %v4305 = vrot.slane %v4291, %v4304
      %v4306 = vcombine.high %v4298, %v4298
      %v4307 = vcombine.high %v4305, %v4305
      %v4309 = vunpack.c.l.s4 1966171168
      %v4310 = vunpack.c.0.s8 %v4309
      %v4311 = vlaneseq
      %v4312 = vshrl.u32 %v4311, 7
      %v4313 = vsub.s32 %v4310, %v4312
      %v4314 = vrot.slane %v3812, %v4313
      %v4315 = vcombine.high %v4314, %v4314
      %v4317 = vunpack.c.l.s4 1966171168
      %v4318 = vunpack.c.0.s8 %v4317
      %v4319 = vlaneseq
      %v4320 = vshrl.u32 %v4319, 7
      %v4321 = vsub.s32 %v4318, %v4320
      %v4322 = vrot.slane %v4314, %v4321
      %v4324 = vunpack.c.l.s4 1966171168
      %v4325 = vunpack.c.0.s8 %v4324
      %v4326 = vlaneseq
      %v4327 = vshrl.u32 %v4326, 7
      %v4328 = vsub.s32 %v4325, %v4327
      %v4329 = vrot.slane %v4315, %v4328
      %v4330 = vcombine.high %v4322, %v4322
      %v4331 = vcombine.high %v4329, %v4329
      %v4333 = vunpack.c.l.s4 1966171168
      %v4334 = vunpack.c.0.s8 %v4333
      %v4335 = vlaneseq
      %v4336 = vshrl.u32 %v4335, 7
      %v4337 = vsub.s32 %v4334, %v4336
      %v4338 = vrot.slane %v3813, %v4337
      %v4340 = vunpack.c.l.s4 1966171168
      %v4341 = vunpack.c.0.s8 %v4340
      %v4342 = vlaneseq
      %v4343 = vshrl.u32 %v4342, 7
      %v4344 = vsub.s32 %v4341, %v4343
      %v4345 = vrot.slane %v4338, %v4344
      %v4347 = vunpack.c.l.s4 1966171168
      %v4348 = vunpack.c.0.s8 %v4347
      %v4349 = vlaneseq
      %v4350 = vshrl.u32 %v4349, 7
      %v4351 = vsub.s32 %v4348, %v4350
      %v4352 = vrot.slane %v3814, %v4351
      %v4353 = vcombine.high %v4352, %v4352
      %v4355 = vunpack.c.l.s4 1966171168
      %v4356 = vunpack.c.0.s8 %v4355
      %v4357 = vlaneseq
      %v4358 = vshrl.u32 %v4357, 7
      %v4359 = vsub.s32 %v4356, %v4358
      %v4360 = vrot.slane %v4352, %v4359
      %v4362 = vunpack.c.l.s4 1966171168
      %v4363 = vunpack.c.0.s8 %v4362
      %v4364 = vlaneseq
      %v4365 = vshrl.u32 %v4364, 7
      %v4366 = vsub.s32 %v4363, %v4365
      %v4367 = vrot.slane %v4353, %v4366
      %v4368 = vcombine.high %v4360, %v4360
      %v4369 = vcombine.high %v4367, %v4367
      %v4371 = vunpack.c.l.s4 1966171168
      %v4372 = vunpack.c.0.s8 %v4371
      %v4373 = vlaneseq
      %v4374 = vshrl.u32 %v4373, 7
      %v4375 = vsub.s32 %v4372, %v4374
      %v4376 = vrot.slane %v3815, %v4375
      %v4377 = vcombine.high %v4376, %v4376
      %v4379 = vunpack.c.l.s4 1966171168
      %v4380 = vunpack.c.0.s8 %v4379
      %v4381 = vlaneseq
      %v4382 = vshrl.u32 %v4381, 7
      %v4383 = vsub.s32 %v4380, %v4382
      %v4384 = vrot.slane %v4376, %v4383
      %v4386 = vunpack.c.l.s4 1966171168
      %v4387 = vunpack.c.0.s8 %v4386
      %v4388 = vlaneseq
      %v4389 = vshrl.u32 %v4388, 7
      %v4390 = vsub.s32 %v4387, %v4389
      %v4391 = vrot.slane %v4377, %v4390
      %v4392 = vcombine.high %v4384, %v4384
      %v4393 = vcombine.high %v4391, %v4391
      %v4395 = vunpack.c.l.s4 1966171168
      %v4396 = vunpack.c.0.s8 %v4395
      %v4397 = vlaneseq
      %v4398 = vshrl.u32 %v4397, 7
      %v4399 = vsub.s32 %v4396, %v4398
      %v4400 = vrot.slane %v3816, %v4399
      %v4402 = vunpack.c.l.s4 1966171168
      %v4403 = vunpack.c.0.s8 %v4402
      %v4404 = vlaneseq
      %v4405 = vshrl.u32 %v4404, 7
      %v4406 = vsub.s32 %v4403, %v4405
      %v4407 = vrot.slane %v4400, %v4406
      %v4409 = vunpack.c.l.s4 1966171168
      %v4410 = vunpack.c.0.s8 %v4409
      %v4411 = vlaneseq
      %v4412 = vshrl.u32 %v4411, 7
      %v4413 = vsub.s32 %v4410, %v4412
      %v4414 = vrot.slane %v3817, %v4413
      %v4415 = vcombine.high %v4414, %v4414
      %v4417 = vunpack.c.l.s4 1966171168
      %v4418 = vunpack.c.0.s8 %v4417
      %v4419 = vlaneseq
      %v4420 = vshrl.u32 %v4419, 7
      %v4421 = vsub.s32 %v4418, %v4420
      %v4422 = vrot.slane %v4414, %v4421
      %v4424 = vunpack.c.l.s4 1966171168
      %v4425 = vunpack.c.0.s8 %v4424
      %v4426 = vlaneseq
      %v4427 = vshrl.u32 %v4426, 7
      %v4428 = vsub.s32 %v4425, %v4427
      %v4429 = vrot.slane %v4415, %v4428
      %v4430 = vcombine.high %v4422, %v4422
      %v4431 = vcombine.high %v4429, %v4429
      %v4433 = vunpack.c.l.s4 1966171168
      %v4434 = vunpack.c.0.s8 %v4433
      %v4435 = vlaneseq
      %v4436 = vshrl.u32 %v4435, 7
      %v4437 = vsub.s32 %v4434, %v4436
      %v4438 = vrot.slane %v3818, %v4437
      %v4439 = vcombine.high %v4438, %v4438
      %v4441 = vunpack.c.l.s4 1966171168
      %v4442 = vunpack.c.0.s8 %v4441
      %v4443 = vlaneseq
      %v4444 = vshrl.u32 %v4443, 7
      %v4445 = vsub.s32 %v4442, %v4444
      %v4446 = vrot.slane %v4438, %v4445
      %v4448 = vunpack.c.l.s4 1966171168
      %v4449 = vunpack.c.0.s8 %v4448
      %v4450 = vlaneseq
      %v4451 = vshrl.u32 %v4450, 7
      %v4452 = vsub.s32 %v4449, %v4451
      %v4453 = vrot.slane %v4439, %v4452
      %v4454 = vcombine.high %v4446, %v4446
      %v4455 = vcombine.high %v4453, %v4453
      %v4457 = vunpack.c.l.s4 1966171168
      %v4458 = vunpack.c.0.s8 %v4457
      %v4459 = vlaneseq
      %v4460 = vshrl.u32 %v4459, 7
      %v4461 = vsub.s32 %v4458, %v4460
      %v4462 = vrot.slane %v3819, %v4461
      %v4464 = vunpack.c.l.s4 1966171168
      %v4465 = vunpack.c.0.s8 %v4464
      %v4466 = vlaneseq
      %v4467 = vshrl.u32 %v4466, 7
      %v4468 = vsub.s32 %v4465, %v4467
      %v4469 = vrot.slane %v4462, %v4468
      %v4470 = vcombine.low %v3864, %v3871
      %v4471 = vcombine.low %v3872, %v3873
      %v4472 = vcombine.low %v3888, %v3895
      %v4473 = vcombine.low %v3896, %v3897
      %v4475 = vunpack.c.l.s4 1966171168
      %v4476 = vunpack.c.0.s8 %v4475
      %v4477 = vlaneseq
      %v4478 = vshrl.u32 %v4477, 7
      %v4479 = vsub.s32 %v4476, %v4478
      %v4480 = vrot.slane %v4470, %v4479
      %v4482 = vunpack.c.l.s4 1966171168
      %v4483 = vunpack.c.0.s8 %v4482
      %v4484 = vlaneseq
      %v4485 = vshrl.u32 %v4484, 7
      %v4486 = vsub.s32 %v4483, %v4485
      %v4487 = vrot.slane %v4471, %v4486
      %v4489 = vunpack.c.l.s4 1966171168
      %v4490 = vunpack.c.0.s8 %v4489
      %v4491 = vlaneseq
      %v4492 = vshrl.u32 %v4491, 7
      %v4493 = vsub.s32 %v4490, %v4492
      %v4494 = vrot.slane %v4472, %v4493
      %v4496 = vunpack.c.l.s4 1966171168
      %v4497 = vunpack.c.0.s8 %v4496
      %v4498 = vlaneseq
      %v4499 = vshrl.u32 %v4498, 7
      %v4500 = vsub.s32 %v4497, %v4499
      %v4501 = vrot.slane %v4473, %v4500
      %v4502 = vcombine.low %v4480, %v4487
      %v4503 = vcombine.low %v4494, %v4501
      %v4505 = vunpack.c.l.s4 1966171168
      %v4506 = vunpack.c.0.s8 %v4505
      %v4507 = vlaneseq
      %v4508 = vshrl.u32 %v4507, 7
      %v4509 = vsub.s32 %v4506, %v4508
      %v4510 = vrot.slane %v4502, %v4509
      %v4512 = vunpack.c.l.s4 1966171168
      %v4513 = vunpack.c.0.s8 %v4512
      %v4514 = vlaneseq
      %v4515 = vshrl.u32 %v4514, 7
      %v4516 = vsub.s32 %v4513, %v4515
      %v4517 = vrot.slane %v4503, %v4516
      %v4518 = vcombine.low %v4510, %v4517
      %v4519 = vcombine.low %v3911, %v3926
      %v4520 = vcombine.low %v3933, %v3934
      %v4521 = vcombine.low %v3935, %v3950
      %v4522 = vcombine.low %v3957, %v3958
      %v4524 = vunpack.c.l.s4 1966171168
      %v4525 = vunpack.c.0.s8 %v4524
      %v4526 = vlaneseq
      %v4527 = vshrl.u32 %v4526, 7
      %v4528 = vsub.s32 %v4525, %v4527
      %v4529 = vrot.slane %v4519, %v4528
      %v4531 = vunpack.c.l.s4 1966171168
      %v4532 = vunpack.c.0.s8 %v4531
      %v4533 = vlaneseq
      %v4534 = vshrl.u32 %v4533, 7
      %v4535 = vsub.s32 %v4532, %v4534
      %v4536 = vrot.slane %v4520, %v4535
      %v4538 = vunpack.c.l.s4 1966171168
      %v4539 = vunpack.c.0.s8 %v4538
      %v4540 = vlaneseq
      %v4541 = vshrl.u32 %v4540, 7
      %v4542 = vsub.s32 %v4539, %v4541
      %v4543 = vrot.slane %v4521, %v4542
      %v4545 = vunpack.c.l.s4 1966171168
      %v4546 = vunpack.c.0.s8 %v4545
      %v4547 = vlaneseq
      %v4548 = vshrl.u32 %v4547, 7
      %v4549 = vsub.s32 %v4546, %v4548
      %v4550 = vrot.slane %v4522, %v4549
      %v4551 = vcombine.low %v4529, %v4536
      %v4552 = vcombine.low %v4543, %v4550
      %v4554 = vunpack.c.l.s4 1966171168
      %v4555 = vunpack.c.0.s8 %v4554
      %v4556 = vlaneseq
      %v4557 = vshrl.u32 %v4556, 7
      %v4558 = vsub.s32 %v4555, %v4557
      %v4559 = vrot.slane %v4551, %v4558
      %v4561 = vunpack.c.l.s4 1966171168
      %v4562 = vunpack.c.0.s8 %v4561
      %v4563 = vlaneseq
      %v4564 = vshrl.u32 %v4563, 7
      %v4565 = vsub.s32 %v4562, %v4564
      %v4566 = vrot.slane %v4552, %v4565
      %v4567 = vcombine.low %v4559, %v4566
      %v4568 = vcombine.low %v3959, %v3973
      %v4569 = vcombine.low %v3988, %v3995
      %v4570 = vcombine.low %v3996, %v3997
      %v4571 = vcombine.low %v4012, %v4019
      %v4573 = vunpack.c.l.s4 1966171168
      %v4574 = vunpack.c.0.s8 %v4573
      %v4575 = vlaneseq
      %v4576 = vshrl.u32 %v4575, 7
      %v4577 = vsub.s32 %v4574, %v4576
      %v4578 = vrot.slane %v4568, %v4577
      %v4580 = vunpack.c.l.s4 1966171168
      %v4581 = vunpack.c.0.s8 %v4580
      %v4582 = vlaneseq
      %v4583 = vshrl.u32 %v4582, 7
      %v4584 = vsub.s32 %v4581, %v4583
      %v4585 = vrot.slane %v4569, %v4584
      %v4587 = vunpack.c.l.s4 1966171168
      %v4588 = vunpack.c.0.s8 %v4587
      %v4589 = vlaneseq
      %v4590 = vshrl.u32 %v4589, 7
      %v4591 = vsub.s32 %v4588, %v4590
      %v4592 = vrot.slane %v4570, %v4591
      %v4594 = vunpack.c.l.s4 1966171168
      %v4595 = vunpack.c.0.s8 %v4594
      %v4596 = vlaneseq
      %v4597 = vshrl.u32 %v4596, 7
      %v4598 = vsub.s32 %v4595, %v4597
      %v4599 = vrot.slane %v4571, %v4598
      %v4600 = vcombine.low %v4578, %v4585
      %v4601 = vcombine.low %v4592, %v4599
      %v4603 = vunpack.c.l.s4 1966171168
      %v4604 = vunpack.c.0.s8 %v4603
      %v4605 = vlaneseq
      %v4606 = vshrl.u32 %v4605, 7
      %v4607 = vsub.s32 %v4604, %v4606
      %v4608 = vrot.slane %v4600, %v4607
      %v4610 = vunpack.c.l.s4 1966171168
      %v4611 = vunpack.c.0.s8 %v4610
      %v4612 = vlaneseq
      %v4613 = vshrl.u32 %v4612, 7
      %v4614 = vsub.s32 %v4611, %v4613
      %v4615 = vrot.slane %v4601, %v4614
      %v4616 = vcombine.low %v4608, %v4615
      %v4617 = vcombine.low %v4020, %v4021
      %v4618 = vcombine.low %v4035, %v4050
      %v4619 = vcombine.low %v4057, %v4058
      %v4620 = vcombine.low %v4059, %v4074
      %v4622 = vunpack.c.l.s4 1966171168
      %v4623 = vunpack.c.0.s8 %v4622
      %v4624 = vlaneseq
      %v4625 = vshrl.u32 %v4624, 7
      %v4626 = vsub.s32 %v4623, %v4625
      %v4627 = vrot.slane %v4617, %v4626
      %v4629 = vunpack.c.l.s4 1966171168
      %v4630 = vunpack.c.0.s8 %v4629
      %v4631 = vlaneseq
      %v4632 = vshrl.u32 %v4631, 7
      %v4633 = vsub.s32 %v4630, %v4632
      %v4634 = vrot.slane %v4618, %v4633
      %v4636 = vunpack.c.l.s4 1966171168
      %v4637 = vunpack.c.0.s8 %v4636
      %v4638 = vlaneseq
      %v4639 = vshrl.u32 %v4638, 7
      %v4640 = vsub.s32 %v4637, %v4639
      %v4641 = vrot.slane %v4619, %v4640
      %v4643 = vunpack.c.l.s4 1966171168
      %v4644 = vunpack.c.0.s8 %v4643
      %v4645 = vlaneseq
      %v4646 = vshrl.u32 %v4645, 7
      %v4647 = vsub.s32 %v4644, %v4646
      %v4648 = vrot.slane %v4620, %v4647
      %v4649 = vcombine.low %v4627, %v4634
      %v4650 = vcombine.low %v4641, %v4648
      %v4652 = vunpack.c.l.s4 1966171168
      %v4653 = vunpack.c.0.s8 %v4652
      %v4654 = vlaneseq
      %v4655 = vshrl.u32 %v4654, 7
      %v4656 = vsub.s32 %v4653, %v4655
      %v4657 = vrot.slane %v4649, %v4656
      %v4659 = vunpack.c.l.s4 1966171168
      %v4660 = vunpack.c.0.s8 %v4659
      %v4661 = vlaneseq
      %v4662 = vshrl.u32 %v4661, 7
      %v4663 = vsub.s32 %v4660, %v4662
      %v4664 = vrot.slane %v4650, %v4663
      %v4665 = vcombine.low %v4657, %v4664
      %v4666 = vcombine.low %v4081, %v4082
      %v4667 = vcombine.low %v4083, %v4097
      %v4668 = vcombine.low %v4112, %v4119
      %v4669 = vcombine.low %v4120, %v4121
      %v4671 = vunpack.c.l.s4 1966171168
      %v4672 = vunpack.c.0.s8 %v4671
      %v4673 = vlaneseq
      %v4674 = vshrl.u32 %v4673, 7
      %v4675 = vsub.s32 %v4672, %v4674
      %v4676 = vrot.slane %v4666, %v4675
      %v4678 = vunpack.c.l.s4 1966171168
      %v4679 = vunpack.c.0.s8 %v4678
      %v4680 = vlaneseq
      %v4681 = vshrl.u32 %v4680, 7
      %v4682 = vsub.s32 %v4679, %v4681
      %v4683 = vrot.slane %v4667, %v4682
      %v4685 = vunpack.c.l.s4 1966171168
      %v4686 = vunpack.c.0.s8 %v4685
      %v4687 = vlaneseq
      %v4688 = vshrl.u32 %v4687, 7
      %v4689 = vsub.s32 %v4686, %v4688
      %v4690 = vrot.slane %v4668, %v4689
      %v4692 = vunpack.c.l.s4 1966171168
      %v4693 = vunpack.c.0.s8 %v4692
      %v4694 = vlaneseq
      %v4695 = vshrl.u32 %v4694, 7
      %v4696 = vsub.s32 %v4693, %v4695
      %v4697 = vrot.slane %v4669, %v4696
      %v4698 = vcombine.low %v4676, %v4683
      %v4699 = vcombine.low %v4690, %v4697
      %v4701 = vunpack.c.l.s4 1966171168
      %v4702 = vunpack.c.0.s8 %v4701
      %v4703 = vlaneseq
      %v4704 = vshrl.u32 %v4703, 7
      %v4705 = vsub.s32 %v4702, %v4704
      %v4706 = vrot.slane %v4698, %v4705
      %v4708 = vunpack.c.l.s4 1966171168
      %v4709 = vunpack.c.0.s8 %v4708
      %v4710 = vlaneseq
      %v4711 = vshrl.u32 %v4710, 7
      %v4712 = vsub.s32 %v4709, %v4711
      %v4713 = vrot.slane %v4699, %v4712
      %v4714 = vcombine.low %v4706, %v4713
      %v4715 = vcombine.low %v4136, %v4143
      %v4716 = vcombine.low %v4144, %v4145
      %v4717 = vcombine.low %v4159, %v4174
      %v4718 = vcombine.low %v4181, %v4182
      %v4720 = vunpack.c.l.s4 1966171168
      %v4721 = vunpack.c.0.s8 %v4720
      %v4722 = vlaneseq
      %v4723 = vshrl.u32 %v4722, 7
      %v4724 = vsub.s32 %v4721, %v4723
      %v4725 = vrot.slane %v4715, %v4724
      %v4727 = vunpack.c.l.s4 1966171168
      %v4728 = vunpack.c.0.s8 %v4727
      %v4729 = vlaneseq
      %v4730 = vshrl.u32 %v4729, 7
      %v4731 = vsub.s32 %v4728, %v4730
      %v4732 = vrot.slane %v4716, %v4731
      %v4734 = vunpack.c.l.s4 1966171168
      %v4735 = vunpack.c.0.s8 %v4734
      %v4736 = vlaneseq
      %v4737 = vshrl.u32 %v4736, 7
      %v4738 = vsub.s32 %v4735, %v4737
      %v4739 = vrot.slane %v4717, %v4738
      %v4741 = vunpack.c.l.s4 1966171168
      %v4742 = vunpack.c.0.s8 %v4741
      %v4743 = vlaneseq
      %v4744 = vshrl.u32 %v4743, 7
      %v4745 = vsub.s32 %v4742, %v4744
      %v4746 = vrot.slane %v4718, %v4745
      %v4747 = vcombine.low %v4725, %v4732
      %v4748 = vcombine.low %v4739, %v4746
      %v4750 = vunpack.c.l.s4 1966171168
      %v4751 = vunpack.c.0.s8 %v4750
      %v4752 = vlaneseq
      %v4753 = vshrl.u32 %v4752, 7
      %v4754 = vsub.s32 %v4751, %v4753
      %v4755 = vrot.slane %v4747, %v4754
      %v4757 = vunpack.c.l.s4 1966171168
      %v4758 = vunpack.c.0.s8 %v4757
      %v4759 = vlaneseq
      %v4760 = vshrl.u32 %v4759, 7
      %v4761 = vsub.s32 %v4758, %v4760
      %v4762 = vrot.slane %v4748, %v4761
      %v4763 = vcombine.low %v4755, %v4762
      %v4764 = vcombine.low %v4183, %v4198
      %v4765 = vcombine.low %v4205, %v4206
      %v4766 = vcombine.low %v4207, %v4221
      %v4767 = vcombine.low %v4236, %v4243
      %v4769 = vunpack.c.l.s4 1966171168
      %v4770 = vunpack.c.0.s8 %v4769
      %v4771 = vlaneseq
      %v4772 = vshrl.u32 %v4771, 7
      %v4773 = vsub.s32 %v4770, %v4772
      %v4774 = vrot.slane %v4764, %v4773
      %v4776 = vunpack.c.l.s4 1966171168
      %v4777 = vunpack.c.0.s8 %v4776
      %v4778 = vlaneseq
      %v4779 = vshrl.u32 %v4778, 7
      %v4780 = vsub.s32 %v4777, %v4779
      %v4781 = vrot.slane %v4765, %v4780
      %v4783 = vunpack.c.l.s4 1966171168
      %v4784 = vunpack.c.0.s8 %v4783
      %v4785 = vlaneseq
      %v4786 = vshrl.u32 %v4785, 7
      %v4787 = vsub.s32 %v4784, %v4786
      %v4788 = vrot.slane %v4766, %v4787
      %v4790 = vunpack.c.l.s4 1966171168
      %v4791 = vunpack.c.0.s8 %v4790
      %v4792 = vlaneseq
      %v4793 = vshrl.u32 %v4792, 7
      %v4794 = vsub.s32 %v4791, %v4793
      %v4795 = vrot.slane %v4767, %v4794
      %v4796 = vcombine.low %v4774, %v4781
      %v4797 = vcombine.low %v4788, %v4795
      %v4799 = vunpack.c.l.s4 1966171168
      %v4800 = vunpack.c.0.s8 %v4799
      %v4801 = vlaneseq
      %v4802 = vshrl.u32 %v4801, 7
      %v4803 = vsub.s32 %v4800, %v4802
      %v4804 = vrot.slane %v4796, %v4803
      %v4806 = vunpack.c.l.s4 1966171168
      %v4807 = vunpack.c.0.s8 %v4806
      %v4808 = vlaneseq
      %v4809 = vshrl.u32 %v4808, 7
      %v4810 = vsub.s32 %v4807, %v4809
      %v4811 = vrot.slane %v4797, %v4810
      %v4812 = vcombine.low %v4804, %v4811
      %v4813 = vcombine.low %v4244, %v4245
      %v4814 = vcombine.low %v4260, %v4267
      %v4815 = vcombine.low %v4268, %v4269
      %v4816 = vcombine.low %v4283, %v4298
      %v4818 = vunpack.c.l.s4 1966171168
      %v4819 = vunpack.c.0.s8 %v4818
      %v4820 = vlaneseq
      %v4821 = vshrl.u32 %v4820, 7
      %v4822 = vsub.s32 %v4819, %v4821
      %v4823 = vrot.slane %v4813, %v4822
      %v4825 = vunpack.c.l.s4 1966171168
      %v4826 = vunpack.c.0.s8 %v4825
      %v4827 = vlaneseq
      %v4828 = vshrl.u32 %v4827, 7
      %v4829 = vsub.s32 %v4826, %v4828
      %v4830 = vrot.slane %v4814, %v4829
      %v4832 = vunpack.c.l.s4 1966171168
      %v4833 = vunpack.c.0.s8 %v4832
      %v4834 = vlaneseq
      %v4835 = vshrl.u32 %v4834, 7
      %v4836 = vsub.s32 %v4833, %v4835
      %v4837 = vrot.slane %v4815, %v4836
      %v4839 = vunpack.c.l.s4 1966171168
      %v4840 = vunpack.c.0.s8 %v4839
      %v4841 = vlaneseq
      %v4842 = vshrl.u32 %v4841, 7
      %v4843 = vsub.s32 %v4840, %v4842
      %v4844 = vrot.slane %v4816, %v4843
      %v4845 = vcombine.low %v4823, %v4830
      %v4846 = vcombine.low %v4837, %v4844
      %v4848 = vunpack.c.l.s4 1966171168
      %v4849 = vunpack.c.0.s8 %v4848
      %v4850 = vlaneseq
      %v4851 = vshrl.u32 %v4850, 7
      %v4852 = vsub.s32 %v4849, %v4851
      %v4853 = vrot.slane %v4845, %v4852
      %v4855 = vunpack.c.l.s4 1966171168
      %v4856 = vunpack.c.0.s8 %v4855
      %v4857 = vlaneseq
      %v4858 = vshrl.u32 %v4857, 7
      %v4859 = vsub.s32 %v4856, %v4858
      %v4860 = vrot.slane %v4846, %v4859
      %v4861 = vcombine.low %v4853, %v4860
      %v4862 = vcombine.low %v4305, %v4306
      %v4863 = vcombine.low %v4307, %v4322
      %v4864 = vcombine.low %v4329, %v4330
      %v4865 = vcombine.low %v4331, %v4345
      %v4867 = vunpack.c.l.s4 1966171168
      %v4868 = vunpack.c.0.s8 %v4867
      %v4869 = vlaneseq
      %v4870 = vshrl.u32 %v4869, 7
      %v4871 = vsub.s32 %v4868, %v4870
      %v4872 = vrot.slane %v4862, %v4871
      %v4874 = vunpack.c.l.s4 1966171168
      %v4875 = vunpack.c.0.s8 %v4874
      %v4876 = vlaneseq
      %v4877 = vshrl.u32 %v4876, 7
      %v4878 = vsub.s32 %v4875, %v4877
      %v4879 = vrot.slane %v4863, %v4878
      %v4881 = vunpack.c.l.s4 1966171168
      %v4882 = vunpack.c.0.s8 %v4881
      %v4883 = vlaneseq
      %v4884 = vshrl.u32 %v4883, 7
      %v4885 = vsub.s32 %v4882, %v4884
      %v4886 = vrot.slane %v4864, %v4885
      %v4888 = vunpack.c.l.s4 1966171168
      %v4889 = vunpack.c.0.s8 %v4888
      %v4890 = vlaneseq
      %v4891 = vshrl.u32 %v4890, 7
      %v4892 = vsub.s32 %v4889, %v4891
      %v4893 = vrot.slane %v4865, %v4892
      %v4894 = vcombine.low %v4872, %v4879
      %v4895 = vcombine.low %v4886, %v4893
      %v4897 = vunpack.c.l.s4 1966171168
      %v4898 = vunpack.c.0.s8 %v4897
      %v4899 = vlaneseq
      %v4900 = vshrl.u32 %v4899, 7
      %v4901 = vsub.s32 %v4898, %v4900
      %v4902 = vrot.slane %v4894, %v4901
      %v4904 = vunpack.c.l.s4 1966171168
      %v4905 = vunpack.c.0.s8 %v4904
      %v4906 = vlaneseq
      %v4907 = vshrl.u32 %v4906, 7
      %v4908 = vsub.s32 %v4905, %v4907
      %v4909 = vrot.slane %v4895, %v4908
      %v4910 = vcombine.low %v4902, %v4909
      %v4911 = vcombine.low %v4360, %v4367
      %v4912 = vcombine.low %v4368, %v4369
      %v4913 = vcombine.low %v4384, %v4391
      %v4914 = vcombine.low %v4392, %v4393
      %v4916 = vunpack.c.l.s4 1966171168
      %v4917 = vunpack.c.0.s8 %v4916
      %v4918 = vlaneseq
      %v4919 = vshrl.u32 %v4918, 7
      %v4920 = vsub.s32 %v4917, %v4919
      %v4921 = vrot.slane %v4911, %v4920
      %v4923 = vunpack.c.l.s4 1966171168
      %v4924 = vunpack.c.0.s8 %v4923
      %v4925 = vlaneseq
      %v4926 = vshrl.u32 %v4925, 7
      %v4927 = vsub.s32 %v4924, %v4926
      %v4928 = vrot.slane %v4912, %v4927
      %v4930 = vunpack.c.l.s4 1966171168
      %v4931 = vunpack.c.0.s8 %v4930
      %v4932 = vlaneseq
      %v4933 = vshrl.u32 %v4932, 7
      %v4934 = vsub.s32 %v4931, %v4933
      %v4935 = vrot.slane %v4913, %v4934
      %v4937 = vunpack.c.l.s4 1966171168
      %v4938 = vunpack.c.0.s8 %v4937
      %v4939 = vlaneseq
      %v4940 = vshrl.u32 %v4939, 7
      %v4941 = vsub.s32 %v4938, %v4940
      %v4942 = vrot.slane %v4914, %v4941
      %v4943 = vcombine.low %v4921, %v4928
      %v4944 = vcombine.low %v4935, %v4942
      %v4946 = vunpack.c.l.s4 1966171168
      %v4947 = vunpack.c.0.s8 %v4946
      %v4948 = vlaneseq
      %v4949 = vshrl.u32 %v4948, 7
      %v4950 = vsub.s32 %v4947, %v4949
      %v4951 = vrot.slane %v4943, %v4950
      %v4953 = vunpack.c.l.s4 1966171168
      %v4954 = vunpack.c.0.s8 %v4953
      %v4955 = vlaneseq
      %v4956 = vshrl.u32 %v4955, 7
      %v4957 = vsub.s32 %v4954, %v4956
      %v4958 = vrot.slane %v4944, %v4957
      %v4959 = vcombine.low %v4951, %v4958
      %v4960 = vcombine.low %v4407, %v4422
      %v4961 = vcombine.low %v4429, %v4430
      %v4962 = vcombine.low %v4431, %v4446
      %v4963 = vcombine.low %v4453, %v4454
      %v4965 = vunpack.c.l.s4 1966171168
      %v4966 = vunpack.c.0.s8 %v4965
      %v4967 = vlaneseq
      %v4968 = vshrl.u32 %v4967, 7
      %v4969 = vsub.s32 %v4966, %v4968
      %v4970 = vrot.slane %v4960, %v4969
      %v4972 = vunpack.c.l.s4 1966171168
      %v4973 = vunpack.c.0.s8 %v4972
      %v4974 = vlaneseq
      %v4975 = vshrl.u32 %v4974, 7
      %v4976 = vsub.s32 %v4973, %v4975
      %v4977 = vrot.slane %v4961, %v4976
      %v4979 = vunpack.c.l.s4 1966171168
      %v4980 = vunpack.c.0.s8 %v4979
      %v4981 = vlaneseq
      %v4982 = vshrl.u32 %v4981, 7
      %v4983 = vsub.s32 %v4980, %v4982
      %v4984 = vrot.slane %v4962, %v4983
      %v4986 = vunpack.c.l.s4 1966171168
      %v4987 = vunpack.c.0.s8 %v4986
      %v4988 = vlaneseq
      %v4989 = vshrl.u32 %v4988, 7
      %v4990 = vsub.s32 %v4987, %v4989
      %v4991 = vrot.slane %v4963, %v4990
      %v4992 = vcombine.low %v4970, %v4977
      %v4993 = vcombine.low %v4984, %v4991
      %v4995 = vunpack.c.l.s4 1966171168
      %v4996 = vunpack.c.0.s8 %v4995
      %v4997 = vlaneseq
      %v4998 = vshrl.u32 %v4997, 7
      %v4999 = vsub.s32 %v4996, %v4998
      %v5000 = vrot.slane %v4992, %v4999
      %v5002 = vunpack.c.l.s4 1966171168
      %v5003 = vunpack.c.0.s8 %v5002
      %v5004 = vlaneseq
      %v5005 = vshrl.u32 %v5004, 7
      %v5006 = vsub.s32 %v5003, %v5005
      %v5007 = vrot.slane %v4993, %v5006
      %v5008 = vcombine.low %v5000, %v5007
      %v5009 = vcombine.low %v4455, %v4469
      %v5011 = vunpack.c.l.s4 1966171168
      %v5012 = vunpack.c.0.s8 %v5011
      %v5013 = vlaneseq
      %v5014 = vshrl.u32 %v5013, 7
      %v5015 = vsub.s32 %v5012, %v5014
      %v5016 = vrot.slane %v5009, %v5015
      %v5018 = vunpack.c.l.s4 1966171168
      %v5019 = vunpack.c.0.s8 %v5018
      %v5020 = vlaneseq
      %v5021 = vshrl.u32 %v5020, 7
      %v5022 = vsub.s32 %v5019, %v5021
      %v5023 = vrot.slane %v5016, %v5022
      %v5025 = vsel %vm1765, %v4518, 0
      %v5028 = vsel %vm1765, %v4567, 0
      %v5031 = vsel %vm1765, %v4616, 0
      %v5034 = vsel %vm1765, %v4665, 0
      %v5037 = vsel %vm1765, %v4714, 0
      %v5040 = vsel %vm1765, %v4763, 0
      %v5043 = vsel %vm1765, %v4812, 0
      %v5046 = vsel %vm1765, %v4861, 0
      %v5049 = vsel %vm1765, %v4910, 0
      %v5052 = vsel %vm1765, %v4959, 0
      %v5055 = vsel %vm1765, %v5008, 0
      %v5058 = vsel %vm1765, %v5023, 0
      %5060 = vmatprep.subr.bf16.mxu0 0
      %5061 = vmatpush1.bf16.msra.mxu0 %v1762
      %5062 = vmatprep.subr.bf16.mxu0 0
      %5063 = vmatpush1.bf16.msra.mxu0 %v1807
      %5064 = vmatprep.subr.bf16.mxu0 0
      %5065 = vmatpush1.bf16.msra.mxu0 0
      %5066 = vmatprep.subr.bf16.mxu0 0
      %5067 = vmatpush1.bf16.msra.mxu0 0
      %5068 = vmatprep.subr.bf16.mxu0 0
      %5069 = vmatpush1.bf16.msra.mxu0 0
      %5070 = vmatprep.subr.bf16.mxu0 0
      %5071 = vmatpush1.bf16.msra.mxu0 0
      %5072 = vmatprep.subr.bf16.mxu0 0
      %5073 = vmatpush1.bf16.msra.mxu0 0
      %5074 = vmatprep.subr.bf16.mxu0 0
      %5075 = vmatpush1.bf16.msra.mxu0 0
      %5076 = vmatprep.subr.bf16.mxu0 0
      %5077 = vmatpush1.bf16.msra.mxu0 0
      %5078 = vmatprep.subr.bf16.mxu0 0
      %5079 = vmatpush1.bf16.msra.mxu0 0
      %5080 = vmatprep.subr.bf16.mxu0 0
      %5081 = vmatpush1.bf16.msra.mxu0 0
      %5082 = vmatprep.subr.bf16.mxu0 0
      %5083 = vmatpush1.bf16.msra.mxu0 0
      %5084 = vmatprep.subr.bf16.mxu0 0
      %5085 = vmatpush1.bf16.msra.mxu0 0
      %5086 = vmatprep.subr.bf16.mxu0 0
      %5087 = vmatpush1.bf16.msra.mxu0 0
      %5088 = vmatprep.subr.bf16.mxu0 0
      %5089 = vmatpush1.bf16.msra.mxu0 0
      %5090 = vmatprep.subr.bf16.mxu0 0
      %5091 = vmatpush1.bf16.msra.mxu0 0
      %5092 = vmatprep.mubr.bf16.mxu0 0
      %5093 = vmatmul.mubr.bf16.gmra.mrb[0].mxu0 %v5025
      %v5094 = vpop.f32.mrb[0].mxu0
      %v5095 = vadd.f32 %v1198, %v5094
      %v5096 = vpop.f32.mrb[0].mxu0
      %v5097 = vpop.f32.mrb[0].mxu0
      %v5098 = vadd.f32 %v1198, %v5097
      %v5099 = vpop.f32.mrb[0].mxu0
      %5100 = vmatprep.mubr.bf16.mxu0 0
      %5101 = vmatmul.mubr.bf16.gmra.mrb[0].mxu0 %v5028
      %v5102 = vpop.f32.mrb[0].mxu0
      %v5103 = vadd.f32 %v1198, %v5102
      %v5104 = vpop.f32.mrb[0].mxu0
      %v5105 = vpop.f32.mrb[0].mxu0
      %v5106 = vadd.f32 %v1198, %v5105
      %v5107 = vpop.f32.mrb[0].mxu0
      %5108 = vmatprep.mubr.bf16.mxu0 0
      %5109 = vmatmul.mubr.bf16.gmra.mrb[0].mxu0 %v5031
      %v5110 = vpop.f32.mrb[0].mxu0
      %v5111 = vadd.f32 %v1198, %v5110
      %v5112 = vpop.f32.mrb[0].mxu0
      %v5113 = vpop.f32.mrb[0].mxu0
      %v5114 = vadd.f32 %v1198, %v5113
      %v5115 = vpop.f32.mrb[0].mxu0
      %5116 = vmatprep.mubr.bf16.mxu0 0
      %5117 = vmatmul.mubr.bf16.gmra.mrb[0].mxu0 %v5034
      %v5118 = vpop.f32.mrb[0].mxu0
      %v5119 = vadd.f32 %v1198, %v5118
      %v5120 = vpop.f32.mrb[0].mxu0
      %v5121 = vpop.f32.mrb[0].mxu0
      %v5122 = vadd.f32 %v1198, %v5121
      %v5123 = vpop.f32.mrb[0].mxu0
      %5124 = vmatprep.mubr.bf16.mxu0 0
      %5125 = vmatmul.mubr.bf16.gmra.mrb[0].mxu0 %v5037
      %v5126 = vpop.f32.mrb[0].mxu0
      %v5127 = vadd.f32 %v1198, %v5126
      %v5128 = vpop.f32.mrb[0].mxu0
      %v5129 = vpop.f32.mrb[0].mxu0
      %v5130 = vadd.f32 %v1198, %v5129
      %v5131 = vpop.f32.mrb[0].mxu0
      %5132 = vmatprep.mubr.bf16.mxu0 0
      %5133 = vmatmul.mubr.bf16.gmra.mrb[0].mxu0 %v5040
      %v5134 = vpop.f32.mrb[0].mxu0
      %v5135 = vadd.f32 %v1198, %v5134
      %v5136 = vpop.f32.mrb[0].mxu0
      %v5137 = vpop.f32.mrb[0].mxu0
      %v5138 = vadd.f32 %v1198, %v5137
      %v5139 = vpop.f32.mrb[0].mxu0
      %5140 = vmatprep.mubr.bf16.mxu0 0
      %5141 = vmatmul.mubr.bf16.gmra.mrb[0].mxu0 %v5043
      %v5142 = vpop.f32.mrb[0].mxu0
      %v5143 = vadd.f32 %v1198, %v5142
      %v5144 = vpop.f32.mrb[0].mxu0
      %v5145 = vpop.f32.mrb[0].mxu0
      %v5146 = vadd.f32 %v1198, %v5145
      %v5147 = vpop.f32.mrb[0].mxu0
      %5148 = vmatprep.mubr.bf16.mxu0 0
      %5149 = vmatmul.mubr.bf16.gmra.mrb[0].mxu0 %v5046
      %v5150 = vpop.f32.mrb[0].mxu0
      %v5151 = vadd.f32 %v1198, %v5150
      %v5152 = vpop.f32.mrb[0].mxu0
      %v5153 = vpop.f32.mrb[0].mxu0
      %v5154 = vadd.f32 %v1198, %v5153
      %v5155 = vpop.f32.mrb[0].mxu0
      %5156 = vmatprep.mubr.bf16.mxu0 0
      %5157 = vmatmul.mubr.bf16.gmra.mrb[0].mxu0 %v5049
      %v5158 = vpop.f32.mrb[0].mxu0
      %v5159 = vadd.f32 %v1198, %v5158
      %v5160 = vpop.f32.mrb[0].mxu0
      %v5161 = vpop.f32.mrb[0].mxu0
      %v5162 = vadd.f32 %v1198, %v5161
      %v5163 = vpop.f32.mrb[0].mxu0
      %5164 = vmatprep.mubr.bf16.mxu0 0
      %5165 = vmatmul.mubr.bf16.gmra.mrb[0].mxu0 %v5052
      %v5166 = vpop.f32.mrb[0].mxu0
      %v5167 = vadd.f32 %v1198, %v5166
      %v5168 = vpop.f32.mrb[0].mxu0
      %v5169 = vpop.f32.mrb[0].mxu0
      %v5170 = vadd.f32 %v1198, %v5169
      %v5171 = vpop.f32.mrb[0].mxu0
      %5172 = vmatprep.mubr.bf16.mxu0 0
      %5173 = vmatmul.mubr.bf16.gmra.mrb[0].mxu0 %v5055
      %v5174 = vpop.f32.mrb[0].mxu0
      %v5175 = vadd.f32 %v1198, %v5174
      %v5176 = vpop.f32.mrb[0].mxu0
      %v5177 = vpop.f32.mrb[0].mxu0
      %v5178 = vadd.f32 %v1198, %v5177
      %v5179 = vpop.f32.mrb[0].mxu0
      %5180 = vmatprep.mubr.bf16.mxu0 0
      %5181 = vmatmul.mubr.bf16.gmra.mrb[0].mxu0 %v5058
      %v5182 = vpop.f32.mrb[0].mxu0
      %v5183 = vadd.f32 %v1198, %v5182
      %v5184 = vpop.f32.mrb[0].mxu0
      %v5185 = vpop.f32.mrb[0].mxu0
      %v5186 = vpop.f32.mrb[0].mxu0
      %5187 = vdwg.mxu0
      %v5188 = vmax.f32 %v5095, 0.0
      %v5189 = vmax.f32 %v5098, 0.0
      %v5190 = vmax.f32 %v5103, 0.0
      %v5191 = vmax.f32 %v5106, 0.0
      %v5192 = vmax.f32 %v5111, 0.0
      %v5193 = vmax.f32 %v5114, 0.0
      %v5194 = vmax.f32 %v5119, 0.0
      %v5195 = vmax.f32 %v5122, 0.0
      %v5196 = vmax.f32 %v5127, 0.0
      %v5197 = vmax.f32 %v5130, 0.0
      %v5198 = vmax.f32 %v5135, 0.0
      %v5199 = vmax.f32 %v5138, 0.0
      %v5200 = vmax.f32 %v5143, 0.0
      %v5201 = vmax.f32 %v5146, 0.0
      %v5202 = vmax.f32 %v5151, 0.0
      %v5203 = vmax.f32 %v5154, 0.0
      %v5204 = vmax.f32 %v5159, 0.0
      %v5205 = vmax.f32 %v5162, 0.0
      %v5206 = vmax.f32 %v5167, 0.0
      %v5207 = vmax.f32 %v5170, 0.0
      %v5208 = vmax.f32 %v5175, 0.0
      %v5209 = vmax.f32 %v5178, 0.0
      %v5210 = vmax.f32 %v5183, 0.0
      %v5234 = vcombine.high %v5188, %v5188
      %v5236 = vunpack.c.l.s4 1983009808
      %v5237 = vunpack.c.0.s8 %v5236
      %v5238 = vlaneseq
      %v5239 = vshrl.u32 %v5238, 7
      %v5240 = vsub.s32 %v5237, %v5239
      %v5241 = vrot.slane %v5188, %v5240
      %v5243 = vunpack.c.l.s4 1983009808
      %v5244 = vunpack.c.0.s8 %v5243
      %v5245 = vlaneseq
      %v5246 = vshrl.u32 %v5245, 7
      %v5247 = vsub.s32 %v5244, %v5246
      %v5248 = vrot.slane %v5234, %v5247
      %v5249 = vcombine.high %v5241, %v5241
      %v5250 = vcombine.high %v5248, %v5248
      %v5251 = vcombine.high %v5189, %v5189
      %v5253 = vunpack.c.l.s4 1983009808
      %v5254 = vunpack.c.0.s8 %v5253
      %v5255 = vlaneseq
      %v5256 = vshrl.u32 %v5255, 7
      %v5257 = vsub.s32 %v5254, %v5256
      %v5258 = vrot.slane %v5189, %v5257
      %v5260 = vunpack.c.l.s4 1983009808
      %v5261 = vunpack.c.0.s8 %v5260
      %v5262 = vlaneseq
      %v5263 = vshrl.u32 %v5262, 7
      %v5264 = vsub.s32 %v5261, %v5263
      %v5265 = vrot.slane %v5251, %v5264
      %v5266 = vcombine.high %v5258, %v5258
      %v5267 = vcombine.high %v5265, %v5265
      %v5268 = vcombine.high %v5190, %v5190
      %v5270 = vunpack.c.l.s4 1983009808
      %v5271 = vunpack.c.0.s8 %v5270
      %v5272 = vlaneseq
      %v5273 = vshrl.u32 %v5272, 7
      %v5274 = vsub.s32 %v5271, %v5273
      %v5275 = vrot.slane %v5190, %v5274
      %v5277 = vunpack.c.l.s4 1983009808
      %v5278 = vunpack.c.0.s8 %v5277
      %v5279 = vlaneseq
      %v5280 = vshrl.u32 %v5279, 7
      %v5281 = vsub.s32 %v5278, %v5280
      %v5282 = vrot.slane %v5268, %v5281
      %v5283 = vcombine.high %v5275, %v5275
      %v5284 = vcombine.high %v5282, %v5282
      %v5285 = vcombine.high %v5191, %v5191
      %v5287 = vunpack.c.l.s4 1983009808
      %v5288 = vunpack.c.0.s8 %v5287
      %v5289 = vlaneseq
      %v5290 = vshrl.u32 %v5289, 7
      %v5291 = vsub.s32 %v5288, %v5290
      %v5292 = vrot.slane %v5191, %v5291
      %v5294 = vunpack.c.l.s4 1983009808
      %v5295 = vunpack.c.0.s8 %v5294
      %v5296 = vlaneseq
      %v5297 = vshrl.u32 %v5296, 7
      %v5298 = vsub.s32 %v5295, %v5297
      %v5299 = vrot.slane %v5285, %v5298
      %v5300 = vcombine.high %v5292, %v5292
      %v5301 = vcombine.high %v5299, %v5299
      %v5302 = vcombine.high %v5192, %v5192
      %v5304 = vunpack.c.l.s4 1983009808
      %v5305 = vunpack.c.0.s8 %v5304
      %v5306 = vlaneseq
      %v5307 = vshrl.u32 %v5306, 7
      %v5308 = vsub.s32 %v5305, %v5307
      %v5309 = vrot.slane %v5192, %v5308
      %v5311 = vunpack.c.l.s4 1983009808
      %v5312 = vunpack.c.0.s8 %v5311
      %v5313 = vlaneseq
      %v5314 = vshrl.u32 %v5313, 7
      %v5315 = vsub.s32 %v5312, %v5314
      %v5316 = vrot.slane %v5302, %v5315
      %v5317 = vcombine.high %v5309, %v5309
      %v5318 = vcombine.high %v5316, %v5316
      %v5319 = vcombine.high %v5193, %v5193
      %v5321 = vunpack.c.l.s4 1983009808
      %v5322 = vunpack.c.0.s8 %v5321
      %v5323 = vlaneseq
      %v5324 = vshrl.u32 %v5323, 7
      %v5325 = vsub.s32 %v5322, %v5324
      %v5326 = vrot.slane %v5193, %v5325
      %v5328 = vunpack.c.l.s4 1983009808
      %v5329 = vunpack.c.0.s8 %v5328
      %v5330 = vlaneseq
      %v5331 = vshrl.u32 %v5330, 7
      %v5332 = vsub.s32 %v5329, %v5331
      %v5333 = vrot.slane %v5319, %v5332
      %v5334 = vcombine.high %v5326, %v5326
      %v5335 = vcombine.high %v5333, %v5333
      %v5336 = vcombine.high %v5194, %v5194
      %v5338 = vunpack.c.l.s4 1983009808
      %v5339 = vunpack.c.0.s8 %v5338
      %v5340 = vlaneseq
      %v5341 = vshrl.u32 %v5340, 7
      %v5342 = vsub.s32 %v5339, %v5341
      %v5343 = vrot.slane %v5194, %v5342
      %v5345 = vunpack.c.l.s4 1983009808
      %v5346 = vunpack.c.0.s8 %v5345
      %v5347 = vlaneseq
      %v5348 = vshrl.u32 %v5347, 7
      %v5349 = vsub.s32 %v5346, %v5348
      %v5350 = vrot.slane %v5336, %v5349
      %v5351 = vcombine.high %v5343, %v5343
      %v5352 = vcombine.high %v5350, %v5350
      %v5353 = vcombine.high %v5195, %v5195
      %v5355 = vunpack.c.l.s4 1983009808
      %v5356 = vunpack.c.0.s8 %v5355
      %v5357 = vlaneseq
      %v5358 = vshrl.u32 %v5357, 7
      %v5359 = vsub.s32 %v5356, %v5358
      %v5360 = vrot.slane %v5195, %v5359
      %v5362 = vunpack.c.l.s4 1983009808
      %v5363 = vunpack.c.0.s8 %v5362
      %v5364 = vlaneseq
      %v5365 = vshrl.u32 %v5364, 7
      %v5366 = vsub.s32 %v5363, %v5365
      %v5367 = vrot.slane %v5353, %v5366
      %v5368 = vcombine.high %v5360, %v5360
      %v5369 = vcombine.high %v5367, %v5367
      %v5370 = vcombine.high %v5196, %v5196
      %v5372 = vunpack.c.l.s4 1983009808
      %v5373 = vunpack.c.0.s8 %v5372
      %v5374 = vlaneseq
      %v5375 = vshrl.u32 %v5374, 7
      %v5376 = vsub.s32 %v5373, %v5375
      %v5377 = vrot.slane %v5196, %v5376
      %v5379 = vunpack.c.l.s4 1983009808
      %v5380 = vunpack.c.0.s8 %v5379
      %v5381 = vlaneseq
      %v5382 = vshrl.u32 %v5381, 7
      %v5383 = vsub.s32 %v5380, %v5382
      %v5384 = vrot.slane %v5370, %v5383
      %v5385 = vcombine.high %v5377, %v5377
      %v5386 = vcombine.high %v5384, %v5384
      %v5387 = vcombine.high %v5197, %v5197
      %v5389 = vunpack.c.l.s4 1983009808
      %v5390 = vunpack.c.0.s8 %v5389
      %v5391 = vlaneseq
      %v5392 = vshrl.u32 %v5391, 7
      %v5393 = vsub.s32 %v5390, %v5392
      %v5394 = vrot.slane %v5197, %v5393
      %v5396 = vunpack.c.l.s4 1983009808
      %v5397 = vunpack.c.0.s8 %v5396
      %v5398 = vlaneseq
      %v5399 = vshrl.u32 %v5398, 7
      %v5400 = vsub.s32 %v5397, %v5399
      %v5401 = vrot.slane %v5387, %v5400
      %v5402 = vcombine.high %v5394, %v5394
      %v5403 = vcombine.high %v5401, %v5401
      %v5404 = vcombine.high %v5198, %v5198
      %v5406 = vunpack.c.l.s4 1983009808
      %v5407 = vunpack.c.0.s8 %v5406
      %v5408 = vlaneseq
      %v5409 = vshrl.u32 %v5408, 7
      %v5410 = vsub.s32 %v5407, %v5409
      %v5411 = vrot.slane %v5198, %v5410
      %v5413 = vunpack.c.l.s4 1983009808
      %v5414 = vunpack.c.0.s8 %v5413
      %v5415 = vlaneseq
      %v5416 = vshrl.u32 %v5415, 7
      %v5417 = vsub.s32 %v5414, %v5416
      %v5418 = vrot.slane %v5404, %v5417
      %v5419 = vcombine.high %v5411, %v5411
      %v5420 = vcombine.high %v5418, %v5418
      %v5421 = vcombine.high %v5199, %v5199
      %v5423 = vunpack.c.l.s4 1983009808
      %v5424 = vunpack.c.0.s8 %v5423
      %v5425 = vlaneseq
      %v5426 = vshrl.u32 %v5425, 7
      %v5427 = vsub.s32 %v5424, %v5426
      %v5428 = vrot.slane %v5199, %v5427
      %v5430 = vunpack.c.l.s4 1983009808
      %v5431 = vunpack.c.0.s8 %v5430
      %v5432 = vlaneseq
      %v5433 = vshrl.u32 %v5432, 7
      %v5434 = vsub.s32 %v5431, %v5433
      %v5435 = vrot.slane %v5421, %v5434
      %v5436 = vcombine.high %v5428, %v5428
      %v5437 = vcombine.high %v5435, %v5435
      %v5438 = vcombine.high %v5200, %v5200
      %v5440 = vunpack.c.l.s4 1983009808
      %v5441 = vunpack.c.0.s8 %v5440
      %v5442 = vlaneseq
      %v5443 = vshrl.u32 %v5442, 7
      %v5444 = vsub.s32 %v5441, %v5443
      %v5445 = vrot.slane %v5200, %v5444
      %v5447 = vunpack.c.l.s4 1983009808
      %v5448 = vunpack.c.0.s8 %v5447
      %v5449 = vlaneseq
      %v5450 = vshrl.u32 %v5449, 7
      %v5451 = vsub.s32 %v5448, %v5450
      %v5452 = vrot.slane %v5438, %v5451
      %v5453 = vcombine.high %v5445, %v5445
      %v5454 = vcombine.high %v5452, %v5452
      %v5455 = vcombine.high %v5201, %v5201
      %v5457 = vunpack.c.l.s4 1983009808
      %v5458 = vunpack.c.0.s8 %v5457
      %v5459 = vlaneseq
      %v5460 = vshrl.u32 %v5459, 7
      %v5461 = vsub.s32 %v5458, %v5460
      %v5462 = vrot.slane %v5201, %v5461
      %v5464 = vunpack.c.l.s4 1983009808
      %v5465 = vunpack.c.0.s8 %v5464
      %v5466 = vlaneseq
      %v5467 = vshrl.u32 %v5466, 7
      %v5468 = vsub.s32 %v5465, %v5467
      %v5469 = vrot.slane %v5455, %v5468
      %v5470 = vcombine.high %v5462, %v5462
      %v5471 = vcombine.high %v5469, %v5469
      %v5472 = vcombine.high %v5202, %v5202
      %v5474 = vunpack.c.l.s4 1983009808
      %v5475 = vunpack.c.0.s8 %v5474
      %v5476 = vlaneseq
      %v5477 = vshrl.u32 %v5476, 7
      %v5478 = vsub.s32 %v5475, %v5477
      %v5479 = vrot.slane %v5202, %v5478
      %v5481 = vunpack.c.l.s4 1983009808
      %v5482 = vunpack.c.0.s8 %v5481
      %v5483 = vlaneseq
      %v5484 = vshrl.u32 %v5483, 7
      %v5485 = vsub.s32 %v5482, %v5484
      %v5486 = vrot.slane %v5472, %v5485
      %v5487 = vcombine.high %v5479, %v5479
      %v5488 = vcombine.high %v5486, %v5486
      %v5489 = vcombine.high %v5203, %v5203
      %v5491 = vunpack.c.l.s4 1983009808
      %v5492 = vunpack.c.0.s8 %v5491
      %v5493 = vlaneseq
      %v5494 = vshrl.u32 %v5493, 7
      %v5495 = vsub.s32 %v5492, %v5494
      %v5496 = vrot.slane %v5203, %v5495
      %v5498 = vunpack.c.l.s4 1983009808
      %v5499 = vunpack.c.0.s8 %v5498
      %v5500 = vlaneseq
      %v5501 = vshrl.u32 %v5500, 7
      %v5502 = vsub.s32 %v5499, %v5501
      %v5503 = vrot.slane %v5489, %v5502
      %v5504 = vcombine.high %v5496, %v5496
      %v5505 = vcombine.high %v5503, %v5503
      %v5506 = vcombine.high %v5204, %v5204
      %v5508 = vunpack.c.l.s4 1983009808
      %v5509 = vunpack.c.0.s8 %v5508
      %v5510 = vlaneseq
      %v5511 = vshrl.u32 %v5510, 7
      %v5512 = vsub.s32 %v5509, %v5511
      %v5513 = vrot.slane %v5204, %v5512
      %v5515 = vunpack.c.l.s4 1983009808
      %v5516 = vunpack.c.0.s8 %v5515
      %v5517 = vlaneseq
      %v5518 = vshrl.u32 %v5517, 7
      %v5519 = vsub.s32 %v5516, %v5518
      %v5520 = vrot.slane %v5506, %v5519
      %v5521 = vcombine.high %v5513, %v5513
      %v5522 = vcombine.high %v5520, %v5520
      %v5523 = vcombine.high %v5205, %v5205
      %v5525 = vunpack.c.l.s4 1983009808
      %v5526 = vunpack.c.0.s8 %v5525
      %v5527 = vlaneseq
      %v5528 = vshrl.u32 %v5527, 7
      %v5529 = vsub.s32 %v5526, %v5528
      %v5530 = vrot.slane %v5205, %v5529
      %v5532 = vunpack.c.l.s4 1983009808
      %v5533 = vunpack.c.0.s8 %v5532
      %v5534 = vlaneseq
      %v5535 = vshrl.u32 %v5534, 7
      %v5536 = vsub.s32 %v5533, %v5535
      %v5537 = vrot.slane %v5523, %v5536
      %v5538 = vcombine.high %v5530, %v5530
      %v5539 = vcombine.high %v5537, %v5537
      %v5540 = vcombine.high %v5206, %v5206
      %v5542 = vunpack.c.l.s4 1983009808
      %v5543 = vunpack.c.0.s8 %v5542
      %v5544 = vlaneseq
      %v5545 = vshrl.u32 %v5544, 7
      %v5546 = vsub.s32 %v5543, %v5545
      %v5547 = vrot.slane %v5206, %v5546
      %v5549 = vunpack.c.l.s4 1983009808
      %v5550 = vunpack.c.0.s8 %v5549
      %v5551 = vlaneseq
      %v5552 = vshrl.u32 %v5551, 7
      %v5553 = vsub.s32 %v5550, %v5552
      %v5554 = vrot.slane %v5540, %v5553
      %v5555 = vcombine.high %v5547, %v5547
      %v5556 = vcombine.high %v5554, %v5554
      %v5557 = vcombine.high %v5207, %v5207
      %v5559 = vunpack.c.l.s4 1983009808
      %v5560 = vunpack.c.0.s8 %v5559
      %v5561 = vlaneseq
      %v5562 = vshrl.u32 %v5561, 7
      %v5563 = vsub.s32 %v5560, %v5562
      %v5564 = vrot.slane %v5207, %v5563
      %v5566 = vunpack.c.l.s4 1983009808
      %v5567 = vunpack.c.0.s8 %v5566
      %v5568 = vlaneseq
      %v5569 = vshrl.u32 %v5568, 7
      %v5570 = vsub.s32 %v5567, %v5569
      %v5571 = vrot.slane %v5557, %v5570
      %v5572 = vcombine.high %v5564, %v5564
      %v5573 = vcombine.high %v5571, %v5571
      %v5574 = vcombine.high %v5208, %v5208
      %v5576 = vunpack.c.l.s4 1983009808
      %v5577 = vunpack.c.0.s8 %v5576
      %v5578 = vlaneseq
      %v5579 = vshrl.u32 %v5578, 7
      %v5580 = vsub.s32 %v5577, %v5579
      %v5581 = vrot.slane %v5208, %v5580
      %v5583 = vunpack.c.l.s4 1983009808
      %v5584 = vunpack.c.0.s8 %v5583
      %v5585 = vlaneseq
      %v5586 = vshrl.u32 %v5585, 7
      %v5587 = vsub.s32 %v5584, %v5586
      %v5588 = vrot.slane %v5574, %v5587
      %v5589 = vcombine.high %v5581, %v5581
      %v5590 = vcombine.high %v5588, %v5588
      %v5591 = vcombine.high %v5209, %v5209
      %v5593 = vunpack.c.l.s4 1983009808
      %v5594 = vunpack.c.0.s8 %v5593
      %v5595 = vlaneseq
      %v5596 = vshrl.u32 %v5595, 7
      %v5597 = vsub.s32 %v5594, %v5596
      %v5598 = vrot.slane %v5209, %v5597
      %v5600 = vunpack.c.l.s4 1983009808
      %v5601 = vunpack.c.0.s8 %v5600
      %v5602 = vlaneseq
      %v5603 = vshrl.u32 %v5602, 7
      %v5604 = vsub.s32 %v5601, %v5603
      %v5605 = vrot.slane %v5591, %v5604
      %v5606 = vcombine.high %v5598, %v5598
      %v5607 = vcombine.high %v5605, %v5605
      %v5609 = vunpack.c.l.s4 1983009808
      %v5610 = vunpack.c.0.s8 %v5609
      %v5611 = vlaneseq
      %v5612 = vshrl.u32 %v5611, 7
      %v5613 = vsub.s32 %v5610, %v5612
      %v5614 = vrot.slane %v5210, %v5613
      %v5615 = vcombine.high %v5614, %v5614
      %v5616 = vcombine.low %v5241, %v5249
      %v5617 = vcombine.low %v5248, %v5250
      %v5619 = vunpack.c.l.s4 1983009808
      %v5620 = vunpack.c.0.s8 %v5619
      %v5621 = vlaneseq
      %v5622 = vshrl.u32 %v5621, 7
      %v5623 = vsub.s32 %v5620, %v5622
      %v5624 = vrot.slane %v5616, %v5623
      %v5626 = vunpack.c.l.s4 1983009808
      %v5627 = vunpack.c.0.s8 %v5626
      %v5628 = vlaneseq
      %v5629 = vshrl.u32 %v5628, 7
      %v5630 = vsub.s32 %v5627, %v5629
      %v5631 = vrot.slane %v5617, %v5630
      %v5632 = vcombine.low %v5624, %v5631
      %v5633 = vcombine.low %v5258, %v5266
      %v5634 = vcombine.low %v5265, %v5267
      %v5636 = vunpack.c.l.s4 1983009808
      %v5637 = vunpack.c.0.s8 %v5636
      %v5638 = vlaneseq
      %v5639 = vshrl.u32 %v5638, 7
      %v5640 = vsub.s32 %v5637, %v5639
      %v5641 = vrot.slane %v5633, %v5640
      %v5643 = vunpack.c.l.s4 1983009808
      %v5644 = vunpack.c.0.s8 %v5643
      %v5645 = vlaneseq
      %v5646 = vshrl.u32 %v5645, 7
      %v5647 = vsub.s32 %v5644, %v5646
      %v5648 = vrot.slane %v5634, %v5647
      %v5649 = vcombine.low %v5641, %v5648
      %v5651 = vunpack.c.l.s4 1983009808
      %v5652 = vunpack.c.0.s8 %v5651
      %v5653 = vlaneseq
      %v5654 = vshrl.u32 %v5653, 7
      %v5655 = vsub.s32 %v5652, %v5654
      %v5656 = vrot.slane %v5275, %v5655
      %v5657 = vcombine.low %v5283, %v5282
      %v5658 = vcombine.low %v5284, %v5292
      %v5660 = vunpack.c.l.s4 1983009808
      %v5661 = vunpack.c.0.s8 %v5660
      %v5662 = vlaneseq
      %v5663 = vshrl.u32 %v5662, 7
      %v5664 = vsub.s32 %v5661, %v5663
      %v5665 = vrot.slane %v5657, %v5664
      %v5667 = vunpack.c.l.s4 1983009808
      %v5668 = vunpack.c.0.s8 %v5667
      %v5669 = vlaneseq
      %v5670 = vshrl.u32 %v5669, 7
      %v5671 = vsub.s32 %v5668, %v5670
      %v5672 = vrot.slane %v5658, %v5671
      %v5673 = vcombine.low %v5665, %v5672
      %v5674 = vcombine.low %v5300, %v5299
      %v5675 = vcombine.low %v5301, %v5309
      %v5677 = vunpack.c.l.s4 1983009808
      %v5678 = vunpack.c.0.s8 %v5677
      %v5679 = vlaneseq
      %v5680 = vshrl.u32 %v5679, 7
      %v5681 = vsub.s32 %v5678, %v5680
      %v5682 = vrot.slane %v5674, %v5681
      %v5684 = vunpack.c.l.s4 1983009808
      %v5685 = vunpack.c.0.s8 %v5684
      %v5686 = vlaneseq
      %v5687 = vshrl.u32 %v5686, 7
      %v5688 = vsub.s32 %v5685, %v5687
      %v5689 = vrot.slane %v5675, %v5688
      %v5690 = vcombine.low %v5682, %v5689
      %v5692 = vunpack.c.l.s4 1983009808
      %v5693 = vunpack.c.0.s8 %v5692
      %v5694 = vlaneseq
      %v5695 = vshrl.u32 %v5694, 7
      %v5696 = vsub.s32 %v5693, %v5695
      %v5697 = vrot.slane %v5317, %v5696
      %v5698 = vcombine.low %v5316, %v5318
      %v5699 = vcombine.low %v5326, %v5334
      %v5701 = vunpack.c.l.s4 1983009808
      %v5702 = vunpack.c.0.s8 %v5701
      %v5703 = vlaneseq
      %v5704 = vshrl.u32 %v5703, 7
      %v5705 = vsub.s32 %v5702, %v5704
      %v5706 = vrot.slane %v5698, %v5705
      %v5708 = vunpack.c.l.s4 1983009808
      %v5709 = vunpack.c.0.s8 %v5708
      %v5710 = vlaneseq
      %v5711 = vshrl.u32 %v5710, 7
      %v5712 = vsub.s32 %v5709, %v5711
      %v5713 = vrot.slane %v5699, %v5712
      %v5714 = vcombine.low %v5706, %v5713
      %v5715 = vcombine.low %v5333, %v5335
      %v5716 = vcombine.low %v5343, %v5351
      %v5718 = vunpack.c.l.s4 1983009808
      %v5719 = vunpack.c.0.s8 %v5718
      %v5720 = vlaneseq
      %v5721 = vshrl.u32 %v5720, 7
      %v5722 = vsub.s32 %v5719, %v5721
      %v5723 = vrot.slane %v5715, %v5722
      %v5725 = vunpack.c.l.s4 1983009808
      %v5726 = vunpack.c.0.s8 %v5725
      %v5727 = vlaneseq
      %v5728 = vshrl.u32 %v5727, 7
      %v5729 = vsub.s32 %v5726, %v5728
      %v5730 = vrot.slane %v5716, %v5729
      %v5731 = vcombine.low %v5723, %v5730
      %v5733 = vunpack.c.l.s4 1983009808
      %v5734 = vunpack.c.0.s8 %v5733
      %v5735 = vlaneseq
      %v5736 = vshrl.u32 %v5735, 7
      %v5737 = vsub.s32 %v5734, %v5736
      %v5738 = vrot.slane %v5350, %v5737
      %v5739 = vcombine.low %v5352, %v5360
      %v5740 = vcombine.low %v5368, %v5367
      %v5742 = vunpack.c.l.s4 1983009808
      %v5743 = vunpack.c.0.s8 %v5742
      %v5744 = vlaneseq
      %v5745 = vshrl.u32 %v5744, 7
      %v5746 = vsub.s32 %v5743, %v5745
      %v5747 = vrot.slane %v5739, %v5746
      %v5749 = vunpack.c.l.s4 1983009808
      %v5750 = vunpack.c.0.s8 %v5749
      %v5751 = vlaneseq
      %v5752 = vshrl.u32 %v5751, 7
      %v5753 = vsub.s32 %v5750, %v5752
      %v5754 = vrot.slane %v5740, %v5753
      %v5755 = vcombine.low %v5747, %v5754
      %v5756 = vcombine.low %v5369, %v5377
      %v5757 = vcombine.low %v5385, %v5384
      %v5759 = vunpack.c.l.s4 1983009808
      %v5760 = vunpack.c.0.s8 %v5759
      %v5761 = vlaneseq
      %v5762 = vshrl.u32 %v5761, 7
      %v5763 = vsub.s32 %v5760, %v5762
      %v5764 = vrot.slane %v5756, %v5763
      %v5766 = vunpack.c.l.s4 1983009808
      %v5767 = vunpack.c.0.s8 %v5766
      %v5768 = vlaneseq
      %v5769 = vshrl.u32 %v5768, 7
      %v5770 = vsub.s32 %v5767, %v5769
      %v5771 = vrot.slane %v5757, %v5770
      %v5772 = vcombine.low %v5764, %v5771
      %v5774 = vunpack.c.l.s4 1983009808
      %v5775 = vunpack.c.0.s8 %v5774
      %v5776 = vlaneseq
      %v5777 = vshrl.u32 %v5776, 7
      %v5778 = vsub.s32 %v5775, %v5777
      %v5779 = vrot.slane %v5386, %v5778
      %v5780 = vcombine.low %v5394, %v5402
      %v5781 = vcombine.low %v5401, %v5403
      %v5783 = vunpack.c.l.s4 1983009808
      %v5784 = vunpack.c.0.s8 %v5783
      %v5785 = vlaneseq
      %v5786 = vshrl.u32 %v5785, 7
      %v5787 = vsub.s32 %v5784, %v5786
      %v5788 = vrot.slane %v5780, %v5787
      %v5790 = vunpack.c.l.s4 1983009808
      %v5791 = vunpack.c.0.s8 %v5790
      %v5792 = vlaneseq
      %v5793 = vshrl.u32 %v5792, 7
      %v5794 = vsub.s32 %v5791, %v5793
      %v5795 = vrot.slane %v5781, %v5794
      %v5796 = vcombine.low %v5788, %v5795
      %v5797 = vcombine.low %v5411, %v5419
      %v5798 = vcombine.low %v5418, %v5420
      %v5800 = vunpack.c.l.s4 1983009808
      %v5801 = vunpack.c.0.s8 %v5800
      %v5802 = vlaneseq
      %v5803 = vshrl.u32 %v5802, 7
      %v5804 = vsub.s32 %v5801, %v5803
      %v5805 = vrot.slane %v5797, %v5804
      %v5807 = vunpack.c.l.s4 1983009808
      %v5808 = vunpack.c.0.s8 %v5807
      %v5809 = vlaneseq
      %v5810 = vshrl.u32 %v5809, 7
      %v5811 = vsub.s32 %v5808, %v5810
      %v5812 = vrot.slane %v5798, %v5811
      %v5813 = vcombine.low %v5805, %v5812
      %v5815 = vunpack.c.l.s4 1983009808
      %v5816 = vunpack.c.0.s8 %v5815
      %v5817 = vlaneseq
      %v5818 = vshrl.u32 %v5817, 7
      %v5819 = vsub.s32 %v5816, %v5818
      %v5820 = vrot.slane %v5428, %v5819
      %v5821 = vcombine.low %v5436, %v5435
      %v5822 = vcombine.low %v5437, %v5445
      %v5824 = vunpack.c.l.s4 1983009808
      %v5825 = vunpack.c.0.s8 %v5824
      %v5826 = vlaneseq
      %v5827 = vshrl.u32 %v5826, 7
      %v5828 = vsub.s32 %v5825, %v5827
      %v5829 = vrot.slane %v5821, %v5828
      %v5831 = vunpack.c.l.s4 1983009808
      %v5832 = vunpack.c.0.s8 %v5831
      %v5833 = vlaneseq
      %v5834 = vshrl.u32 %v5833, 7
      %v5835 = vsub.s32 %v5832, %v5834
      %v5836 = vrot.slane %v5822, %v5835
      %v5837 = vcombine.low %v5829, %v5836
      %v5838 = vcombine.low %v5453, %v5452
      %v5839 = vcombine.low %v5454, %v5462
      %v5841 = vunpack.c.l.s4 1983009808
      %v5842 = vunpack.c.0.s8 %v5841
      %v5843 = vlaneseq
      %v5844 = vshrl.u32 %v5843, 7
      %v5845 = vsub.s32 %v5842, %v5844
      %v5846 = vrot.slane %v5838, %v5845
      %v5848 = vunpack.c.l.s4 1983009808
      %v5849 = vunpack.c.0.s8 %v5848
      %v5850 = vlaneseq
      %v5851 = vshrl.u32 %v5850, 7
      %v5852 = vsub.s32 %v5849, %v5851
      %v5853 = vrot.slane %v5839, %v5852
      %v5854 = vcombine.low %v5846, %v5853
      %v5856 = vunpack.c.l.s4 1983009808
      %v5857 = vunpack.c.0.s8 %v5856
      %v5858 = vlaneseq
      %v5859 = vshrl.u32 %v5858, 7
      %v5860 = vsub.s32 %v5857, %v5859
      %v5861 = vrot.slane %v5470, %v5860
      %v5862 = vcombine.low %v5469, %v5471
      %v5863 = vcombine.low %v5479, %v5487
      %v5865 = vunpack.c.l.s4 1983009808
      %v5866 = vunpack.c.0.s8 %v5865
      %v5867 = vlaneseq
      %v5868 = vshrl.u32 %v5867, 7
      %v5869 = vsub.s32 %v5866, %v5868
      %v5870 = vrot.slane %v5862, %v5869
      %v5872 = vunpack.c.l.s4 1983009808
      %v5873 = vunpack.c.0.s8 %v5872
      %v5874 = vlaneseq
      %v5875 = vshrl.u32 %v5874, 7
      %v5876 = vsub.s32 %v5873, %v5875
      %v5877 = vrot.slane %v5863, %v5876
      %v5878 = vcombine.low %v5870, %v5877
      %v5879 = vcombine.low %v5486, %v5488
      %v5880 = vcombine.low %v5496, %v5504
      %v5882 = vunpack.c.l.s4 1983009808
      %v5883 = vunpack.c.0.s8 %v5882
      %v5884 = vlaneseq
      %v5885 = vshrl.u32 %v5884, 7
      %v5886 = vsub.s32 %v5883, %v5885
      %v5887 = vrot.slane %v5879, %v5886
      %v5889 = vunpack.c.l.s4 1983009808
      %v5890 = vunpack.c.0.s8 %v5889
      %v5891 = vlaneseq
      %v5892 = vshrl.u32 %v5891, 7
      %v5893 = vsub.s32 %v5890, %v5892
      %v5894 = vrot.slane %v5880, %v5893
      %v5895 = vcombine.low %v5887, %v5894
      %v5897 = vunpack.c.l.s4 1983009808
      %v5898 = vunpack.c.0.s8 %v5897
      %v5899 = vlaneseq
      %v5900 = vshrl.u32 %v5899, 7
      %v5901 = vsub.s32 %v5898, %v5900
      %v5902 = vrot.slane %v5503, %v5901
      %v5903 = vcombine.low %v5505, %v5513
      %v5904 = vcombine.low %v5521, %v5520
      %v5906 = vunpack.c.l.s4 1983009808
      %v5907 = vunpack.c.0.s8 %v5906
      %v5908 = vlaneseq
      %v5909 = vshrl.u32 %v5908, 7
      %v5910 = vsub.s32 %v5907, %v5909
      %v5911 = vrot.slane %v5903, %v5910
      %v5913 = vunpack.c.l.s4 1983009808
      %v5914 = vunpack.c.0.s8 %v5913
      %v5915 = vlaneseq
      %v5916 = vshrl.u32 %v5915, 7
      %v5917 = vsub.s32 %v5914, %v5916
      %v5918 = vrot.slane %v5904, %v5917
      %v5919 = vcombine.low %v5911, %v5918
      %v5920 = vcombine.low %v5522, %v5530
      %v5921 = vcombine.low %v5538, %v5537
      %v5923 = vunpack.c.l.s4 1983009808
      %v5924 = vunpack.c.0.s8 %v5923
      %v5925 = vlaneseq
      %v5926 = vshrl.u32 %v5925, 7
      %v5927 = vsub.s32 %v5924, %v5926
      %v5928 = vrot.slane %v5920, %v5927
      %v5930 = vunpack.c.l.s4 1983009808
      %v5931 = vunpack.c.0.s8 %v5930
      %v5932 = vlaneseq
      %v5933 = vshrl.u32 %v5932, 7
      %v5934 = vsub.s32 %v5931, %v5933
      %v5935 = vrot.slane %v5921, %v5934
      %v5936 = vcombine.low %v5928, %v5935
      %v5938 = vunpack.c.l.s4 1983009808
      %v5939 = vunpack.c.0.s8 %v5938
      %v5940 = vlaneseq
      %v5941 = vshrl.u32 %v5940, 7
      %v5942 = vsub.s32 %v5939, %v5941
      %v5943 = vrot.slane %v5539, %v5942
      %v5944 = vcombine.low %v5547, %v5555
      %v5945 = vcombine.low %v5554, %v5556
      %v5947 = vunpack.c.l.s4 1983009808
      %v5948 = vunpack.c.0.s8 %v5947
      %v5949 = vlaneseq
      %v5950 = vshrl.u32 %v5949, 7
      %v5951 = vsub.s32 %v5948, %v5950
      %v5952 = vrot.slane %v5944, %v5951
      %v5954 = vunpack.c.l.s4 1983009808
      %v5955 = vunpack.c.0.s8 %v5954
      %v5956 = vlaneseq
      %v5957 = vshrl.u32 %v5956, 7
      %v5958 = vsub.s32 %v5955, %v5957
      %v5959 = vrot.slane %v5945, %v5958
      %v5960 = vcombine.low %v5952, %v5959
      %v5961 = vcombine.low %v5564, %v5572
      %v5962 = vcombine.low %v5571, %v5573
      %v5964 = vunpack.c.l.s4 1983009808
      %v5965 = vunpack.c.0.s8 %v5964
      %v5966 = vlaneseq
      %v5967 = vshrl.u32 %v5966, 7
      %v5968 = vsub.s32 %v5965, %v5967
      %v5969 = vrot.slane %v5961, %v5968
      %v5971 = vunpack.c.l.s4 1983009808
      %v5972 = vunpack.c.0.s8 %v5971
      %v5973 = vlaneseq
      %v5974 = vshrl.u32 %v5973, 7
      %v5975 = vsub.s32 %v5972, %v5974
      %v5976 = vrot.slane %v5962, %v5975
      %v5977 = vcombine.low %v5969, %v5976
      %v5979 = vunpack.c.l.s4 1983009808
      %v5980 = vunpack.c.0.s8 %v5979
      %v5981 = vlaneseq
      %v5982 = vshrl.u32 %v5981, 7
      %v5983 = vsub.s32 %v5980, %v5982
      %v5984 = vrot.slane %v5581, %v5983
      %v5985 = vcombine.low %v5589, %v5588
      %v5986 = vcombine.low %v5590, %v5598
      %v5988 = vunpack.c.l.s4 1983009808
      %v5989 = vunpack.c.0.s8 %v5988
      %v5990 = vlaneseq
      %v5991 = vshrl.u32 %v5990, 7
      %v5992 = vsub.s32 %v5989, %v5991
      %v5993 = vrot.slane %v5985, %v5992
      %v5995 = vunpack.c.l.s4 1983009808
      %v5996 = vunpack.c.0.s8 %v5995
      %v5997 = vlaneseq
      %v5998 = vshrl.u32 %v5997, 7
      %v5999 = vsub.s32 %v5996, %v5998
      %v6000 = vrot.slane %v5986, %v5999
      %v6001 = vcombine.low %v5993, %v6000
      %v6002 = vcombine.low %v5606, %v5605
      %v6003 = vcombine.low %v5607, %v5614
      %v6005 = vunpack.c.l.s4 1983009808
      %v6006 = vunpack.c.0.s8 %v6005
      %v6007 = vlaneseq
      %v6008 = vshrl.u32 %v6007, 7
      %v6009 = vsub.s32 %v6006, %v6008
      %v6010 = vrot.slane %v6002, %v6009
      %v6012 = vunpack.c.l.s4 1983009808
      %v6013 = vunpack.c.0.s8 %v6012
      %v6014 = vlaneseq
      %v6015 = vshrl.u32 %v6014, 7
      %v6016 = vsub.s32 %v6013, %v6015
      %v6017 = vrot.slane %v6003, %v6016
      %v6018 = vcombine.low %v6010, %v6017
      %v6020 = vunpack.c.l.s4 1983009808
      %v6021 = vunpack.c.0.s8 %v6020
      %v6022 = vlaneseq
      %v6023 = vshrl.u32 %v6022, 7
      %v6024 = vsub.s32 %v6021, %v6023
      %v6025 = vrot.slane %v5615, %v6024
      %v6056 = vsel %vm406, %v5632, 0.0
      %v6057 = vsel %vm407, %v5649, 0.0
      %v6058 = vsel %vm408, %v5656, 0.0
      %v6059 = vsel %vm409, %v5673, 0.0
      %v6060 = vsel %vm410, %v5690, 0.0
      %v6061 = vsel %vm411, %v5697, 0.0
      %v6062 = vsel %vm412, %v5714, 0.0
      %v6063 = vsel %vm413, %v5731, 0.0
      %v6064 = vsel %vm414, %v5738, 0.0
      %v6065 = vsel %vm415, %v5755, 0.0
      %v6066 = vsel %vm416, %v5772, 0.0
      %v6067 = vsel %vm417, %v5779, 0.0
      %v6068 = vsel %vm418, %v5796, 0.0
      %v6069 = vsel %vm419, %v5813, 0.0
      %v6070 = vsel %vm420, %v5820, 0.0
      %v6071 = vsel %vm421, %v5837, 0.0
      %v6072 = vsel %vm422, %v5854, 0.0
      %v6073 = vsel %vm423, %v5861, 0.0
      %v6074 = vsel %vm424, %v5878, 0.0
      %v6075 = vsel %vm425, %v5895, 0.0
      %v6076 = vsel %vm426, %v5902, 0.0
      %v6077 = vsel %vm427, %v5919, 0.0
      %v6078 = vsel %vm428, %v5936, 0.0
      %v6079 = vsel %vm429, %v5943, 0.0
      %v6080 = vsel %vm430, %v5960, 0.0
      %v6081 = vsel %vm431, %v5977, 0.0
      %v6082 = vsel %vm432, %v5984, 0.0
      %v6083 = vsel %vm433, %v6001, 0.0
      %v6084 = vsel %vm434, %v6018, 0.0
      %v6085 = vsel %vm435, %v6025, 0.0
      %v6086 = vpack.c.bf16 %v6057, %v6056
      %v6087 = vpack.c.bf16 %v6058, %v6058
      %v6088 = vpack.c.bf16 %v6060, %v6059
      %v6089 = vpack.c.bf16 %v6061, %v6061
      %v6090 = vpack.c.bf16 %v6063, %v6062
      %v6091 = vpack.c.bf16 %v6064, %v6064
      %v6092 = vpack.c.bf16 %v6066, %v6065
      %v6093 = vpack.c.bf16 %v6067, %v6067
      %v6094 = vpack.c.bf16 %v6069, %v6068
      %v6095 = vpack.c.bf16 %v6070, %v6070
      %v6096 = vpack.c.bf16 %v6072, %v6071
      %v6097 = vpack.c.bf16 %v6073, %v6073
      %v6098 = vpack.c.bf16 %v6075, %v6074
      %v6099 = vpack.c.bf16 %v6076, %v6076
      %v6100 = vpack.c.bf16 %v6078, %v6077
      %v6101 = vpack.c.bf16 %v6079, %v6079
      %v6102 = vpack.c.bf16 %v6081, %v6080
      %v6103 = vpack.c.bf16 %v6082, %v6082
      %v6104 = vpack.c.bf16 %v6084, %v6083
      %v6105 = vpack.c.bf16 %v6085, %v6085
      %6106 = vst.msk [vmem:[#allocation2] sm:$0xff] %vm2855, %v6086
      %6107 = vst.msk [vmem:[#allocation2 + $0x28] sm:$0xff] %vm2855, %v6088
      %6108 = vst.msk [vmem:[#allocation2 + $0x50] sm:$0xff] %vm2855, %v6090
      %6109 = vst.msk [vmem:[#allocation2 + $0x78] sm:$0xff] %vm2855, %v6092
      %6110 = vst.msk [vmem:[#allocation2 + $0xa0] sm:$0xff] %vm2855, %v6094
      %6111 = vst.msk [vmem:[#allocation2 + $0xc8] sm:$0xff] %vm2855, %v6096
      %6112 = vst.msk [vmem:[#allocation2 + $0xf0] sm:$0xff] %vm2855, %v6098
      %6113 = vst.msk [vmem:[#allocation2 + $0x118] sm:$0xff] %vm2855, %v6100
      %v6115 = vshrl.u32 %v6086, 16
      %v6117 = vshll.u32 %v6086, 16
      %v6119 = vrot.slane %v6117, 1
      %v6120 = vor.u32 %v6115, %v6119
      %v6122 = vshll.u32 %v6087, 16
      %v6124 = vrot.slane %v6122, 1
      %v6125 = vsel %vm2864, %v6120, %v6124
      %v6127 = vshrl.u32 %v6088, 16
      %v6129 = vshll.u32 %v6088, 16
      %v6131 = vrot.slane %v6129, 1
      %v6132 = vor.u32 %v6127, %v6131
      %v6134 = vshll.u32 %v6089, 16
      %v6136 = vrot.slane %v6134, 1
      %v6137 = vsel %vm2864, %v6132, %v6136
      %v6139 = vshrl.u32 %v6090, 16
      %v6141 = vshll.u32 %v6090, 16
      %v6143 = vrot.slane %v6141, 1
      %v6144 = vor.u32 %v6139, %v6143
      %v6146 = vshll.u32 %v6091, 16
      %v6148 = vrot.slane %v6146, 1
      %v6149 = vsel %vm2864, %v6144, %v6148
      %v6151 = vshrl.u32 %v6092, 16
      %v6153 = vshll.u32 %v6092, 16
      %v6155 = vrot.slane %v6153, 1
      %v6156 = vor.u32 %v6151, %v6155
      %v6158 = vshll.u32 %v6093, 16
      %v6160 = vrot.slane %v6158, 1
      %v6161 = vsel %vm2864, %v6156, %v6160
      %v6163 = vshrl.u32 %v6094, 16
      %v6165 = vshll.u32 %v6094, 16
      %v6167 = vrot.slane %v6165, 1
      %v6168 = vor.u32 %v6163, %v6167
      %v6170 = vshll.u32 %v6095, 16
      %v6172 = vrot.slane %v6170, 1
      %v6173 = vsel %vm2864, %v6168, %v6172
      %v6175 = vshrl.u32 %v6096, 16
      %v6177 = vshll.u32 %v6096, 16
      %v6179 = vrot.slane %v6177, 1
      %v6180 = vor.u32 %v6175, %v6179
      %v6182 = vshll.u32 %v6097, 16
      %v6184 = vrot.slane %v6182, 1
      %v6185 = vsel %vm2864, %v6180, %v6184
      %v6187 = vshrl.u32 %v6098, 16
      %v6189 = vshll.u32 %v6098, 16
      %v6191 = vrot.slane %v6189, 1
      %v6192 = vor.u32 %v6187, %v6191
      %v6194 = vshll.u32 %v6099, 16
      %v6196 = vrot.slane %v6194, 1
      %v6197 = vsel %vm2864, %v6192, %v6196
      %v6199 = vshrl.u32 %v6100, 16
      %v6201 = vshll.u32 %v6100, 16
      %v6203 = vrot.slane %v6201, 1
      %v6204 = vor.u32 %v6199, %v6203
      %v6206 = vshll.u32 %v6101, 16
      %v6208 = vrot.slane %v6206, 1
      %v6209 = vsel %vm2864, %v6204, %v6208
      %6210 = vrot.lane.b32.xlu0 %v6125, 64
      %v6211 = vpop.permute.xlu0 %6210
      %6212 = vrot.lane.b32.xlu0 %v6137, 64
      %v6213 = vpop.permute.xlu0 %6212
      %6214 = vrot.lane.b32.xlu0 %v6149, 64
      %v6215 = vpop.permute.xlu0 %6214
      %6216 = vrot.lane.b32.xlu0 %v6161, 64
      %v6217 = vpop.permute.xlu0 %6216
      %6218 = vrot.lane.b32.xlu0 %v6173, 64
      %v6219 = vpop.permute.xlu0 %6218
      %6220 = vrot.lane.b32.xlu0 %v6185, 64
      %v6221 = vpop.permute.xlu0 %6220
      %6222 = vrot.lane.b32.xlu0 %v6197, 64
      %v6223 = vpop.permute.xlu0 %6222
      %6224 = vrot.lane.b32.xlu0 %v6209, 64
      %v6225 = vpop.permute.xlu0 %6224
      %6234 = vst.msk [vmem:[#allocation2] sm:$0xff] %vm2985, %v6211
      %6235 = vst.msk [vmem:[#allocation2 + $0x28] sm:$0xff] %vm2985, %v6213
      %6236 = vst.msk [vmem:[#allocation2 + $0x50] sm:$0xff] %vm2985, %v6215
      %6237 = vst.msk [vmem:[#allocation2 + $0x78] sm:$0xff] %vm2985, %v6217
      %6238 = vst.msk [vmem:[#allocation2 + $0xa0] sm:$0xff] %vm2985, %v6219
      %6239 = vst.msk [vmem:[#allocation2 + $0xc8] sm:$0xff] %vm2985, %v6221
      %6240 = vst.msk [vmem:[#allocation2 + $0xf0] sm:$0xff] %vm2985, %v6223
      %6241 = vst.msk [vmem:[#allocation2 + $0x118] sm:$0xff] %vm2985, %v6225
      %v6258 = vrot.slane %v6086, 1
      %v6259 = vrot.slane %v6087, 1
      %v6260 = vsel %vm3010, %v6258, %v6259
      %v6261 = vrot.slane %v6088, 1
      %v6262 = vrot.slane %v6089, 1
      %v6263 = vsel %vm3010, %v6261, %v6262
      %v6264 = vrot.slane %v6090, 1
      %v6265 = vrot.slane %v6091, 1
      %v6266 = vsel %vm3010, %v6264, %v6265
      %v6267 = vrot.slane %v6092, 1
      %v6268 = vrot.slane %v6093, 1
      %v6269 = vsel %vm3010, %v6267, %v6268
      %v6270 = vrot.slane %v6094, 1
      %v6271 = vrot.slane %v6095, 1
      %v6272 = vsel %vm3010, %v6270, %v6271
      %v6273 = vrot.slane %v6096, 1
      %v6274 = vrot.slane %v6097, 1
      %v6275 = vsel %vm3010, %v6273, %v6274
      %v6276 = vrot.slane %v6098, 1
      %v6277 = vrot.slane %v6099, 1
      %v6278 = vsel %vm3010, %v6276, %v6277
      %v6279 = vrot.slane %v6100, 1
      %v6280 = vrot.slane %v6101, 1
      %v6281 = vsel %vm3010, %v6279, %v6280
      %6290 = vst.msk [vmem:[#allocation2 + $0x8] sm:$0xff] %vm2855, %v6260
      %6291 = vst.msk [vmem:[#allocation2 + $0x30] sm:$0xff] %vm2855, %v6263
      %6292 = vst.msk [vmem:[#allocation2 + $0x58] sm:$0xff] %vm2855, %v6266
      %6293 = vst.msk [vmem:[#allocation2 + $0x80] sm:$0xff] %vm2855, %v6269
      %6294 = vst.msk [vmem:[#allocation2 + $0xa8] sm:$0xff] %vm2855, %v6272
      %6295 = vst.msk [vmem:[#allocation2 + $0xd0] sm:$0xff] %vm2855, %v6275
      %6296 = vst.msk [vmem:[#allocation2 + $0xf8] sm:$0xff] %vm2855, %v6278
      %6297 = vst.msk [vmem:[#allocation2 + $0x120] sm:$0xff] %vm2855, %v6281
      %6299 = vrot.lane.b32.xlu0 %v6088, 64
      %v6300 = vpop.permute.xlu0 %6299
      %6301 = vrot.lane.b32.xlu0 %v6090, 64
      %v6302 = vpop.permute.xlu0 %6301
      %6303 = vrot.lane.b32.xlu0 %v6092, 64
      %v6304 = vpop.permute.xlu0 %6303
      %6305 = vrot.lane.b32.xlu0 %v6094, 64
      %v6306 = vpop.permute.xlu0 %6305
      %6307 = vrot.lane.b32.xlu0 %v6096, 64
      %v6308 = vpop.permute.xlu0 %6307
      %6309 = vrot.lane.b32.xlu0 %v6098, 64
      %v6310 = vpop.permute.xlu0 %6309
      %6311 = vrot.lane.b32.xlu0 %v6100, 64
      %v6312 = vpop.permute.xlu0 %6311
      %6313 = vrot.lane.b32.xlu0 %v6102, 64
      %v6314 = vpop.permute.xlu0 %6313
      %6323 = vst.msk [vmem:[#allocation2 + $0x8] sm:$0xff] %vm2985, %v6300
      %6324 = vst.msk [vmem:[#allocation2 + $0x30] sm:$0xff] %vm2985, %v6302
      %6325 = vst.msk [vmem:[#allocation2 + $0x58] sm:$0xff] %vm2985, %v6304
      %6326 = vst.msk [vmem:[#allocation2 + $0x80] sm:$0xff] %vm2985, %v6306
      %6327 = vst.msk [vmem:[#allocation2 + $0xa8] sm:$0xff] %vm2985, %v6308
      %6328 = vst.msk [vmem:[#allocation2 + $0xd0] sm:$0xff] %vm2985, %v6310
      %6329 = vst.msk [vmem:[#allocation2 + $0xf8] sm:$0xff] %vm2985, %v6312
      %6330 = vst.msk [vmem:[#allocation2 + $0x120] sm:$0xff] %vm2985, %v6314
      %v6332 = vshrl.u32 %v6102, 16
      %v6334 = vshll.u32 %v6102, 16
      %v6336 = vrot.slane %v6334, 1
      %v6337 = vor.u32 %v6332, %v6336
      %v6339 = vshll.u32 %v6103, 16
      %v6341 = vrot.slane %v6339, 1
      %v6342 = vsel %vm2864, %v6337, %v6341
      %6351 = vst.msk [vmem:[#allocation2 + $0x10] sm:$0xff] %vm2855, %v6137
      %6352 = vst.msk [vmem:[#allocation2 + $0x38] sm:$0xff] %vm2855, %v6149
      %6353 = vst.msk [vmem:[#allocation2 + $0x60] sm:$0xff] %vm2855, %v6161
      %6354 = vst.msk [vmem:[#allocation2 + $0x88] sm:$0xff] %vm2855, %v6173
      %6355 = vst.msk [vmem:[#allocation2 + $0xb0] sm:$0xff] %vm2855, %v6185
      %6356 = vst.msk [vmem:[#allocation2 + $0xd8] sm:$0xff] %vm2855, %v6197
      %6357 = vst.msk [vmem:[#allocation2 + $0x100] sm:$0xff] %vm2855, %v6209
      %6358 = vst.msk [vmem:[#allocation2 + $0x128] sm:$0xff] %vm2855, %v6342
      %v6360 = vrot.slane %v6102, 1
      %v6361 = vrot.slane %v6103, 1
      %v6362 = vsel %vm3010, %v6360, %v6361
      %6363 = vrot.lane.b32.xlu0 %v6263, 64
      %v6364 = vpop.permute.xlu0 %6363
      %6365 = vrot.lane.b32.xlu0 %v6266, 64
      %v6366 = vpop.permute.xlu0 %6365
      %6367 = vrot.lane.b32.xlu0 %v6269, 64
      %v6368 = vpop.permute.xlu0 %6367
      %6369 = vrot.lane.b32.xlu0 %v6272, 64
      %v6370 = vpop.permute.xlu0 %6369
      %6371 = vrot.lane.b32.xlu0 %v6275, 64
      %v6372 = vpop.permute.xlu0 %6371
      %6373 = vrot.lane.b32.xlu0 %v6278, 64
      %v6374 = vpop.permute.xlu0 %6373
      %6375 = vrot.lane.b32.xlu0 %v6281, 64
      %v6376 = vpop.permute.xlu0 %6375
      %6377 = vrot.lane.b32.xlu0 %v6362, 64
      %v6378 = vpop.permute.xlu0 %6377
      %6387 = vst.msk [vmem:[#allocation2 + $0x10] sm:$0xff] %vm2985, %v6364
      %6388 = vst.msk [vmem:[#allocation2 + $0x38] sm:$0xff] %vm2985, %v6366
      %6389 = vst.msk [vmem:[#allocation2 + $0x60] sm:$0xff] %vm2985, %v6368
      %6390 = vst.msk [vmem:[#allocation2 + $0x88] sm:$0xff] %vm2985, %v6370
      %6391 = vst.msk [vmem:[#allocation2 + $0xb0] sm:$0xff] %vm2985, %v6372
      %6392 = vst.msk [vmem:[#allocation2 + $0xd8] sm:$0xff] %vm2985, %v6374
      %6393 = vst.msk [vmem:[#allocation2 + $0x100] sm:$0xff] %vm2985, %v6376
      %6394 = vst.msk [vmem:[#allocation2 + $0x128] sm:$0xff] %vm2985, %v6378
      %6395 = vst.msk [vmem:[#allocation2 + $0x18] sm:$0xff] %vm2855, %v6090
      %6396 = vst.msk [vmem:[#allocation2 + $0x40] sm:$0xff] %vm2855, %v6092
      %6397 = vst.msk [vmem:[#allocation2 + $0x68] sm:$0xff] %vm2855, %v6094
      %6398 = vst.msk [vmem:[#allocation2 + $0x90] sm:$0xff] %vm2855, %v6096
      %6399 = vst.msk [vmem:[#allocation2 + $0xb8] sm:$0xff] %vm2855, %v6098
      %6400 = vst.msk [vmem:[#allocation2 + $0xe0] sm:$0xff] %vm2855, %v6100
      %6401 = vst.msk [vmem:[#allocation2 + $0x108] sm:$0xff] %vm2855, %v6102
      %6402 = vst.msk [vmem:[#allocation2 + $0x130] sm:$0xff] %vm2855, %v6104
      %v6404 = vshrl.u32 %v6104, 16
      %v6406 = vshll.u32 %v6104, 16
      %v6408 = vrot.slane %v6406, 1
      %v6409 = vor.u32 %v6404, %v6408
      %v6411 = vshll.u32 %v6105, 16
      %v6413 = vrot.slane %v6411, 1
      %v6414 = vsel %vm2864, %v6409, %v6413
      %6415 = vrot.lane.b32.xlu0 %v6342, 64
      %v6416 = vpop.permute.xlu0 %6415
      %6417 = vrot.lane.b32.xlu0 %v6414, 64
      %v6418 = vpop.permute.xlu0 %6417
      %6421 = vst.msk [vmem:[#allocation2 + $0x18] sm:$0xff] %vm2985, %v6215
      %6422 = vst.msk [vmem:[#allocation2 + $0x40] sm:$0xff] %vm2985, %v6217
      %6423 = vst.msk [vmem:[#allocation2 + $0x68] sm:$0xff] %vm2985, %v6219
      %6424 = vst.msk [vmem:[#allocation2 + $0x90] sm:$0xff] %vm2985, %v6221
      %6425 = vst.msk [vmem:[#allocation2 + $0xb8] sm:$0xff] %vm2985, %v6223
      %6426 = vst.msk [vmem:[#allocation2 + $0xe0] sm:$0xff] %vm2985, %v6225
      %6427 = vst.msk [vmem:[#allocation2 + $0x108] sm:$0xff] %vm2985, %v6416
      %6428 = vst.msk [vmem:[#allocation2 + $0x130] sm:$0xff] %vm2985, %v6418
      %v6431 = vrot.slane %v6104, 1
      %v6432 = vrot.slane %v6105, 1
      %v6433 = vsel %vm3010, %v6431, %v6432
      %6436 = vst.msk [vmem:[#allocation2 + $0x20] sm:$0xff] %vm2855, %v6266
      %6437 = vst.msk [vmem:[#allocation2 + $0x48] sm:$0xff] %vm2855, %v6269
      %6438 = vst.msk [vmem:[#allocation2 + $0x70] sm:$0xff] %vm2855, %v6272
      %6439 = vst.msk [vmem:[#allocation2 + $0x98] sm:$0xff] %vm2855, %v6275
      %6440 = vst.msk [vmem:[#allocation2 + $0xc0] sm:$0xff] %vm2855, %v6278
      %6441 = vst.msk [vmem:[#allocation2 + $0xe8] sm:$0xff] %vm2855, %v6281
      %6442 = vst.msk [vmem:[#allocation2 + $0x110] sm:$0xff] %vm2855, %v6362
      %6443 = vst.msk [vmem:[#allocation2 + $0x138] sm:$0xff] %vm2855, %v6433
      %v6444 = vld [vmem:[#allocation2] sm:$0xff]
      %v6445 = vld [vmem:[#allocation2 + $0x8] sm:$0xff]
      %v6446 = vld [vmem:[#allocation2 + $0x10] sm:$0xff]
      %v6447 = vld [vmem:[#allocation2 + $0x18] sm:$0xff]
      %v6448 = vld [vmem:[#allocation2 + $0x20] sm:$0xff]
      %v6449 = vld [vmem:[#allocation2 + $0x28] sm:$0xff]
      %v6450 = vld [vmem:[#allocation2 + $0x30] sm:$0xff]
      %v6451 = vld [vmem:[#allocation2 + $0x38] sm:$0xff]
      %v6452 = vld [vmem:[#allocation2 + $0x40] sm:$0xff]
      %v6453 = vld [vmem:[#allocation2 + $0x48] sm:$0xff]
      %v6454 = vld [vmem:[#allocation2 + $0x50] sm:$0xff]
      %v6455 = vld [vmem:[#allocation2 + $0x58] sm:$0xff]
      %v6456 = vld [vmem:[#allocation2 + $0x60] sm:$0xff]
      %v6457 = vld [vmem:[#allocation2 + $0x68] sm:$0xff]
      %v6458 = vld [vmem:[#allocation2 + $0x70] sm:$0xff]
      %v6459 = vld [vmem:[#allocation2 + $0x78] sm:$0xff]
      %v6460 = vld [vmem:[#allocation2 + $0x80] sm:$0xff]
      %v6461 = vld [vmem:[#allocation2 + $0x88] sm:$0xff]
      %v6462 = vld [vmem:[#allocation2 + $0x90] sm:$0xff]
      %v6463 = vld [vmem:[#allocation2 + $0x98] sm:$0xff]
      %v6464 = vld [vmem:[#allocation2 + $0xa0] sm:$0xff]
      %v6465 = vld [vmem:[#allocation2 + $0xa8] sm:$0xff]
      %v6466 = vld [vmem:[#allocation2 + $0xb0] sm:$0xff]
      %v6467 = vld [vmem:[#allocation2 + $0xb8] sm:$0xff]
      %v6468 = vld [vmem:[#allocation2 + $0xc0] sm:$0xff]
      %v6469 = vld [vmem:[#allocation2 + $0xc8] sm:$0xff]
      %v6470 = vld [vmem:[#allocation2 + $0xd0] sm:$0xff]
      %v6471 = vld [vmem:[#allocation2 + $0xd8] sm:$0xff]
      %v6472 = vld [vmem:[#allocation2 + $0xe0] sm:$0xff]
      %v6473 = vld [vmem:[#allocation2 + $0xe8] sm:$0xff]
      %v6474 = vld [vmem:[#allocation2 + $0xf0] sm:$0xff]
      %v6475 = vld [vmem:[#allocation2 + $0xf8] sm:$0xff]
      %v6476 = vld [vmem:[#allocation2 + $0x100] sm:$0xff]
      %v6477 = vld [vmem:[#allocation2 + $0x108] sm:$0xff]
      %v6478 = vld [vmem:[#allocation2 + $0x110] sm:$0xff]
      %v6479 = vld [vmem:[#allocation2 + $0x118] sm:$0xff]
      %v6480 = vld [vmem:[#allocation2 + $0x120] sm:$0xff]
      %v6481 = vld [vmem:[#allocation2 + $0x128] sm:$0xff]
      %v6482 = vld [vmem:[#allocation2 + $0x130] sm:$0xff]
      %v6483 = vld [vmem:[#allocation2 + $0x138] sm:$0xff]
      %v6485 = vsel %vm2855, %v6448, 0
      %v6488 = vsel %vm2855, %v6453, 0
      %v6491 = vsel %vm2855, %v6458, 0
      %v6494 = vsel %vm2855, %v6463, 0
      %v6497 = vsel %vm2855, %v6468, 0
      %v6500 = vsel %vm2855, %v6473, 0
      %v6503 = vsel %vm2855, %v6478, 0
      %v6506 = vsel %vm2855, %v6483, 0
      %6508 = vmatprep.subr.bf16.mxu0 0
      %6509 = vmatpush1.bf16.msra.mxu0 %v3387
      %6510 = vmatprep.subr.bf16.mxu0 0
      %6511 = vmatpush1.bf16.msra.mxu0 %v3388
      %6512 = vmatprep.subr.bf16.mxu0 0
      %6513 = vmatpush1.bf16.msra.mxu0 %v3389
      %6514 = vmatprep.subr.bf16.mxu0 0
      %6515 = vmatpush1.bf16.msra.mxu0 %v3390
      %6516 = vmatprep.subr.bf16.mxu0 0
      %6517 = vmatpush1.bf16.msra.mxu0 %v3391
      %6518 = vmatprep.subr.bf16.mxu0 0
      %6519 = vmatpush1.bf16.msra.mxu0 %v3392
      %6520 = vmatprep.subr.bf16.mxu0 0
      %6521 = vmatpush1.bf16.msra.mxu0 %v3393
      %6522 = vmatprep.subr.bf16.mxu0 0
      %6523 = vmatpush1.bf16.msra.mxu0 %v3394
      %6524 = vmatprep.subr.bf16.mxu0 0
      %6525 = vmatpush1.bf16.msra.mxu0 %v3395
      %6526 = vmatprep.subr.bf16.mxu0 0
      %6527 = vmatpush1.bf16.msra.mxu0 %v3396
      %6528 = vmatprep.subr.bf16.mxu0 0
      %6529 = vmatpush1.bf16.msra.mxu0 %v3397
      %6530 = vmatprep.subr.bf16.mxu0 0
      %6531 = vmatpush1.bf16.msra.mxu0 %v3398
      %6532 = vmatprep.subr.bf16.mxu0 0
      %6533 = vmatpush1.bf16.msra.mxu0 %v3399
      %6534 = vmatprep.subr.bf16.mxu0 0
      %6535 = vmatpush1.bf16.msra.mxu0 %v3400
      %6536 = vmatprep.subr.bf16.mxu0 0
      %6537 = vmatpush1.bf16.msra.mxu0 %v3401
      %6538 = vmatprep.subr.bf16.mxu0 0
      %6539 = vmatpush1.bf16.msra.mxu0 %v3402
      %6540 = vmatprep.mubr.bf16.mxu0 %v6445
      %6541 = vmatmul.mubr.bf16.gmra.mrb[0].mxu0 %v6444
      %v6542 = vpop.f32.mrb[0].mxu0
      %v6543 = vadd.f32 %v3241, %v6542
      %v6544 = vpop.f32.mrb[0].mxu0
      %v6545 = vpop.f32.mrb[0].mxu0
      %v6546 = vadd.f32 %v3241, %v6545
      %v6547 = vpop.f32.mrb[0].mxu0
      %6548 = vmatprep.mubr.bf16.mxu0 %v6450
      %6549 = vmatmul.mubr.bf16.gmra.mrb[0].mxu0 %v6449
      %v6550 = vpop.f32.mrb[0].mxu0
      %v6551 = vadd.f32 %v3241, %v6550
      %v6552 = vpop.f32.mrb[0].mxu0
      %v6553 = vpop.f32.mrb[0].mxu0
      %v6554 = vadd.f32 %v3241, %v6553
      %v6555 = vpop.f32.mrb[0].mxu0
      %6556 = vmatprep.mubr.bf16.mxu0 %v6455
      %6557 = vmatmul.mubr.bf16.gmra.mrb[0].mxu0 %v6454
      %v6558 = vpop.f32.mrb[0].mxu0
      %v6559 = vadd.f32 %v3241, %v6558
      %v6560 = vpop.f32.mrb[0].mxu0
      %v6561 = vpop.f32.mrb[0].mxu0
      %v6562 = vadd.f32 %v3241, %v6561
      %v6563 = vpop.f32.mrb[0].mxu0
      %6564 = vmatprep.mubr.bf16.mxu0 %v6460
      %6565 = vmatmul.mubr.bf16.gmra.mrb[0].mxu0 %v6459
      %v6566 = vpop.f32.mrb[0].mxu0
      %v6567 = vadd.f32 %v3241, %v6566
      %v6568 = vpop.f32.mrb[0].mxu0
      %v6569 = vpop.f32.mrb[0].mxu0
      %v6570 = vadd.f32 %v3241, %v6569
      %v6571 = vpop.f32.mrb[0].mxu0
      %6572 = vmatprep.mubr.bf16.mxu0 %v6465
      %6573 = vmatmul.mubr.bf16.gmra.mrb[0].mxu0 %v6464
      %v6574 = vpop.f32.mrb[0].mxu0
      %v6575 = vadd.f32 %v3241, %v6574
      %v6576 = vpop.f32.mrb[0].mxu0
      %v6577 = vpop.f32.mrb[0].mxu0
      %v6578 = vadd.f32 %v3241, %v6577
      %v6579 = vpop.f32.mrb[0].mxu0
      %6580 = vmatprep.mubr.bf16.mxu0 %v6470
      %6581 = vmatmul.mubr.bf16.gmra.mrb[0].mxu0 %v6469
      %v6582 = vpop.f32.mrb[0].mxu0
      %v6583 = vadd.f32 %v3241, %v6582
      %v6584 = vpop.f32.mrb[0].mxu0
      %v6585 = vpop.f32.mrb[0].mxu0
      %v6586 = vadd.f32 %v3241, %v6585
      %v6587 = vpop.f32.mrb[0].mxu0
      %6588 = vmatprep.mubr.bf16.mxu0 %v6475
      %6589 = vmatmul.mubr.bf16.gmra.mrb[0].mxu0 %v6474
      %v6590 = vpop.f32.mrb[0].mxu0
      %v6591 = vadd.f32 %v3241, %v6590
      %v6592 = vpop.f32.mrb[0].mxu0
      %v6593 = vpop.f32.mrb[0].mxu0
      %v6594 = vadd.f32 %v3241, %v6593
      %v6595 = vpop.f32.mrb[0].mxu0
      %6596 = vmatprep.mubr.bf16.mxu0 %v6480
      %6597 = vmatmul.mubr.bf16.gmra.mrb[0].mxu0 %v6479
      %v6598 = vpop.f32.mrb[0].mxu0
      %v6599 = vadd.f32 %v3241, %v6598
      %v6600 = vpop.f32.mrb[0].mxu0
      %v6601 = vpop.f32.mrb[0].mxu0
      %v6602 = vadd.f32 %v3241, %v6601
      %v6603 = vpop.f32.mrb[0].mxu0
      %6604 = vdwg.mxu0
      %6605 = vmatprep.subr.bf16.mxu0 0
      %6606 = vmatpush1.bf16.msra.mxu0 %v3403
      %6607 = vmatprep.subr.bf16.mxu0 0
      %6608 = vmatpush1.bf16.msra.mxu0 %v3404
      %6609 = vmatprep.subr.bf16.mxu0 0
      %6610 = vmatpush1.bf16.msra.mxu0 %v3405
      %6611 = vmatprep.subr.bf16.mxu0 0
      %6612 = vmatpush1.bf16.msra.mxu0 %v3406
      %6613 = vmatprep.subr.bf16.mxu0 0
      %6614 = vmatpush1.bf16.msra.mxu0 %v3407
      %6615 = vmatprep.subr.bf16.mxu0 0
      %6616 = vmatpush1.bf16.msra.mxu0 %v3408
      %6617 = vmatprep.subr.bf16.mxu0 0
      %6618 = vmatpush1.bf16.msra.mxu0 %v3409
      %6619 = vmatprep.subr.bf16.mxu0 0
      %6620 = vmatpush1.bf16.msra.mxu0 %v3410
      %6621 = vmatprep.subr.bf16.mxu0 0
      %6622 = vmatpush1.bf16.msra.mxu0 %v3411
      %6623 = vmatprep.subr.bf16.mxu0 0
      %6624 = vmatpush1.bf16.msra.mxu0 %v3412
      %6625 = vmatprep.subr.bf16.mxu0 0
      %6626 = vmatpush1.bf16.msra.mxu0 %v3413
      %6627 = vmatprep.subr.bf16.mxu0 0
      %6628 = vmatpush1.bf16.msra.mxu0 %v3414
      %6629 = vmatprep.subr.bf16.mxu0 0
      %6630 = vmatpush1.bf16.msra.mxu0 %v3415
      %6631 = vmatprep.subr.bf16.mxu0 0
      %6632 = vmatpush1.bf16.msra.mxu0 %v3416
      %6633 = vmatprep.subr.bf16.mxu0 0
      %6634 = vmatpush1.bf16.msra.mxu0 %v3417
      %6635 = vmatprep.subr.bf16.mxu0 0
      %6636 = vmatpush1.bf16.msra.mxu0 %v3418
      %6637 = vmatprep.mubr.bf16.mxu0 %v6447
      %6638 = vmatmul.mubr.bf16.gmra.mrb[0].mxu0 %v6446
      %v6639 = vpop.f32.mrb[0].mxu0
      %v6640 = vadd.f32 %v6543, %v6639
      %v6641 = vpop.f32.mrb[0].mxu0
      %v6642 = vpop.f32.mrb[0].mxu0
      %v6643 = vadd.f32 %v6546, %v6642
      %v6644 = vpop.f32.mrb[0].mxu0
      %6645 = vmatprep.mubr.bf16.mxu0 %v6452
      %6646 = vmatmul.mubr.bf16.gmra.mrb[0].mxu0 %v6451
      %v6647 = vpop.f32.mrb[0].mxu0
      %v6648 = vadd.f32 %v6551, %v6647
      %v6649 = vpop.f32.mrb[0].mxu0
      %v6650 = vpop.f32.mrb[0].mxu0
      %v6651 = vadd.f32 %v6554, %v6650
      %v6652 = vpop.f32.mrb[0].mxu0
      %6653 = vmatprep.mubr.bf16.mxu0 %v6457
      %6654 = vmatmul.mubr.bf16.gmra.mrb[0].mxu0 %v6456
      %v6655 = vpop.f32.mrb[0].mxu0
      %v6656 = vadd.f32 %v6559, %v6655
      %v6657 = vpop.f32.mrb[0].mxu0
      %v6658 = vpop.f32.mrb[0].mxu0
      %v6659 = vadd.f32 %v6562, %v6658
      %v6660 = vpop.f32.mrb[0].mxu0
      %6661 = vmatprep.mubr.bf16.mxu0 %v6462
      %6662 = vmatmul.mubr.bf16.gmra.mrb[0].mxu0 %v6461
      %v6663 = vpop.f32.mrb[0].mxu0
      %v6664 = vadd.f32 %v6567, %v6663
      %v6665 = vpop.f32.mrb[0].mxu0
      %v6666 = vpop.f32.mrb[0].mxu0
      %v6667 = vadd.f32 %v6570, %v6666
      %v6668 = vpop.f32.mrb[0].mxu0
      %6669 = vmatprep.mubr.bf16.mxu0 %v6467
      %6670 = vmatmul.mubr.bf16.gmra.mrb[0].mxu0 %v6466
      %v6671 = vpop.f32.mrb[0].mxu0
      %v6672 = vadd.f32 %v6575, %v6671
      %v6673 = vpop.f32.mrb[0].mxu0
      %v6674 = vpop.f32.mrb[0].mxu0
      %v6675 = vadd.f32 %v6578, %v6674
      %v6676 = vpop.f32.mrb[0].mxu0
      %6677 = vmatprep.mubr.bf16.mxu0 %v6472
      %6678 = vmatmul.mubr.bf16.gmra.mrb[0].mxu0 %v6471
      %v6679 = vpop.f32.mrb[0].mxu0
      %v6680 = vadd.f32 %v6583, %v6679
      %v6681 = vpop.f32.mrb[0].mxu0
      %v6682 = vpop.f32.mrb[0].mxu0
      %v6683 = vadd.f32 %v6586, %v6682
      %v6684 = vpop.f32.mrb[0].mxu0
      %6685 = vmatprep.mubr.bf16.mxu0 %v6477
      %6686 = vmatmul.mubr.bf16.gmra.mrb[0].mxu0 %v6476
      %v6687 = vpop.f32.mrb[0].mxu0
      %v6688 = vadd.f32 %v6591, %v6687
      %v6689 = vpop.f32.mrb[0].mxu0
      %v6690 = vpop.f32.mrb[0].mxu0
      %v6691 = vadd.f32 %v6594, %v6690
      %v6692 = vpop.f32.mrb[0].mxu0
      %6693 = vmatprep.mubr.bf16.mxu0 %v6482
      %6694 = vmatmul.mubr.bf16.gmra.mrb[0].mxu0 %v6481
      %v6695 = vpop.f32.mrb[0].mxu0
      %v6696 = vadd.f32 %v6599, %v6695
      %v6697 = vpop.f32.mrb[0].mxu0
      %v6698 = vpop.f32.mrb[0].mxu0
      %v6699 = vadd.f32 %v6602, %v6698
      %v6700 = vpop.f32.mrb[0].mxu0
      %6701 = vdwg.mxu0
      %6702 = vmatprep.subr.bf16.mxu0 0
      %6703 = vmatpush1.bf16.msra.mxu0 %v3419
      %6704 = vmatprep.subr.bf16.mxu0 0
      %6705 = vmatpush1.bf16.msra.mxu0 %v3420
      %6706 = vmatprep.subr.bf16.mxu0 0
      %6707 = vmatpush1.bf16.msra.mxu0 %v3421
      %6708 = vmatprep.subr.bf16.mxu0 0
      %6709 = vmatpush1.bf16.msra.mxu0 %v3422
      %6710 = vmatprep.subr.bf16.mxu0 0
      %6711 = vmatpush1.bf16.msra.mxu0 0
      %6712 = vmatprep.subr.bf16.mxu0 0
      %6713 = vmatpush1.bf16.msra.mxu0 0
      %6714 = vmatprep.subr.bf16.mxu0 0
      %6715 = vmatpush1.bf16.msra.mxu0 0
      %6716 = vmatprep.subr.bf16.mxu0 0
      %6717 = vmatpush1.bf16.msra.mxu0 0
      %6718 = vmatprep.subr.bf16.mxu0 0
      %6719 = vmatpush1.bf16.msra.mxu0 0
      %6720 = vmatprep.subr.bf16.mxu0 0
      %6721 = vmatpush1.bf16.msra.mxu0 0
      %6722 = vmatprep.subr.bf16.mxu0 0
      %6723 = vmatpush1.bf16.msra.mxu0 0
      %6724 = vmatprep.subr.bf16.mxu0 0
      %6725 = vmatpush1.bf16.msra.mxu0 0
      %6726 = vmatprep.subr.bf16.mxu0 0
      %6727 = vmatpush1.bf16.msra.mxu0 0
      %6728 = vmatprep.subr.bf16.mxu0 0
      %6729 = vmatpush1.bf16.msra.mxu0 0
      %6730 = vmatprep.subr.bf16.mxu0 0
      %6731 = vmatpush1.bf16.msra.mxu0 0
      %6732 = vmatprep.subr.bf16.mxu0 0
      %6733 = vmatpush1.bf16.msra.mxu0 0
      %6734 = vmatprep.mubr.bf16.mxu0 0
      %6735 = vmatmul.mubr.bf16.gmra.mrb[0].mxu0 %v6485
      %v6736 = vpop.f32.mrb[0].mxu0
      %v6737 = vadd.f32 %v6640, %v6736
      %v6738 = vpop.f32.mrb[0].mxu0
      %v6739 = vpop.f32.mrb[0].mxu0
      %v6740 = vadd.f32 %v6643, %v6739
      %v6741 = vpop.f32.mrb[0].mxu0
      %6742 = vmatprep.mubr.bf16.mxu0 0
      %6743 = vmatmul.mubr.bf16.gmra.mrb[0].mxu0 %v6488
      %v6744 = vpop.f32.mrb[0].mxu0
      %v6745 = vadd.f32 %v6648, %v6744
      %v6746 = vpop.f32.mrb[0].mxu0
      %v6747 = vpop.f32.mrb[0].mxu0
      %v6748 = vadd.f32 %v6651, %v6747
      %v6749 = vpop.f32.mrb[0].mxu0
      %6750 = vmatprep.mubr.bf16.mxu0 0
      %6751 = vmatmul.mubr.bf16.gmra.mrb[0].mxu0 %v6491
      %v6752 = vpop.f32.mrb[0].mxu0
      %v6753 = vadd.f32 %v6656, %v6752
      %v6754 = vpop.f32.mrb[0].mxu0
      %v6755 = vpop.f32.mrb[0].mxu0
      %v6756 = vadd.f32 %v6659, %v6755
      %v6757 = vpop.f32.mrb[0].mxu0
      %6758 = vmatprep.mubr.bf16.mxu0 0
      %6759 = vmatmul.mubr.bf16.gmra.mrb[0].mxu0 %v6494
      %v6760 = vpop.f32.mrb[0].mxu0
      %v6761 = vadd.f32 %v6664, %v6760
      %v6762 = vpop.f32.mrb[0].mxu0
      %v6763 = vpop.f32.mrb[0].mxu0
      %v6764 = vadd.f32 %v6667, %v6763
      %v6765 = vpop.f32.mrb[0].mxu0
      %6766 = vmatprep.mubr.bf16.mxu0 0
      %6767 = vmatmul.mubr.bf16.gmra.mrb[0].mxu0 %v6497
      %v6768 = vpop.f32.mrb[0].mxu0
      %v6769 = vadd.f32 %v6672, %v6768
      %v6770 = vpop.f32.mrb[0].mxu0
      %v6771 = vpop.f32.mrb[0].mxu0
      %v6772 = vadd.f32 %v6675, %v6771
      %v6773 = vpop.f32.mrb[0].mxu0
      %6774 = vmatprep.mubr.bf16.mxu0 0
      %6775 = vmatmul.mubr.bf16.gmra.mrb[0].mxu0 %v6500
      %v6776 = vpop.f32.mrb[0].mxu0
      %v6777 = vadd.f32 %v6680, %v6776
      %v6778 = vpop.f32.mrb[0].mxu0
      %v6779 = vpop.f32.mrb[0].mxu0
      %v6780 = vadd.f32 %v6683, %v6779
      %v6781 = vpop.f32.mrb[0].mxu0
      %6782 = vmatprep.mubr.bf16.mxu0 0
      %6783 = vmatmul.mubr.bf16.gmra.mrb[0].mxu0 %v6503
      %v6784 = vpop.f32.mrb[0].mxu0
      %v6785 = vadd.f32 %v6688, %v6784
      %v6786 = vpop.f32.mrb[0].mxu0
      %v6787 = vpop.f32.mrb[0].mxu0
      %v6788 = vadd.f32 %v6691, %v6787
      %v6789 = vpop.f32.mrb[0].mxu0
      %6790 = vmatprep.mubr.bf16.mxu0 0
      %6791 = vmatmul.mubr.bf16.gmra.mrb[0].mxu0 %v6506
      %v6792 = vpop.f32.mrb[0].mxu0
      %v6793 = vadd.f32 %v6696, %v6792
      %v6794 = vpop.f32.mrb[0].mxu0
      %v6795 = vpop.f32.mrb[0].mxu0
      %v6796 = vadd.f32 %v6699, %v6795
      %v6797 = vpop.f32.mrb[0].mxu0
      %6798 = vdwg.mxu0
      %v6799 = vmax.f32 %v6737, 0.0
      %v6800 = vmax.f32 %v6740, 0.0
      %v6801 = vmax.f32 %v6745, 0.0
      %v6802 = vmax.f32 %v6748, 0.0
      %v6803 = vmax.f32 %v6753, 0.0
      %v6804 = vmax.f32 %v6756, 0.0
      %v6805 = vmax.f32 %v6761, 0.0
      %v6806 = vmax.f32 %v6764, 0.0
      %v6807 = vmax.f32 %v6769, 0.0
      %v6808 = vmax.f32 %v6772, 0.0
      %v6809 = vmax.f32 %v6777, 0.0
      %v6810 = vmax.f32 %v6780, 0.0
      %v6811 = vmax.f32 %v6785, 0.0
      %v6812 = vmax.f32 %v6788, 0.0
      %v6813 = vmax.f32 %v6793, 0.0
      %v6814 = vmax.f32 %v6796, 0.0
      %v6815 = vsub.f32 %v3774, %v6799
      %v6816 = vsub.f32 %v3775, %v6800
      %v6817 = vsub.f32 %v3776, %v6801
      %v6818 = vsub.f32 %v3777, %v6802
      %v6819 = vsub.f32 %v3778, %v6803
      %v6820 = vsub.f32 %v3779, %v6804
      %v6821 = vsub.f32 %v3780, %v6805
      %v6822 = vsub.f32 %v3781, %v6806
      %v6823 = vsub.f32 %v3782, %v6807
      %v6824 = vsub.f32 %v3783, %v6808
      %v6825 = vsub.f32 %v3784, %v6809
      %v6826 = vsub.f32 %v3785, %v6810
      %v6827 = vsub.f32 %v3786, %v6811
      %v6828 = vsub.f32 %v3787, %v6812
      %v6829 = vsub.f32 %v3788, %v6813
      %v6830 = vsub.f32 %v3789, %v6814
      %v6831 = vand.u32 2147483647, %v6815
      %v6832 = vand.u32 2147483647, %v6816
      %v6833 = vand.u32 2147483647, %v6817
      %v6834 = vand.u32 2147483647, %v6818
      %v6835 = vand.u32 2147483647, %v6819
      %v6836 = vand.u32 2147483647, %v6820
      %v6837 = vand.u32 2147483647, %v6821
      %v6838 = vand.u32 2147483647, %v6822
      %v6839 = vand.u32 2147483647, %v6823
      %v6840 = vand.u32 2147483647, %v6824
      %v6841 = vand.u32 2147483647, %v6825
      %v6842 = vand.u32 2147483647, %v6826
      %v6843 = vand.u32 2147483647, %v6827
      %v6844 = vand.u32 2147483647, %v6828
      %v6845 = vand.u32 2147483647, %v6829
      %v6846 = vand.u32 2147483647, %v6830
      %v6847 = vsel %vm2855, %v6831, 0.0
      %v6848 = vsel %vm2855, %v6832, 0.0
      %v6849 = vadd.f32 %v6847, %v6848
      %v6850 = vsel %vm2855, %v6833, 0.0
      %v6851 = vadd.f32 %v6849, %v6850
      %v6852 = vsel %vm2855, %v6834, 0.0
      %v6853 = vadd.f32 %v6851, %v6852
      %v6854 = vsel %vm2855, %v6835, 0.0
      %v6855 = vadd.f32 %v6853, %v6854
      %v6856 = vsel %vm2855, %v6836, 0.0
      %v6857 = vadd.f32 %v6855, %v6856
      %v6858 = vsel %vm2855, %v6837, 0.0
      %v6859 = vadd.f32 %v6857, %v6858
      %v6860 = vsel %vm2855, %v6838, 0.0
      %v6861 = vadd.f32 %v6859, %v6860
      %v6862 = vsel %vm2855, %v6839, 0.0
      %v6863 = vadd.f32 %v6861, %v6862
      %v6864 = vsel %vm2855, %v6840, 0.0
      %v6865 = vadd.f32 %v6863, %v6864
      %v6866 = vsel %vm2855, %v6841, 0.0
      %v6867 = vadd.f32 %v6865, %v6866
      %v6868 = vsel %vm2855, %v6842, 0.0
      %v6869 = vadd.f32 %v6867, %v6868
      %v6870 = vsel %vm2855, %v6843, 0.0
      %v6871 = vadd.f32 %v6869, %v6870
      %v6872 = vsel %vm2855, %v6844, 0.0
      %v6873 = vadd.f32 %v6871, %v6872
      %v6874 = vsel %vm2855, %v6845, 0.0
      %v6875 = vadd.f32 %v6873, %v6874
      %v6876 = vsel %vm2855, %v6846, 0.0
      %v6877 = vadd.f32 %v6875, %v6876
      %6878 = vadd.xlane.f32.xlu0 %v6877
      %v6879 = vpop.xlane.xlu0 %6878
      %v6880 = vrot.slane %v6879, 4
      %v6881 = vadd.f32 %v6879, %v6880
      %v6882 = vrot.slane %v6881, 2
      %v6883 = vadd.f32 %v6881, %v6882
      %v6884 = vrot.slane %v6883, 1
      %v6885 = vadd.f32 %v6883, %v6884
      %s6886 = vtos %v6885
      %s6887 = scalar_lea.vmem %s294, 12
      %v6888 = vld [vmem:[%s6887] sm:$0xf]
      %v6889 = vld [vmem:[%s6887 + $0x4] sm:$0xf]
      %v6890 = vld [vmem:[%s6887 + $0x8] sm:$0x1]
      %v6891 = vld [vmem:[%s6887 + $0xc] sm:$0xf]
      %v6892 = vld [vmem:[%s6887 + $0x10] sm:$0xf]
      %v6893 = vld [vmem:[%s6887 + $0x14] sm:$0x1]
      %v6894 = vld [vmem:[%s6887 + $0x18] sm:$0xf]
      %v6895 = vld [vmem:[%s6887 + $0x1c] sm:$0xf]
      %v6896 = vld [vmem:[%s6887 + $0x20] sm:$0x1]
      %v6897 = vld [vmem:[%s6887 + $0x24] sm:$0xf]
      %v6898 = vld [vmem:[%s6887 + $0x28] sm:$0xf]
      %v6899 = vld [vmem:[%s6887 + $0x2c] sm:$0x1]
      %v6900 = vld [vmem:[%s6887 + $0x30] sm:$0xf]
      %v6901 = vld [vmem:[%s6887 + $0x34] sm:$0xf]
      %v6902 = vld [vmem:[%s6887 + $0x38] sm:$0x1]
      %v6903 = vld [vmem:[%s6887 + $0x3c] sm:$0xf]
      %v6904 = vld [vmem:[%s6887 + $0x40] sm:$0xf]
      %v6905 = vld [vmem:[%s6887 + $0x44] sm:$0x1]
      %v6906 = vld [vmem:[%s6887 + $0x48] sm:$0xf]
      %v6907 = vld [vmem:[%s6887 + $0x4c] sm:$0xf]
      %v6908 = vld [vmem:[%s6887 + $0x50] sm:$0x1]
      %v6909 = vld [vmem:[%s6887 + $0x54] sm:$0xf]
      %v6910 = vld [vmem:[%s6887 + $0x58] sm:$0xf]
      %v6911 = vld [vmem:[%s6887 + $0x5c] sm:$0x1]
      %v6912 = vunpack.c.l.bf16 %v6888
      %v6913 = vunpack.c.l.bf16 %v6889
      %v6914 = vunpack.c.l.bf16 %v6890
      %v6915 = vunpack.c.l.bf16 %v6891
      %v6916 = vunpack.c.l.bf16 %v6892
      %v6917 = vunpack.c.l.bf16 %v6893
      %v6918 = vunpack.c.l.bf16 %v6894
      %v6919 = vunpack.c.l.bf16 %v6895
      %v6920 = vunpack.c.l.bf16 %v6896
      %v6921 = vunpack.c.l.bf16 %v6897
      %v6922 = vunpack.c.l.bf16 %v6898
      %v6923 = vunpack.c.l.bf16 %v6899
      %v6924 = vunpack.c.l.bf16 %v6900
      %v6925 = vunpack.c.l.bf16 %v6901
      %v6926 = vunpack.c.l.bf16 %v6902
      %v6927 = vunpack.c.l.bf16 %v6903
      %v6928 = vunpack.c.l.bf16 %v6904
      %v6929 = vunpack.c.l.bf16 %v6905
      %v6930 = vunpack.c.l.bf16 %v6906
      %v6931 = vunpack.c.l.bf16 %v6907
      %v6932 = vunpack.c.l.bf16 %v6908
      %v6933 = vunpack.c.l.bf16 %v6909
      %v6934 = vunpack.c.l.bf16 %v6910
      %v6935 = vunpack.c.l.bf16 %v6911
      %s6936 = scalar_lea.vmem %s299, 12
      %v6937 = vld [vmem:[%s6936] sm:$0xf]
      %v6938 = vld [vmem:[%s6936 + $0x4] sm:$0xf]
      %v6939 = vld [vmem:[%s6936 + $0x8] sm:$0x1]
      %v6940 = vld [vmem:[%s6936 + $0xc] sm:$0xf]
      %v6941 = vld [vmem:[%s6936 + $0x10] sm:$0xf]
      %v6942 = vld [vmem:[%s6936 + $0x14] sm:$0x1]
      %v6943 = vld [vmem:[%s6936 + $0x18] sm:$0xf]
      %v6944 = vld [vmem:[%s6936 + $0x1c] sm:$0xf]
      %v6945 = vld [vmem:[%s6936 + $0x20] sm:$0x1]
      %v6946 = vld [vmem:[%s6936 + $0x24] sm:$0xf]
      %v6947 = vld [vmem:[%s6936 + $0x28] sm:$0xf]
      %v6948 = vld [vmem:[%s6936 + $0x2c] sm:$0x1]
      %v6949 = vld [vmem:[%s6936 + $0x30] sm:$0xf]
      %v6950 = vld [vmem:[%s6936 + $0x34] sm:$0xf]
      %v6951 = vld [vmem:[%s6936 + $0x38] sm:$0x1]
      %v6952 = vld [vmem:[%s6936 + $0x3c] sm:$0xf]
      %v6953 = vld [vmem:[%s6936 + $0x40] sm:$0xf]
      %v6954 = vld [vmem:[%s6936 + $0x44] sm:$0x1]
      %v6955 = vld [vmem:[%s6936 + $0x48] sm:$0xf]
      %v6956 = vld [vmem:[%s6936 + $0x4c] sm:$0xf]
      %v6957 = vld [vmem:[%s6936 + $0x50] sm:$0x1]
      %v6958 = vld [vmem:[%s6936 + $0x54] sm:$0xf]
      %v6959 = vld [vmem:[%s6936 + $0x58] sm:$0xf]
      %v6960 = vld [vmem:[%s6936 + $0x5c] sm:$0x1]
      %v6961 = vunpack.c.l.bf16 %v6937
      %v6962 = vunpack.c.l.bf16 %v6938
      %v6963 = vunpack.c.l.bf16 %v6939
      %v6964 = vunpack.c.l.bf16 %v6940
      %v6965 = vunpack.c.l.bf16 %v6941
      %v6966 = vunpack.c.l.bf16 %v6942
      %v6967 = vunpack.c.l.bf16 %v6943
      %v6968 = vunpack.c.l.bf16 %v6944
      %v6969 = vunpack.c.l.bf16 %v6945
      %v6970 = vunpack.c.l.bf16 %v6946
      %v6971 = vunpack.c.l.bf16 %v6947
      %v6972 = vunpack.c.l.bf16 %v6948
      %v6973 = vunpack.c.l.bf16 %v6949
      %v6974 = vunpack.c.l.bf16 %v6950
      %v6975 = vunpack.c.l.bf16 %v6951
      %v6976 = vunpack.c.l.bf16 %v6952
      %v6977 = vunpack.c.l.bf16 %v6953
      %v6978 = vunpack.c.l.bf16 %v6954
      %v6979 = vunpack.c.l.bf16 %v6955
      %v6980 = vunpack.c.l.bf16 %v6956
      %v6981 = vunpack.c.l.bf16 %v6957
      %v6982 = vunpack.c.l.bf16 %v6958
      %v6983 = vunpack.c.l.bf16 %v6959
      %v6984 = vunpack.c.l.bf16 %v6960
      %v6985 = vsub.f32 %v6912, %v6961
      %v6986 = vsub.f32 %v6913, %v6962
      %v6987 = vsub.f32 %v6914, %v6963
      %v6988 = vsub.f32 %v6915, %v6964
      %v6989 = vsub.f32 %v6916, %v6965
      %v6990 = vsub.f32 %v6917, %v6966
      %v6991 = vsub.f32 %v6918, %v6967
      %v6992 = vsub.f32 %v6919, %v6968
      %v6993 = vsub.f32 %v6920, %v6969
      %v6994 = vsub.f32 %v6921, %v6970
      %v6995 = vsub.f32 %v6922, %v6971
      %v6996 = vsub.f32 %v6923, %v6972
      %v6997 = vsub.f32 %v6924, %v6973
      %v6998 = vsub.f32 %v6925, %v6974
      %v6999 = vsub.f32 %v6926, %v6975
      %v7000 = vsub.f32 %v6927, %v6976
      %v7001 = vsub.f32 %v6928, %v6977
      %v7002 = vsub.f32 %v6929, %v6978
      %v7003 = vsub.f32 %v6930, %v6979
      %v7004 = vsub.f32 %v6931, %v6980
      %v7005 = vsub.f32 %v6932, %v6981
      %v7006 = vsub.f32 %v6933, %v6982
      %v7007 = vsub.f32 %v6934, %v6983
      %v7008 = vsub.f32 %v6935, %v6984
      %v7009 = vand.u32 2147483647, %v6985
      %v7010 = vand.u32 2147483647, %v6986
      %v7011 = vand.u32 2147483647, %v6987
      %v7012 = vand.u32 2147483647, %v6988
      %v7013 = vand.u32 2147483647, %v6989
      %v7014 = vand.u32 2147483647, %v6990
      %v7015 = vand.u32 2147483647, %v6991
      %v7016 = vand.u32 2147483647, %v6992
      %v7017 = vand.u32 2147483647, %v6993
      %v7018 = vand.u32 2147483647, %v6994
      %v7019 = vand.u32 2147483647, %v6995
      %v7020 = vand.u32 2147483647, %v6996
      %v7021 = vand.u32 2147483647, %v6997
      %v7022 = vand.u32 2147483647, %v6998
      %v7023 = vand.u32 2147483647, %v6999
      %v7024 = vand.u32 2147483647, %v7000
      %v7025 = vand.u32 2147483647, %v7001
      %v7026 = vand.u32 2147483647, %v7002
      %v7027 = vand.u32 2147483647, %v7003
      %v7028 = vand.u32 2147483647, %v7004
      %v7029 = vand.u32 2147483647, %v7005
      %v7030 = vand.u32 2147483647, %v7006
      %v7031 = vand.u32 2147483647, %v7007
      %v7032 = vand.u32 2147483647, %v7008
      %vm7057 = vcmask 1046528
      %v7058 = vrot.slane %v7009, 1
      %v7059 = vrot.slane %v7010, 1
      %v7060 = vsel %vm7057, %v7058, %v7059
      %v7061 = vrot.slane %v7011, 1
      %v7062 = vsel %vm7057, %v7059, %v7061
      %v7063 = vrot.slane %v7012, 1
      %v7064 = vrot.slane %v7013, 1
      %v7065 = vsel %vm7057, %v7063, %v7064
      %v7066 = vrot.slane %v7014, 1
      %v7067 = vsel %vm7057, %v7064, %v7066
      %v7068 = vrot.slane %v7015, 1
      %v7069 = vrot.slane %v7016, 1
      %v7070 = vsel %vm7057, %v7068, %v7069
      %v7071 = vrot.slane %v7017, 1
      %v7072 = vsel %vm7057, %v7069, %v7071
      %v7073 = vrot.slane %v7018, 1
      %v7074 = vrot.slane %v7019, 1
      %v7075 = vsel %vm7057, %v7073, %v7074
      %v7076 = vrot.slane %v7020, 1
      %v7077 = vsel %vm7057, %v7074, %v7076
      %v7078 = vrot.slane %v7021, 1
      %v7079 = vrot.slane %v7022, 1
      %v7080 = vsel %vm7057, %v7078, %v7079
      %v7081 = vrot.slane %v7023, 1
      %v7082 = vsel %vm7057, %v7079, %v7081
      %v7083 = vrot.slane %v7024, 1
      %v7084 = vrot.slane %v7025, 1
      %v7085 = vsel %vm7057, %v7083, %v7084
      %v7086 = vrot.slane %v7026, 1
      %v7087 = vsel %vm7057, %v7084, %v7086
      %v7088 = vrot.slane %v7027, 1
      %v7089 = vrot.slane %v7028, 1
      %v7090 = vsel %vm7057, %v7088, %v7089
      %v7091 = vrot.slane %v7029, 1
      %v7092 = vsel %vm7057, %v7089, %v7091
      %v7093 = vrot.slane %v7030, 1
      %v7094 = vrot.slane %v7031, 1
      %v7095 = vsel %vm7057, %v7093, %v7094
      %v7096 = vrot.slane %v7032, 1
      %v7097 = vsel %vm7057, %v7094, %v7096
      %7098 = vrot.lane.b32.xlu0 %v7060, 116
      %v7099 = vpop.permute.xlu0 %7098
      %7100 = vrot.lane.b32.xlu0 %v7062, 116
      %v7101 = vpop.permute.xlu0 %7100
      %7102 = vrot.lane.b32.xlu0 %v7065, 116
      %v7103 = vpop.permute.xlu0 %7102
      %7104 = vrot.lane.b32.xlu0 %v7067, 116
      %v7105 = vpop.permute.xlu0 %7104
      %7106 = vrot.lane.b32.xlu0 %v7070, 116
      %v7107 = vpop.permute.xlu0 %7106
      %7108 = vrot.lane.b32.xlu0 %v7072, 116
      %v7109 = vpop.permute.xlu0 %7108
      %7110 = vrot.lane.b32.xlu0 %v7075, 116
      %v7111 = vpop.permute.xlu0 %7110
      %7112 = vrot.lane.b32.xlu0 %v7077, 116
      %v7113 = vpop.permute.xlu0 %7112
      %7114 = vrot.lane.b32.xlu0 %v7080, 116
      %v7115 = vpop.permute.xlu0 %7114
      %7116 = vrot.lane.b32.xlu0 %v7082, 116
      %v7117 = vpop.permute.xlu0 %7116
      %7118 = vrot.lane.b32.xlu0 %v7085, 116
      %v7119 = vpop.permute.xlu0 %7118
      %7120 = vrot.lane.b32.xlu0 %v7087, 116
      %v7121 = vpop.permute.xlu0 %7120
      %7122 = vrot.lane.b32.xlu0 %v7090, 116
      %v7123 = vpop.permute.xlu0 %7122
      %7124 = vrot.lane.b32.xlu0 %v7092, 116
      %v7125 = vpop.permute.xlu0 %7124
      %7126 = vrot.lane.b32.xlu0 %v7095, 116
      %v7127 = vpop.permute.xlu0 %7126
      %7128 = vrot.lane.b32.xlu0 %v7097, 116
      %v7129 = vpop.permute.xlu0 %7128
      %vm7146 = vcmask 23552
      %v7147 = vsel %vm7146, %v7099, 0.0
      %v7148 = vsel %vm7146, %v7101, 0.0
      %v7149 = vadd.f32 %v7147, %v7148
      %v7150 = vsel %vm7146, %v7103, 0.0
      %v7151 = vadd.f32 %v7149, %v7150
      %v7152 = vsel %vm7146, %v7105, 0.0
      %v7153 = vadd.f32 %v7151, %v7152
      %v7154 = vsel %vm7146, %v7107, 0.0
      %v7155 = vadd.f32 %v7153, %v7154
      %v7156 = vsel %vm7146, %v7109, 0.0
      %v7157 = vadd.f32 %v7155, %v7156
      %v7158 = vsel %vm7146, %v7111, 0.0
      %v7159 = vadd.f32 %v7157, %v7158
      %v7160 = vsel %vm7146, %v7113, 0.0
      %v7161 = vadd.f32 %v7159, %v7160
      %v7162 = vsel %vm7146, %v7115, 0.0
      %v7163 = vadd.f32 %v7161, %v7162
      %v7164 = vsel %vm7146, %v7117, 0.0
      %v7165 = vadd.f32 %v7163, %v7164
      %v7166 = vsel %vm7146, %v7119, 0.0
      %v7167 = vadd.f32 %v7165, %v7166
      %v7168 = vsel %vm7146, %v7121, 0.0
      %v7169 = vadd.f32 %v7167, %v7168
      %v7170 = vsel %vm7146, %v7123, 0.0
      %v7171 = vadd.f32 %v7169, %v7170
      %v7172 = vsel %vm7146, %v7125, 0.0
      %v7173 = vadd.f32 %v7171, %v7172
      %v7174 = vsel %vm7146, %v7127, 0.0
      %v7175 = vadd.f32 %v7173, %v7174
      %v7176 = vsel %vm7146, %v7129, 0.0
      %v7177 = vadd.f32 %v7175, %v7176
      %7178 = vadd.xlane.f32.xlu0 %v7177
      %v7179 = vpop.xlane.xlu0 %7178
      %v7180 = vrot.slane %v7179, 4
      %v7181 = vadd.f32 %v7179, %v7180
      %v7182 = vrot.slane %v7181, 2
      %v7183 = vadd.f32 %v7181, %v7182
      %v7184 = vrot.slane %v7183, 1
      %v7185 = vadd.f32 %v7183, %v7184
      %s7186 = vtos %v7185
      %v7187 = vstv %s7186
      %7188 = vst [vmem:[%s303] sm:$0xff] %v7187
      %v7189 = vstv %s6886
      %7190 = vst [vmem:[%s307] sm:$0xff] %v7189
      %p7191 = scmp.lt.s32.totalorder %s19, 3
      %s7192 = scalar_select %p7191, %s19, 3
      %s7193 = smul.addr %s7192, 8
      %s7194 = scalar_lea.vmem %s6, %s7193
      %p7195 = scmp.lt.s32.totalorder %s19, 3
      %s7196 = scalar_select %p7195, %s19, 3
      %s7197 = smul.addr %s7196, 8
      %s7198 = scalar_lea.vmem %s7, %s7197
      // Predicated region
      $region45: #{a_call__.1} parent=43 // pred_check
        %p7199 = pneg %p173
      $region46: #{a_call__.1} parent=43 // pred_check_branch
        %7201 = sbr.rel (%p7199) target = $region48
      $region47: #{a_call__.1} parent=43 // pred_region
        _
      $region48: #{a_call__.1} parent=43 // pred_fallthru
        _
      // Predicated region
      $region49: #{a_call__.1} parent=43 // pred_check
        %p7202 = pneg %p199
      $region50: #{a_call__.1} parent=43 // pred_check_branch
        %7204 = sbr.rel (%p7202) target = $region52
      $region51: #{a_call__.1} parent=43 // pred_region
        _
      $region52: #{a_call__.1} parent=43 // pred_fallthru
        _
    $region44: #{a_call__.1} parent=5 // pred_fallthru
      _
    %p7205 = scmp.le.s32.totalorder 2, %s14
    // Predicated region
    $region53: #{a_call__.1} parent=5 // pred_check
      %p7206 = pneg %p7205
    $region54: #{a_call__.1} parent=5 // pred_check_branch
      %7208 = sbr.rel (%p7206) target = $region56
    $region55: #{a_call__.1} parent=5 // pred_region
      %s7209 = ssub.s32 %s14, 2
      // Predicated region
      $region57: #{a_call__.1} parent=55 // pred_check
        %p7210 = pneg %p179
      $region58: #{a_call__.1} parent=55 // pred_check_branch
        %7212 = sbr.rel (%p7210) target = $region60
      $region59: #{a_call__.1} parent=55 // pred_region
        %p7213 = scmp.lt.s32.totalorder %s20, 3
        %s7214 = scalar_select %p7213, %s20, 3
        %s7215 = smul.addr %s7214, 8
        %s7216 = scalar_lea.vmem %s6, %s7215
      $region60: #{a_call__.1} parent=55 // pred_fallthru
        _
      // Predicated region
      $region61: #{a_call__.1} parent=55 // pred_check
        %p7217 = pneg %p205
      $region62: #{a_call__.1} parent=55 // pred_check_branch
        %7219 = sbr.rel (%p7217) target = $region64
      $region63: #{a_call__.1} parent=55 // pred_region
        %p7220 = scmp.lt.s32.totalorder %s20, 3
        %s7221 = scalar_select %p7220, %s20, 3
        %s7222 = smul.addr %s7221, 8
        %s7223 = scalar_lea.vmem %s7, %s7222
      $region64: #{a_call__.1} parent=55 // pred_fallthru
        _
    $region56: #{a_call__.1} parent=5 // pred_fallthru
      _
  $region6: #{a_call__.1} parent=0 // loop_footer
    %s18 = sadd.s32 1, %s14
  $region7: #{a_call__.1} parent=0 // loop_footer_branch
    %13 = sbr.rel target = $region3
  $region8: #{a_call__.1} parent=0 // loop_exit
    _

</llo_original>
